<compile_context>
chip_gen: v6e
topology: v6e:2x2x1
jax: 0.10.0
libtpu: 0.0.40
codegen_flags: <defaults>
</compile_context>

<pallas_src>
import functools

import jax
import jax.numpy as jnp
from jax.experimental import pallas as pl
from jax.experimental.pallas import tpu as pltpu

LANE = 128            # TPU lane width; all feature dims padded to multiples.
_MIB = 1024 * 1024


def _round_up(n, m):
    return ((n + m - 1) // m) * m


def _pad2(a, shape, dtype):
    out = jnp.zeros(shape, dtype)
    return out.at[: a.shape[0], : a.shape[1]].set(a.astype(dtype))


def _row_tile(npad):
    """Largest row tile in {512, 256, 128} that divides npad (npad % 128 == 0)."""
    for tn in (512, 256, 128):
        if npad % tn == 0:
            return tn
    return LANE


def _plan_rows(n):
    npad = _round_up(max(n, 1), LANE)
    return npad, _row_tile(npad)


def _maybe_single_buffered(block_shape, index_map):
    """Single-buffer a constant-index block when the API supports it."""
    if hasattr(pl, "Buffered"):
        try:
            return pl.BlockSpec(block_shape, index_map,
                                pipeline_mode=pl.Buffered(1))
        except TypeError:
            pass
    return pl.BlockSpec(block_shape, index_map)


def _vmem_limit_bytes(required):
    """Per-generation VMEM budget: physical capacity minus headroom, but no
    larger than what this launch actually needs (plus margin)."""
    cap = 64 * _MIB                       # conservative default (v7x physical)
    try:
        info = pltpu.get_tpu_info()
        cap = int(getattr(info, "vmem_capacity_bytes", cap) or cap)
    except Exception:
        pass
    limit = min(cap - 8 * _MIB, required + 8 * _MIB)
    return int(max(limit, 16 * _MIB))


# ---------------------------------------------------------------------------
# Fused forward kernel.
#   grid = (n_layers + 1, n_row_blocks); layer axis outer (sequential
#   recurrence), node-row axis inner.  h^(l) lives in slot l % 2 of h2_ref.
# ---------------------------------------------------------------------------
def _mpnn_kernel(x_ref, w1_ref, b1_ref, a_ref, wab_ref, wb_ref, wl_ref, bl_ref,
                 o_ref, h2_ref, hc_ref):
    l = pl.program_id(0)                 # 0 = linear1 init, 1..L = conv layers
    r = pl.program_id(1)                 # node-row block
    last = pl.num_programs(0) - 1
    tn = o_ref.shape[0]                  # row tile (static)
    hpad = w1_ref.shape[1]               # padded hidden dim (static)
    row0 = pl.multiple_of(r * tn, tn)

    # ---- step 0: h^(0) = relu(x @ W1^T + b1) for this row block -> slot 0 ----
    @pl.when(l == 0)
    def _():
        z = jnp.dot(x_ref[...], w1_ref[...],
                    preferred_element_type=jnp.float32) + b1_ref[...]
        h2_ref[0, pl.ds(row0, tn), :] = jnp.maximum(z, 0.0).astype(h2_ref.dtype)

    # ---- steps 1..L: h^(l) = relu(cat([h, A@h], 1) @ W_l^T + b_l) ----
    def conv_layer(src, dst):
        h_full = h2_ref[src]                            # (npad, H)  bf16
        h_rows = h2_ref[src, pl.ds(row0, tn), :]        # (TN,   H)  bf16
        # conv(h) rows for this block: A[rows] @ h_full (f32 accumulate on MXU)
        ah = jnp.dot(a_ref[...], h_full, preferred_element_type=jnp.float32)
        # Fused K = 2*H contraction: materialise cat([h, conv(h)], 1) once.
        hc_ref[:, :hpad] = h_rows
        hc_ref[:, hpad:] = ah.astype(hc_ref.dtype)
        hc = hc_ref[...]

        @pl.when(l < last)               # hidden layers: write h^(l) scratch
        def _():
            z = jnp.dot(hc, wab_ref[0],
                        preferred_element_type=jnp.float32) + wb_ref[0]
            h2_ref[dst, pl.ds(row0, tn), :] = (
                jnp.maximum(z, 0.0).astype(h2_ref.dtype))

        @pl.when(l == last)              # last layer: only write the output
        def _():
            z = jnp.dot(hc, wl_ref[...],
                        preferred_element_type=jnp.float32) + bl_ref[...]
            o_ref[...] = jnp.maximum(z, 0.0).astype(o_ref.dtype)

    @pl.when(jnp.logical_and(l > 0, l % 2 == 1))
    def _():
        conv_layer(0, 1)                 # odd layers: read slot 0, write slot 1

    @pl.when(jnp.logical_and(l > 0, l % 2 == 0))
    def _():
        conv_layer(1, 0)                 # even layers: read slot 1, write slot 0


def _fused_mpnn(x_p, w1t, b1, a_p, wab, wbias, wl, bl):
    npad, fpad = x_p.shape
    hpad = w1t.shape[1]
    cpad = wl.shape[1]
    n_hidden = wab.shape[0]              # hidden conv layers (linear2, linear3)
    n_layers = n_hidden + 1              # + classification conv layer (linear4)
    n_steps = n_layers + 1               # + linear1 init pass
    last = n_steps - 1
    tn = _row_tile(npad)
    n_row_blocks = npad // tn

    # Conditional index maps: park unused streams on block 0 so they are not
    # re-DMA'd during passes that never touch them.
    def x_map(l, r):
        return (jnp.where(l == 0, r, 0), 0)            # only needed at l == 0

    def a_map(l, r):
        return (jnp.where(l == 0, 0, r), 0)            # unused at l == 0

    def wab_map(l, r):
        return (jnp.clip(l - 1, 0, n_hidden - 1), 0, 0)

    def out_map(l, r):
        return (jnp.where(l == last, r, 0), 0)         # only written at l == last

    const2 = lambda l, r: (0, 0)

    grid_spec = pltpu.PrefetchScalarGridSpec(
        num_scalar_prefetch=0,
        grid=(n_steps, n_row_blocks),
        in_specs=[
            pl.BlockSpec((tn, fpad), x_map),                    # x row block
            _maybe_single_buffered((fpad, hpad), const2),       # W1^T
            _maybe_single_buffered((1, hpad), const2),          # b1
            pl.BlockSpec((tn, npad), a_map),                    # A_norm row block
            pl.BlockSpec((1, 2 * hpad, hpad), wab_map),         # fused Wab stack
            pl.BlockSpec((1, 1, hpad), wab_map),                # hidden bias stack
            _maybe_single_buffered((2 * hpad, cpad), const2),   # last-layer W
            _maybe_single_buffered((1, cpad), const2),          # last-layer b
        ],
        out_specs=pl.BlockSpec((tn, cpad), out_map),
        scratch_shapes=[
            pltpu.VMEM((2, npad, hpad), jnp.bfloat16),   # ping-pong h carry
            pltpu.VMEM((tn, 2 * hpad), jnp.bfloat16),    # cat([h, conv(h)], 1)
        ],
    )

    flops = (2 * npad * fpad * hpad
             + n_layers * 2 * npad * npad * hpad
             + n_hidden * 2 * npad * (2 * hpad) * hpad
             + 2 * npad * (2 * hpad) * cpad)
    bytes_accessed = (x_p.size * 2 + w1t.size * 2 + b1.size * 4
                      + n_layers * a_p.size * 2
                      + wab.size * 2 + wbias.size * 4
                      + wl.size * 2 + bl.size * 4 + npad * cpad * 2)

    vmem_needed = (2 * tn * fpad * 2           # x blocks (double buffered, bf16)
                   + fpad * hpad * 2 + hpad * 4
                   + 2 * tn * npad * 2         # A blocks (double buffered)
                   + 2 * 2 * hpad * hpad * 2 + 2 * hpad * 4
                   + 2 * hpad * cpad * 2 + cpad * 4
                   + 2 * tn * cpad * 2         # output blocks (bf16)
                   + 2 * npad * hpad * 2       # ping-pong h scratch
                   + tn * 2 * hpad * 2)        # concat scratch

    return pl.pallas_call(
        _mpnn_kernel,
        out_shape=jax.ShapeDtypeStruct((npad, cpad), jnp.bfloat16),
        grid_spec=grid_spec,
        compiler_params=pltpu.CompilerParams(
            # Layer axis is a sequential recurrence; the row axis must also be
            # sequential because every layer's A@h reads ALL rows of h^(l-1).
            # TODO(synk): v7x dual-TC split of the row axis (VMEM_SHARED h +
            # core_barrier per layer).
            dimension_semantics=("arbitrary", "arbitrary"),
            vmem_limit_bytes=_vmem_limit_bytes(vmem_needed),
        ),
        cost_estimate=pl.CostEstimate(flops=int(flops), transcendentals=0,
                                      bytes_accessed=int(bytes_accessed)),
    )(x_p, w1t, b1, a_p, wab, wbias, wl, bl)


# ---------------------------------------------------------------------------
# One-time parameter / adjacency preparation (transpose + split + pad + cast).
# ---------------------------------------------------------------------------
def prepare_mpnn_params(params, feats, hidden, classes):
    fpad = _round_up(feats, LANE)
    hpad = _round_up(hidden, LANE)
    cpad = _round_up(classes, LANE)

    w1t = _pad2(params["w1"].T, (fpad, hpad), jnp.bfloat16)
    b1 = jnp.zeros((1, hpad), jnp.float32).at[0, :hidden].set(params["b1"])

    def fuse(w, out_dim, out_pad):
        # torch Linear weight [out, 2*hidden] -> fused [2*H_pad, out_pad]:
        # rows [:hidden] act on h, rows [hpad:hpad+hidden] act on conv(h),
        # matching the cat([h, conv(h)], 1) layout built inside the kernel.
        wf = jnp.zeros((2 * hpad, out_pad), jnp.bfloat16)
        wf = wf.at[:hidden, :out_dim].set(w[:, :hidden].T.astype(jnp.bfloat16))
        wf = wf.at[hpad:hpad + hidden, :out_dim].set(
            w[:, hidden:].T.astype(jnp.bfloat16))
        return wf

    wabs, biases = [], []
    for k in ("2", "3"):
        wabs.append(fuse(params["w" + k], hidden, hpad))
        biases.append(jnp.zeros((1, hpad), jnp.float32)
                      .at[0, :hidden].set(params["b" + k]))
    wl = fuse(params["w4"], classes, cpad)
    bl = jnp.zeros((1, cpad), jnp.float32).at[0, :classes].set(params["b4"])

    return dict(w1t=w1t, b1=b1, wab=jnp.stack(wabs), wbias=jnp.stack(biases),
                wl=wl, bl=bl)


def prepare_adjacency(a_norm):
    n = a_norm.shape[0]
    npad, _ = _plan_rows(n)
    # Padded rows/columns MUST stay exactly zero (see correctness note on top).
    return _pad2(a_norm, (npad, npad), jnp.bfloat16)


def init_linear(key, in_dim, out_dim):
    kw, kb = jax.random.split(key)
    bound = 1.0 / (in_dim ** 0.5)
    w = jax.random.uniform(kw, (out_dim, in_dim), jnp.float32, -bound, bound)
    b = jax.random.uniform(kb, (out_dim,), jnp.float32, -bound, bound)
    return w, b


def build_normalized_adjacency(edges, n):
    src, dst = edges[0], edges[1]
    a = jnp.zeros((n, n), jnp.float32)
    a = a.at[dst, src].set(1.0)
    a = jnp.maximum(a, a.T)                      # undirected
    a = a + jnp.eye(n, dtype=jnp.float32)        # self-loops
    deg = jnp.sum(a, axis=1)
    d_inv_sqrt = 1.0 / jnp.sqrt(jnp.maximum(deg, 1e-12))
    return a * d_inv_sqrt[:, None] * d_inv_sqrt[None, :]


# ---------------------------------------------------------------------------
# Forward (inference: dropout is identity at eval time).
# ---------------------------------------------------------------------------
@functools.partial(jax.jit, static_argnames=("n_classes",))
def mpnn_forward(x, a_pad, prep, *, n_classes):
    npad = a_pad.shape[0]
    fpad = prep["w1t"].shape[0]
    n, f = x.shape
    x_p = jnp.zeros((npad, fpad), jnp.bfloat16).at[:n, :f].set(
        x.astype(jnp.bfloat16))
    out = _fused_mpnn(x_p, prep["w1t"], prep["b1"], a_pad,
                      prep["wab"], prep["wbias"], prep["wl"], prep["bl"])
    return out[:n, :n_classes].astype(jnp.float32)


if __name__ == "__main__":
    FEATS, HIDDEN, CLASSES = 8, 32, 4

    key = jax.random.PRNGKey(0)
    k1, k2, k3, k4, kg = jax.random.split(key, 5)

    w1, b1 = init_linear(k1, FEATS, HIDDEN)
    w2, b2 = init_linear(k2, HIDDEN * 2, HIDDEN)
    w3, b3 = init_linear(k3, HIDDEN * 2, HIDDEN)
    w4, b4 = init_linear(k4, HIDDEN * 2, CLASSES)
    params = dict(w1=w1, b1=b1, w2=w2, b2=b2, w3=w3, b3=b3, w4=w4, b4=b4)
    prep = prepare_mpnn_params(params, FEATS, HIDDEN, CLASSES)

    # Pure-JAX reference with the same bf16-input / f32-accumulate math.
    def ref_forward(xv, a_norm):
        bf = lambda t: t.astype(jnp.bfloat16)
        h = jnp.maximum(
            jnp.dot(bf(xv), bf(w1.T), preferred_element_type=jnp.float32) + b1,
            0.0)
        for (w, b) in ((w2, b2), (w3, b3), (w4, b4)):
            hb = bf(h)
            ah = jnp.dot(bf(a_norm), hb, preferred_element_type=jnp.float32)
            z = jnp.dot(hb, bf(w[:, :HIDDEN].T),
                        preferred_element_type=jnp.float32)
            z = z + jnp.dot(bf(ah), bf(w[:, HIDDEN:].T),
                            preferred_element_type=jnp.float32)
            h = jnp.maximum(z + b, 0.0)
        return h

    # Case 0: tiny graph (single row block).
    # Case 1: larger graph exercising the row-tiled A path (npad=640 -> 5 blocks).
    for case, (n_nodes, n_edges) in enumerate(((16, 40), (600, 2400))):
        kx, ke = jax.random.split(jax.random.fold_in(kg, case))
        x = jax.random.normal(kx, (n_nodes, FEATS), jnp.float32)
        edges = jax.random.randint(ke, (2, n_edges), 0, n_nodes, jnp.int32)
        a_norm = build_normalized_adjacency(edges, n_nodes)
        a_pad = prepare_adjacency(a_norm)

        out = mpnn_forward(x, a_pad, prep, n_classes=CLASSES)
        jax.block_until_ready(out)
        assert out.shape == (n_nodes, CLASSES), out.shape

        ref = ref_forward(x, a_norm)
        max_err = float(jnp.max(jnp.abs(out - ref)))
        assert jnp.allclose(out, ref, atol=2e-2, rtol=2e-2), (case, max_err)

    print("KERNEL_OK")
</pallas_src>

<mosaic_0001>
module attributes {stable_mosaic.version = 11 : i64} {
  func.func @_mpnn_kernel(%arg0: i32, %arg1: i32, %arg2: memref<128x128xbf16, #tpu.memory_space<vmem>>, %arg3: memref<128x128xbf16, #tpu.memory_space<vmem>>, %arg4: memref<1x128xf32, #tpu.memory_space<vmem>>, %arg5: memref<128x128xbf16, #tpu.memory_space<vmem>>, %arg6: memref<1x256x128xbf16, #tpu.memory_space<vmem>>, %arg7: memref<1x1x128xf32, #tpu.memory_space<vmem>>, %arg8: memref<256x128xbf16, #tpu.memory_space<vmem>>, %arg9: memref<1x128xf32, #tpu.memory_space<vmem>>, %arg10: memref<128x128xbf16, #tpu.memory_space<vmem>>, %arg11: memref<2x128x128xbf16, #tpu.memory_space<vmem>>, %arg12: memref<128x256xbf16, #tpu.memory_space<vmem>>) attributes {dimension_semantics = [#tpu.dimension_semantics<arbitrary>, #tpu.dimension_semantics<arbitrary>], iteration_bounds = array<i64: 4, 1>, scalar_prefetch = 0 : i64, scratch_operands = 2 : i64, tpu.core_type = #tpu.core_type<tc>, window_params = [{transform_indices = @transform_0, window_bounds = array<i64: 128, 128>}, {pipeline_mode = #tpu.pipeline_mode<synchronous>, transform_indices = @transform_1, window_bounds = array<i64: 128, 128>}, {pipeline_mode = #tpu.pipeline_mode<synchronous>, transform_indices = @transform_2, window_bounds = array<i64: 1, 128>}, {transform_indices = @transform_3, window_bounds = array<i64: 128, 128>}, {transform_indices = @transform_4, window_bounds = array<i64: 1, 256, 128>}, {transform_indices = @transform_5, window_bounds = array<i64: 1, 1, 128>}, {pipeline_mode = #tpu.pipeline_mode<synchronous>, transform_indices = @transform_6, window_bounds = array<i64: 256, 128>}, {pipeline_mode = #tpu.pipeline_mode<synchronous>, transform_indices = @transform_7, window_bounds = array<i64: 1, 128>}, {transform_indices = @transform_8, window_bounds = array<i64: 128, 128>}]} {
    %c128_i32 = arith.constant 128 : i32
    %0 = arith.muli %arg1, %c128_i32 : i32
    %1 = tpu.assume_multiple %0, 128 : i32
    %c0_i32 = arith.constant 0 : i32
    %2 = arith.cmpi eq, %arg0, %c0_i32 : i32
    %3 = arith.extui %2 : i1 to i32
    %c0_i32_0 = arith.constant 0 : i32
    %4 = arith.cmpi ne, %3, %c0_i32_0 : i32
    scf.if %4 {
      %c0 = arith.constant 0 : index
      %c0_17 = arith.constant 0 : index
      %35 = vector.load %arg2[%c0, %c0_17] : memref<128x128xbf16, #tpu.memory_space<vmem>>, vector<128x128xbf16>
      %c0_18 = arith.constant 0 : index
      %c0_19 = arith.constant 0 : index
      %36 = vector.load %arg3[%c0_18, %c0_19] : memref<128x128xbf16, #tpu.memory_space<vmem>>, vector<128x128xbf16>
      %cst = arith.constant dense<0.000000e+00> : vector<128x128xf32>
      %37 = tpu.matmul %35, %36, %cst {dimension_numbers = #tpu.dot_dimension_numbers<[1], [0], [0], [1], [0, 0, 1, 1], [], []>} : vector<128x128xbf16>, vector<128x128xbf16>, vector<128x128xf32> -> vector<128x128xf32>
      %c0_20 = arith.constant 0 : index
      %c0_21 = arith.constant 0 : index
      %38 = vector.load %arg4[%c0_20, %c0_21] : memref<1x128xf32, #tpu.memory_space<vmem>>, vector<1x128xf32>
      %39 = vector.broadcast %38 : vector<1x128xf32> to vector<128x128xf32>
      %40 = arith.addf %37, %39 : vector<128x128xf32>
      %cst_22 = arith.constant 0.000000e+00 : f32
      %41 = vector.broadcast %cst_22 : f32 to vector<128x128xf32>
      %42 = arith.maximumf %40, %41 : vector<128x128xf32>
      %43 = arith.truncf %42 : vector<128x128xf32> to vector<128x128xbf16>
      %c0_23 = arith.constant 0 : index
      %44 = arith.index_cast %1 : i32 to index
      %c0_24 = arith.constant 0 : index
      %45 = vector.load %arg11[%c0_23, %44, %c0_24] : memref<2x128x128xbf16, #tpu.memory_space<vmem>>, vector<1x128x128xbf16>
      %46 = vector.shape_cast %45 : vector<1x128x128xbf16> to vector<128x128xbf16>
      %47 = vector.shape_cast %43 : vector<128x128xbf16> to vector<1x128x128xbf16>
      tpu.vector_store %arg11[%c0_23, %44, %c0_24], %47 {strides = array<i32>} : memref<2x128x128xbf16, #tpu.memory_space<vmem>>, vector<1x128x128xbf16>,
    } else {
    }
    %c0_i32_1 = arith.constant 0 : i32
    %5 = arith.cmpi sgt, %arg0, %c0_i32_1 : i32
    %c2_i32 = arith.constant 2 : i32
    %c0_i32_2 = arith.constant 0 : i32
    %6 = arith.cmpi eq, %c2_i32, %c0_i32_2 : i32
    %c1_i32 = arith.constant 1 : i32
    %7 = arith.select %6, %c1_i32, %c2_i32 : i32
    %8 = arith.remsi %arg0, %7 : i32
    %c0_i32_3 = arith.constant 0 : i32
    %9 = arith.cmpi ne, %8, %c0_i32_3 : i32
    %c0_i32_4 = arith.constant 0 : i32
    %10 = arith.cmpi slt, %8, %c0_i32_4 : i32
    %c0_i32_5 = arith.constant 0 : i32
    %11 = arith.cmpi slt, %7, %c0_i32_5 : i32
    %12 = arith.xori %10, %11 : i1
    %13 = arith.andi %12, %9 : i1
    %14 = arith.addi %8, %7 : i32
    %15 = arith.select %13, %14, %8 : i32
    %c1_i32_6 = arith.constant 1 : i32
    %16 = arith.cmpi eq, %15, %c1_i32_6 : i32
    %17 = arith.andi %5, %16 : i1
    %18 = arith.extui %17 : i1 to i32
    %c0_i32_7 = arith.constant 0 : i32
    %19 = arith.cmpi ne, %18, %c0_i32_7 : i32
    scf.if %19 {
      %c0 = arith.constant 0 : index
      %c0_17 = arith.constant 0 : index
      %c0_18 = arith.constant 0 : index
      %35 = vector.load %arg11[%c0, %c0_17, %c0_18] : memref<2x128x128xbf16, #tpu.memory_space<vmem>>, vector<1x128x128xbf16>
      %36 = vector.shape_cast %35 : vector<1x128x128xbf16> to vector<128x128xbf16>
      %c0_19 = arith.constant 0 : index
      %37 = arith.index_cast %1 : i32 to index
      %c0_20 = arith.constant 0 : index
      %38 = vector.load %arg11[%c0_19, %37, %c0_20] : memref<2x128x128xbf16, #tpu.memory_space<vmem>>, vector<1x128x128xbf16>
      %39 = vector.shape_cast %38 : vector<1x128x128xbf16> to vector<128x128xbf16>
      %c0_21 = arith.constant 0 : index
      %c0_22 = arith.constant 0 : index
      %40 = vector.load %arg5[%c0_21, %c0_22] : memref<128x128xbf16, #tpu.memory_space<vmem>>, vector<128x128xbf16>
      %cst = arith.constant dense<0.000000e+00> : vector<128x128xf32>
      %41 = tpu.matmul %40, %36, %cst {dimension_numbers = #tpu.dot_dimension_numbers<[1], [0], [0], [1], [0, 0, 1, 1], [], []>} : vector<128x128xbf16>, vector<128x128xbf16>, vector<128x128xf32> -> vector<128x128xf32>
      %c0_23 = arith.constant 0 : index
      %c0_24 = arith.constant 0 : index
      %42 = vector.load %arg12[%c0_23, %c0_24] : memref<128x256xbf16, #tpu.memory_space<vmem>>, vector<128x128xbf16>
      tpu.vector_store %arg12[%c0_23, %c0_24], %39 {strides = array<i32>} : memref<128x256xbf16, #tpu.memory_space<vmem>>, vector<128x128xbf16>,
      %43 = arith.truncf %41 : vector<128x128xf32> to vector<128x128xbf16>
      %c0_25 = arith.constant 0 : index
      %c128 = arith.constant 128 : index
      %44 = vector.load %arg12[%c0_25, %c128] : memref<128x256xbf16, #tpu.memory_space<vmem>>, vector<128x128xbf16>
      tpu.vector_store %arg12[%c0_25, %c128], %43 {strides = array<i32>} : memref<128x256xbf16, #tpu.memory_space<vmem>>, vector<128x128xbf16>,
      %c0_26 = arith.constant 0 : index
      %c0_27 = arith.constant 0 : index
      %45 = vector.load %arg12[%c0_26, %c0_27] : memref<128x256xbf16, #tpu.memory_space<vmem>>, vector<128x256xbf16>
      %c3_i32 = arith.constant 3 : i32
      %46 = arith.cmpi slt, %arg0, %c3_i32 : i32
      %47 = arith.extui %46 : i1 to i32
      %c0_i32_28 = arith.constant 0 : i32
      %48 = arith.cmpi ne, %47, %c0_i32_28 : i32
      scf.if %48 {
        %c0_31 = arith.constant 0 : index
        %c0_32 = arith.constant 0 : index
        %c0_33 = arith.constant 0 : index
        %52 = vector.load %arg6[%c0_31, %c0_32, %c0_33] : memref<1x256x128xbf16, #tpu.memory_space<vmem>>, vector<1x256x128xbf16>
        %53 = vector.shape_cast %52 : vector<1x256x128xbf16> to vector<256x128xbf16>
        %cst_34 = arith.constant dense<0.000000e+00> : vector<128x128xf32>
        %54 = tpu.matmul %45, %53, %cst_34 {dimension_numbers = #tpu.dot_dimension_numbers<[1], [0], [0], [1], [0, 0, 1, 1], [], []>} : vector<128x256xbf16>, vector<256x128xbf16>, vector<128x128xf32> -> vector<128x128xf32>
        %c0_35 = arith.constant 0 : index
        %c0_36 = arith.constant 0 : index
        %c0_37 = arith.constant 0 : index
        %55 = vector.load %arg7[%c0_35, %c0_36, %c0_37] : memref<1x1x128xf32, #tpu.memory_space<vmem>>, vector<1x1x128xf32>
        %56 = vector.shape_cast %55 : vector<1x1x128xf32> to vector<1x128xf32>
        %57 = vector.broadcast %56 : vector<1x128xf32> to vector<128x128xf32>
        %58 = arith.addf %54, %57 : vector<128x128xf32>
        %cst_38 = arith.constant 0.000000e+00 : f32
        %59 = vector.broadcast %cst_38 : f32 to vector<128x128xf32>
        %60 = arith.maximumf %58, %59 : vector<128x128xf32>
        %61 = arith.truncf %60 : vector<128x128xf32> to vector<128x128xbf16>
        %c1 = arith.constant 1 : index
        %62 = arith.index_cast %1 : i32 to index
        %c0_39 = arith.constant 0 : index
        %63 = vector.load %arg11[%c1, %62, %c0_39] : memref<2x128x128xbf16, #tpu.memory_space<vmem>>, vector<1x128x128xbf16>
        %64 = vector.shape_cast %63 : vector<1x128x128xbf16> to vector<128x128xbf16>
        %65 = vector.shape_cast %61 : vector<128x128xbf16> to vector<1x128x128xbf16>
        tpu.vector_store %arg11[%c1, %62, %c0_39], %65 {strides = array<i32>} : memref<2x128x128xbf16, #tpu.memory_space<vmem>>, vector<1x128x128xbf16>,
      } else {
      }
      %c3_i32_29 = arith.constant 3 : i32
      %49 = arith.cmpi eq, %arg0, %c3_i32_29 : i32
      %50 = arith.extui %49 : i1 to i32
      %c0_i32_30 = arith.constant 0 : i32
      %51 = arith.cmpi ne, %50, %c0_i32_30 : i32
      scf.if %51 {
        %c0_31 = arith.constant 0 : index
        %c0_32 = arith.constant 0 : index
        %52 = vector.load %arg8[%c0_31, %c0_32] : memref<256x128xbf16, #tpu.memory_space<vmem>>, vector<256x128xbf16>
        %cst_33 = arith.constant dense<0.000000e+00> : vector<128x128xf32>
        %53 = tpu.matmul %45, %52, %cst_33 {dimension_numbers = #tpu.dot_dimension_numbers<[1], [0], [0], [1], [0, 0, 1, 1], [], []>} : vector<128x256xbf16>, vector<256x128xbf16>, vector<128x128xf32> -> vector<128x128xf32>
        %c0_34 = arith.constant 0 : index
        %c0_35 = arith.constant 0 : index
        %54 = vector.load %arg9[%c0_34, %c0_35] : memref<1x128xf32, #tpu.memory_space<vmem>>, vector<1x128xf32>
        %55 = vector.broadcast %54 : vector<1x128xf32> to vector<128x128xf32>
        %56 = arith.addf %53, %55 : vector<128x128xf32>
        %cst_36 = arith.constant 0.000000e+00 : f32
        %57 = vector.broadcast %cst_36 : f32 to vector<128x128xf32>
        %58 = arith.maximumf %56, %57 : vector<128x128xf32>
        %59 = arith.truncf %58 : vector<128x128xf32> to vector<128x128xbf16>
        %c0_37 = arith.constant 0 : index
        %c0_38 = arith.constant 0 : index
        %60 = vector.load %arg10[%c0_37, %c0_38] : memref<128x128xbf16, #tpu.memory_space<vmem>>, vector<128x128xbf16>
        tpu.vector_store %arg10[%c0_37, %c0_38], %59 {strides = array<i32>} : memref<128x128xbf16, #tpu.memory_space<vmem>>, vector<128x128xbf16>,
      } else {
      }
    } else {
    }
    %c0_i32_8 = arith.constant 0 : i32
    %20 = arith.cmpi sgt, %arg0, %c0_i32_8 : i32
    %c2_i32_9 = arith.constant 2 : i32
    %c0_i32_10 = arith.constant 0 : i32
    %21 = arith.cmpi eq, %c2_i32_9, %c0_i32_10 : i32
    %c1_i32_11 = arith.constant 1 : i32
    %22 = arith.select %21, %c1_i32_11, %c2_i32_9 : i32
    %23 = arith.remsi %arg0, %22 : i32
    %c0_i32_12 = arith.constant 0 : i32
    %24 = arith.cmpi ne, %23, %c0_i32_12 : i32
    %c0_i32_13 = arith.constant 0 : i32
    %25 = arith.cmpi slt, %23, %c0_i32_13 : i32
    %c0_i32_14 = arith.constant 0 : i32
    %26 = arith.cmpi slt, %22, %c0_i32_14 : i32
    %27 = arith.xori %25, %26 : i1
    %28 = arith.andi %27, %24 : i1
    %29 = arith.addi %23, %22 : i32
    %30 = arith.select %28, %29, %23 : i32
    %c0_i32_15 = arith.constant 0 : i32
    %31 = arith.cmpi eq, %30, %c0_i32_15 : i32
    %32 = arith.andi %20, %31 : i1
    %33 = arith.extui %32 : i1 to i32
    %c0_i32_16 = arith.constant 0 : i32
    %34 = arith.cmpi ne, %33, %c0_i32_16 : i32
    scf.if %34 {
      %c1 = arith.constant 1 : index
      %c0 = arith.constant 0 : index
      %c0_17 = arith.constant 0 : index
      %35 = vector.load %arg11[%c1, %c0, %c0_17] : memref<2x128x128xbf16, #tpu.memory_space<vmem>>, vector<1x128x128xbf16>
      %36 = vector.shape_cast %35 : vector<1x128x128xbf16> to vector<128x128xbf16>
      %c1_18 = arith.constant 1 : index
      %37 = arith.index_cast %1 : i32 to index
      %c0_19 = arith.constant 0 : index
      %38 = vector.load %arg11[%c1_18, %37, %c0_19] : memref<2x128x128xbf16, #tpu.memory_space<vmem>>, vector<1x128x128xbf16>
      %39 = vector.shape_cast %38 : vector<1x128x128xbf16> to vector<128x128xbf16>
      %c0_20 = arith.constant 0 : index
      %c0_21 = arith.constant 0 : index
      %40 = vector.load %arg5[%c0_20, %c0_21] : memref<128x128xbf16, #tpu.memory_space<vmem>>, vector<128x128xbf16>
      %cst = arith.constant dense<0.000000e+00> : vector<128x128xf32>
      %41 = tpu.matmul %40, %36, %cst {dimension_numbers = #tpu.dot_dimension_numbers<[1], [0], [0], [1], [0, 0, 1, 1], [], []>} : vector<128x128xbf16>, vector<128x128xbf16>, vector<128x128xf32> -> vector<128x128xf32>
      %c0_22 = arith.constant 0 : index
      %c0_23 = arith.constant 0 : index
      %42 = vector.load %arg12[%c0_22, %c0_23] : memref<128x256xbf16, #tpu.memory_space<vmem>>, vector<128x128xbf16>
      tpu.vector_store %arg12[%c0_22, %c0_23], %39 {strides = array<i32>} : memref<128x256xbf16, #tpu.memory_space<vmem>>, vector<128x128xbf16>,
      %43 = arith.truncf %41 : vector<128x128xf32> to vector<128x128xbf16>
      %c0_24 = arith.constant 0 : index
      %c128 = arith.constant 128 : index
      %44 = vector.load %arg12[%c0_24, %c128] : memref<128x256xbf16, #tpu.memory_space<vmem>>, vector<128x128xbf16>
      tpu.vector_store %arg12[%c0_24, %c128], %43 {strides = array<i32>} : memref<128x256xbf16, #tpu.memory_space<vmem>>, vector<128x128xbf16>,
      %c0_25 = arith.constant 0 : index
      %c0_26 = arith.constant 0 : index
      %45 = vector.load %arg12[%c0_25, %c0_26] : memref<128x256xbf16, #tpu.memory_space<vmem>>, vector<128x256xbf16>
      %c3_i32 = arith.constant 3 : i32
      %46 = arith.cmpi slt, %arg0, %c3_i32 : i32
      %47 = arith.extui %46 : i1 to i32
      %c0_i32_27 = arith.constant 0 : i32
      %48 = arith.cmpi ne, %47, %c0_i32_27 : i32
      scf.if %48 {
        %c0_30 = arith.constant 0 : index
        %c0_31 = arith.constant 0 : index
        %c0_32 = arith.constant 0 : index
        %52 = vector.load %arg6[%c0_30, %c0_31, %c0_32] : memref<1x256x128xbf16, #tpu.memory_space<vmem>>, vector<1x256x128xbf16>
        %53 = vector.shape_cast %52 : vector<1x256x128xbf16> to vector<256x128xbf16>
        %cst_33 = arith.constant dense<0.000000e+00> : vector<128x128xf32>
        %54 = tpu.matmul %45, %53, %cst_33 {dimension_numbers = #tpu.dot_dimension_numbers<[1], [0], [0], [1], [0, 0, 1, 1], [], []>} : vector<128x256xbf16>, vector<256x128xbf16>, vector<128x128xf32> -> vector<128x128xf32>
        %c0_34 = arith.constant 0 : index
        %c0_35 = arith.constant 0 : index
        %c0_36 = arith.constant 0 : index
        %55 = vector.load %arg7[%c0_34, %c0_35, %c0_36] : memref<1x1x128xf32, #tpu.memory_space<vmem>>, vector<1x1x128xf32>
        %56 = vector.shape_cast %55 : vector<1x1x128xf32> to vector<1x128xf32>
        %57 = vector.broadcast %56 : vector<1x128xf32> to vector<128x128xf32>
        %58 = arith.addf %54, %57 : vector<128x128xf32>
        %cst_37 = arith.constant 0.000000e+00 : f32
        %59 = vector.broadcast %cst_37 : f32 to vector<128x128xf32>
        %60 = arith.maximumf %58, %59 : vector<128x128xf32>
        %61 = arith.truncf %60 : vector<128x128xf32> to vector<128x128xbf16>
        %c0_38 = arith.constant 0 : index
        %62 = arith.index_cast %1 : i32 to index
        %c0_39 = arith.constant 0 : index
        %63 = vector.load %arg11[%c0_38, %62, %c0_39] : memref<2x128x128xbf16, #tpu.memory_space<vmem>>, vector<1x128x128xbf16>
        %64 = vector.shape_cast %63 : vector<1x128x128xbf16> to vector<128x128xbf16>
        %65 = vector.shape_cast %61 : vector<128x128xbf16> to vector<1x128x128xbf16>
        tpu.vector_store %arg11[%c0_38, %62, %c0_39], %65 {strides = array<i32>} : memref<2x128x128xbf16, #tpu.memory_space<vmem>>, vector<1x128x128xbf16>,
      } else {
      }
      %c3_i32_28 = arith.constant 3 : i32
      %49 = arith.cmpi eq, %arg0, %c3_i32_28 : i32
      %50 = arith.extui %49 : i1 to i32
      %c0_i32_29 = arith.constant 0 : i32
      %51 = arith.cmpi ne, %50, %c0_i32_29 : i32
      scf.if %51 {
        %c0_30 = arith.constant 0 : index
        %c0_31 = arith.constant 0 : index
        %52 = vector.load %arg8[%c0_30, %c0_31] : memref<256x128xbf16, #tpu.memory_space<vmem>>, vector<256x128xbf16>
        %cst_32 = arith.constant dense<0.000000e+00> : vector<128x128xf32>
        %53 = tpu.matmul %45, %52, %cst_32 {dimension_numbers = #tpu.dot_dimension_numbers<[1], [0], [0], [1], [0, 0, 1, 1], [], []>} : vector<128x256xbf16>, vector<256x128xbf16>, vector<128x128xf32> -> vector<128x128xf32>
        %c0_33 = arith.constant 0 : index
        %c0_34 = arith.constant 0 : index
        %54 = vector.load %arg9[%c0_33, %c0_34] : memref<1x128xf32, #tpu.memory_space<vmem>>, vector<1x128xf32>
        %55 = vector.broadcast %54 : vector<1x128xf32> to vector<128x128xf32>
        %56 = arith.addf %53, %55 : vector<128x128xf32>
        %cst_35 = arith.constant 0.000000e+00 : f32
        %57 = vector.broadcast %cst_35 : f32 to vector<128x128xf32>
        %58 = arith.maximumf %56, %57 : vector<128x128xf32>
        %59 = arith.truncf %58 : vector<128x128xf32> to vector<128x128xbf16>
        %c0_36 = arith.constant 0 : index
        %c0_37 = arith.constant 0 : index
        %60 = vector.load %arg10[%c0_36, %c0_37] : memref<128x128xbf16, #tpu.memory_space<vmem>>, vector<128x128xbf16>
        tpu.vector_store %arg10[%c0_36, %c0_37], %59 {strides = array<i32>} : memref<128x128xbf16, #tpu.memory_space<vmem>>, vector<128x128xbf16>,
      } else {
      }
    } else {
    }
    return
  }
  func.func @transform_0(%arg0: i32, %arg1: i32) -> (i32, i32) {
    %c0_i32 = arith.constant 0 : i32
    %0 = arith.cmpi eq, %arg0, %c0_i32 : i32
    %c0_i32_0 = arith.constant 0 : i32
    %1 = arith.select %0, %arg1, %c0_i32_0 : i32
    %c0_i32_1 = arith.constant 0 : i32
    %c0_i32_2 = arith.constant 0 : i32
    return %1, %c0_i32_1 : i32, i32
  }
  func.func @transform_1(%arg0: i32, %arg1: i32) -> (i32, i32) {
    %c0_i32 = arith.constant 0 : i32
    %c0_i32_0 = arith.constant 0 : i32
    %c0_i32_1 = arith.constant 0 : i32
    return %c0_i32, %c0_i32_0 : i32, i32
  }
  func.func @transform_2(%arg0: i32, %arg1: i32) -> (i32, i32) {
    %c0_i32 = arith.constant 0 : i32
    %c0_i32_0 = arith.constant 0 : i32
    %c0_i32_1 = arith.constant 0 : i32
    return %c0_i32, %c0_i32_0 : i32, i32
  }
  func.func @transform_3(%arg0: i32, %arg1: i32) -> (i32, i32) {
    %c0_i32 = arith.constant 0 : i32
    %0 = arith.cmpi eq, %arg0, %c0_i32 : i32
    %c0_i32_0 = arith.constant 0 : i32
    %1 = arith.select %0, %c0_i32_0, %arg1 : i32
    %c0_i32_1 = arith.constant 0 : i32
    %c0_i32_2 = arith.constant 0 : i32
    return %1, %c0_i32_1 : i32, i32
  }
  func.func @transform_4(%arg0: i32, %arg1: i32) -> (i32, i32, i32) {
    %c1_i32 = arith.constant 1 : i32
    %0 = arith.subi %arg0, %c1_i32 : i32
    %c0_i32 = arith.constant 0 : i32
    %c1_i32_0 = arith.constant 1 : i32
    %1 = arith.maxsi %c0_i32, %0 : i32
    %2 = arith.minsi %c1_i32_0, %1 : i32
    %c0_i32_1 = arith.constant 0 : i32
    %c0_i32_2 = arith.constant 0 : i32
    %c0_i32_3 = arith.constant 0 : i32
    return %2, %c0_i32_1, %c0_i32_2 : i32, i32, i32
  }
  func.func @transform_5(%arg0: i32, %arg1: i32) -> (i32, i32, i32) {
    %c1_i32 = arith.constant 1 : i32
    %0 = arith.subi %arg0, %c1_i32 : i32
    %c0_i32 = arith.constant 0 : i32
    %c1_i32_0 = arith.constant 1 : i32
    %1 = arith.maxsi %c0_i32, %0 : i32
    %2 = arith.minsi %c1_i32_0, %1 : i32
    %c0_i32_1 = arith.constant 0 : i32
    %c0_i32_2 = arith.constant 0 : i32
    %c0_i32_3 = arith.constant 0 : i32
    return %2, %c0_i32_1, %c0_i32_2 : i32, i32, i32
  }
  func.func @transform_6(%arg0: i32, %arg1: i32) -> (i32, i32) {
    %c0_i32 = arith.constant 0 : i32
    %c0_i32_0 = arith.constant 0 : i32
    %c0_i32_1 = arith.constant 0 : i32
    return %c0_i32, %c0_i32_0 : i32, i32
  }
  func.func @transform_7(%arg0: i32, %arg1: i32) -> (i32, i32) {
    %c0_i32 = arith.constant 0 : i32
    %c0_i32_0 = arith.constant 0 : i32
    %c0_i32_1 = arith.constant 0 : i32
    return %c0_i32, %c0_i32_0 : i32, i32
  }
  func.func @transform_8(%arg0: i32, %arg1: i32) -> (i32, i32) {
    %c3_i32 = arith.constant 3 : i32
    %0 = arith.cmpi eq, %arg0, %c3_i32 : i32
    %c0_i32 = arith.constant 0 : i32
    %1 = arith.select %0, %arg1, %c0_i32 : i32
    %c0_i32_0 = arith.constant 0 : i32
    %c0_i32_1 = arith.constant 0 : i32
    return %1, %c0_i32_0 : i32, i32
  }
}

</mosaic_0001>

<llo_original>
// kernel: mpnn_forward.1
$region0: #{mpnn_forward.1}
  #allocation0 [shape = 'u32[]', space=smem, size = 0x4, offset = 0x4, fixed_abs, tag = 'smem constant byte address 0x4 - core index']
  #allocation1 [shape = 'u32[144,128]{1,0:T(1,128)}', space=vmem, size = 0x12000, scoped, tag = 'internal scratch']
  #allocation2 [shape = 'bf16[2,128,128]{2,1,0:T(8,128)(2,1)}', space=vmem, size = 0x10000, scoped, tag = 'scratch operand']
  #allocation3 [shape = 'bf16[128,256]{1,0:T(8,128)(2,1)}', space=vmem, size = 0x10000, scoped, tag = 'scratch operand']
  %s0 = inlined_call_operand.vmem [shape: bf16[128,128], index: 0, kind: input, shape index: {}]
  %s1 = inlined_call_operand.vmem [shape: bf16[128,128], index: 1, kind: input, shape index: {}]
  %s2 = inlined_call_operand.vmem [shape: f32[1,128], index: 2, kind: input, shape index: {}]
  %s3 = inlined_call_operand.hbm [shape: bf16[128,128], index: 3, kind: input, shape index: {}]
  %s4 = inlined_call_operand.hbm [shape: bf16[2,256,128], index: 4, kind: input, shape index: {}]
  %s5 = inlined_call_operand.vmem [shape: f32[2,1,128], index: 5, kind: input, shape index: {}]
  %s6 = inlined_call_operand.hbm [shape: bf16[256,128], index: 6, kind: input, shape index: {}]
  %s7 = inlined_call_operand.vmem [shape: f32[1,128], index: 7, kind: input, shape index: {}]
  %s8 = inlined_call_operand.vmem [shape: bf16[128,128], index: 8, kind: output, shape index: {}]
  %s9 = sld [smem:[#allocation0]]
  $region105: #{mpnn_forward.1} parent=0
    _
  %s11 = ssub.s32 1, %s9
  %s12 = scalar_select 0, %s11, %s9
  $region1: #{mpnn_forward.1} parent=0
    #allocation4 [shape = 'u8[65536]{0}', space=vmem, size = 0x10000, scoped, tag = 'input window, operand 3']
    #allocation5 [shape = 's32[2]{0}', space=sflag, size = 0x8, scoped, tag = 'scoped memory for mpnn_forward.1']
    #allocation6 [shape = 'u8[131072]{0}', space=vmem, size = 0x20000, scoped, tag = 'input window, operand 4']
    #allocation7 [shape = 's32[2]{0}', space=sflag, size = 0x8, scoped, tag = 'scoped memory for mpnn_forward.1']
    #allocation8 [shape = 'u8[65536]{0}', space=vmem, size = 0x10000, scoped, tag = 'input window, operand 6, single buffered']
    %13 = vsyncpa [#allocation5], 0
    %s14 = scalar_lea.sflag [#allocation5], 1
    %15 = vsyncpa %s14, 0
    %16 = vsyncpa [#allocation7], 0
    %s17 = scalar_lea.sflag [#allocation7], 1
    %18 = vsyncpa %s17, 0
    loop: start=0, step=1, limit=6
    $region2: #{mpnn_forward.1} parent=1 // loop_pre_header
      _
    $region3: #{mpnn_forward.1} parent=1 // loop_header
      %s20 = sphi 0, %s24
      %p21 = scmp.ge.s32.totalorder %s20, 6
      %s27 = sphi 0, %s39
      %s28 = sphi 0, %s35
      %s29 = sphi 0, %s27
      %s30 = sphi 0, %s28
      %s31 = sphi 0, %s29
      %s32 = sphi 0, %s30
      %s46 = sphi 0, %s48
      %s49 = sphi 0, %s46
      %s50 = sphi 0, %s49
      %s66 = sphi 0, %s50
      %s70 = sphi 0, %s70
      %s72 = sphi 0, %s70
      %s73 = sphi 0, %s72
      %s87 = sphi 0, %s73
      %s91 = sphi 0, %s91
      %s93 = sphi 0, %s91
      %s94 = sphi 0, %s93
      %s108 = sphi 0, %s94
      %s118 = sphi 0, %s120
      %s121 = sphi 0, %s118
      %s122 = sphi 0, %s121
      %s138 = sphi 0, %s122
      %s154 = sphi 0, %s156
      %s157 = sphi 0, %s154
      %s158 = sphi 0, %s157
      %s174 = sphi 0, %s158
      %s190 = sphi 0, %s192
      %s193 = sphi 0, %s190
      %s194 = sphi 0, %s193
      %s210 = sphi 0, %s194
      %s214 = sphi 0, %s214
      %s216 = sphi 0, %s214
      %s217 = sphi 0, %s216
      %s231 = sphi 0, %s217
      %s235 = sphi 0, %s235
      %s237 = sphi 0, %s235
      %s238 = sphi 0, %s237
      %s252 = sphi 0, %s238
      %s262 = sphi 0, %s264
      %s265 = sphi 0, %s262
      %s266 = sphi 0, %s265
      %s282 = sphi 0, %s266
    $region4: #{mpnn_forward.1} parent=1 // loop_header_branch
      %23 = sbr.rel (%p21) target = $region8
    $region5: #{mpnn_forward.1} parent=1 // loop_body
      %s25 = ssub.s32 %s20, 1
      %s26 = ssub.s32 %s20, 2
      %s33 = sadd.s32 1, %s28
      %p34 = scmp.ge.s32.totalorder %s33, 1
      %s35 = scalar_select %p34, 0, %s33
      %s36 = sadd.s32 1, %s27
      %s37 = scalar_select %p34, %s36, %s27
      %p38 = scmp.ge.s32.totalorder %s37, 4
      %s39 = scalar_select %p38, 0, %s37
      %p40 = scmp.eq.s32.totalorder %s27, 0
      %s41 = scalar_select %p40, %s28, 0
      %p42 = scmp.eq.s32.totalorder %s39, 0
      %s43 = scalar_select %p42, %s35, 0
      %s44 = ssub.s32 %s41, %s43
      %p45 = scmp.eq.s32.totalorder %s44, 0
      %s47 = sadd.s32 %s46, 1
      %s48 = scalar_select %p45, %s46, %s47
      %p51 = pneg %p45
      %p52 = scmp.eq.s32.totalorder %s20, 3
      %p53 = por %p51, %p52
      %p54 = scmp.ne.s32.totalorder %s46, %s49
      %p55 = scmp.eq.s32.totalorder %s20, 0
      %p56 = por %p54, %p55
      %p57 = scmp.ne.s32.totalorder %s46, %s49
      %p58 = scmp.eq.s32.totalorder %s25, 3
      %p59 = por %p57, %p58
      %p60 = scmp.ne.s32.totalorder %s49, %s50
      %p61 = scmp.eq.s32.totalorder %s25, 0
      %p62 = por %p60, %p61
      %p63 = scmp.ne.s32.totalorder %s49, %s50
      %p64 = scmp.eq.s32.totalorder %s26, 3
      %p65 = por %p63, %p64
      %p67 = scmp.ne.s32.totalorder %s50, %s66
      %p68 = scmp.eq.s32.totalorder %s26, 0
      %p69 = por %p67, %p68
      %s71 = sadd.s32 %s70, 1
      %p74 = scmp.eq.s32.totalorder %s20, 3
      %p75 = scmp.ne.s32.totalorder %s70, %s72
      %p76 = scmp.eq.s32.totalorder %s20, 0
      %p77 = por %p75, %p76
      %p78 = scmp.ne.s32.totalorder %s70, %s72
      %p79 = scmp.eq.s32.totalorder %s25, 3
      %p80 = por %p78, %p79
      %p81 = scmp.ne.s32.totalorder %s72, %s73
      %p82 = scmp.eq.s32.totalorder %s25, 0
      %p83 = por %p81, %p82
      %p84 = scmp.ne.s32.totalorder %s72, %s73
      %p85 = scmp.eq.s32.totalorder %s26, 3
      %p86 = por %p84, %p85
      %p88 = scmp.ne.s32.totalorder %s73, %s87
      %p89 = scmp.eq.s32.totalorder %s26, 0
      %p90 = por %p88, %p89
      %s92 = sadd.s32 %s91, 1
      %p95 = scmp.eq.s32.totalorder %s20, 3
      %p96 = scmp.ne.s32.totalorder %s91, %s93
      %p97 = scmp.eq.s32.totalorder %s20, 0
      %p98 = por %p96, %p97
      %p99 = scmp.ne.s32.totalorder %s91, %s93
      %p100 = scmp.eq.s32.totalorder %s25, 3
      %p101 = por %p99, %p100
      %p102 = scmp.ne.s32.totalorder %s93, %s94
      %p103 = scmp.eq.s32.totalorder %s25, 0
      %p104 = por %p102, %p103
      %p105 = scmp.ne.s32.totalorder %s93, %s94
      %p106 = scmp.eq.s32.totalorder %s26, 3
      %p107 = por %p105, %p106
      %p109 = scmp.ne.s32.totalorder %s94, %s108
      %p110 = scmp.eq.s32.totalorder %s26, 0
      %p111 = por %p109, %p110
      %p112 = scmp.eq.s32.totalorder %s27, 0
      %s113 = scalar_select %p112, 0, %s28
      %p114 = scmp.eq.s32.totalorder %s39, 0
      %s115 = scalar_select %p114, 0, %s35
      %s116 = ssub.s32 %s113, %s115
      %p117 = scmp.eq.s32.totalorder %s116, 0
      %s119 = sadd.s32 %s118, 1
      %s120 = scalar_select %p117, %s118, %s119
      %p123 = pneg %p117
      %p124 = scmp.eq.s32.totalorder %s20, 3
      %p125 = por %p123, %p124
      %p126 = scmp.ne.s32.totalorder %s118, %s121
      %p127 = scmp.eq.s32.totalorder %s20, 0
      %p128 = por %p126, %p127
      %p129 = scmp.ne.s32.totalorder %s118, %s121
      %p130 = scmp.eq.s32.totalorder %s25, 3
      %p131 = por %p129, %p130
      %p132 = scmp.ne.s32.totalorder %s121, %s122
      %p133 = scmp.eq.s32.totalorder %s25, 0
      %p134 = por %p132, %p133
      %p135 = scmp.ne.s32.totalorder %s121, %s122
      %p136 = scmp.eq.s32.totalorder %s26, 3
      %p137 = por %p135, %p136
      %p139 = scmp.ne.s32.totalorder %s122, %s138
      %p140 = scmp.eq.s32.totalorder %s26, 0
      %p141 = por %p139, %p140
      %s142 = ssub.s32 %s27, 1
      %p143 = scmp.gt.s32.totalorder %s142, 0
      %s144 = scalar_select %p143, %s142, 0
      %p145 = scmp.lt.s32.totalorder %s144, 1
      %s146 = scalar_select %p145, %s144, 1
      %s147 = ssub.s32 %s39, 1
      %p148 = scmp.gt.s32.totalorder %s147, 0
      %s149 = scalar_select %p148, %s147, 0
      %p150 = scmp.lt.s32.totalorder %s149, 1
      %s151 = scalar_select %p150, %s149, 1
      %s152 = ssub.s32 %s146, %s151
      %p153 = scmp.eq.s32.totalorder %s152, 0
      %s155 = sadd.s32 %s154, 1
      %s156 = scalar_select %p153, %s154, %s155
      %p159 = pneg %p153
      %p160 = scmp.eq.s32.totalorder %s20, 3
      %p161 = por %p159, %p160
      %p162 = scmp.ne.s32.totalorder %s154, %s157
      %p163 = scmp.eq.s32.totalorder %s20, 0
      %p164 = por %p162, %p163
      %p165 = scmp.ne.s32.totalorder %s154, %s157
      %p166 = scmp.eq.s32.totalorder %s25, 3
      %p167 = por %p165, %p166
      %p168 = scmp.ne.s32.totalorder %s157, %s158
      %p169 = scmp.eq.s32.totalorder %s25, 0
      %p170 = por %p168, %p169
      %p171 = scmp.ne.s32.totalorder %s157, %s158
      %p172 = scmp.eq.s32.totalorder %s26, 3
      %p173 = por %p171, %p172
      %p175 = scmp.ne.s32.totalorder %s158, %s174
      %p176 = scmp.eq.s32.totalorder %s26, 0
      %p177 = por %p175, %p176
      %s178 = ssub.s32 %s27, 1
      %p179 = scmp.gt.s32.totalorder %s178, 0
      %s180 = scalar_select %p179, %s178, 0
      %p181 = scmp.lt.s32.totalorder %s180, 1
      %s182 = scalar_select %p181, %s180, 1
      %s183 = ssub.s32 %s39, 1
      %p184 = scmp.gt.s32.totalorder %s183, 0
      %s185 = scalar_select %p184, %s183, 0
      %p186 = scmp.lt.s32.totalorder %s185, 1
      %s187 = scalar_select %p186, %s185, 1
      %s188 = ssub.s32 %s182, %s187
      %p189 = scmp.eq.s32.totalorder %s188, 0
      %s191 = sadd.s32 %s190, 1
      %s192 = scalar_select %p189, %s190, %s191
      %p195 = pneg %p189
      %p196 = scmp.eq.s32.totalorder %s20, 3
      %p197 = por %p195, %p196
      %p198 = scmp.ne.s32.totalorder %s190, %s193
      %p199 = scmp.eq.s32.totalorder %s20, 0
      %p200 = por %p198, %p199
      %p201 = scmp.ne.s32.totalorder %s190, %s193
      %p202 = scmp.eq.s32.totalorder %s25, 3
      %p203 = por %p201, %p202
      %p204 = scmp.ne.s32.totalorder %s193, %s194
      %p205 = scmp.eq.s32.totalorder %s25, 0
      %p206 = por %p204, %p205
      %p207 = scmp.ne.s32.totalorder %s193, %s194
      %p208 = scmp.eq.s32.totalorder %s26, 3
      %p209 = por %p207, %p208
      %p211 = scmp.ne.s32.totalorder %s194, %s210
      %p212 = scmp.eq.s32.totalorder %s26, 0
      %p213 = por %p211, %p212
      %s215 = sadd.s32 %s214, 1
      %p218 = scmp.eq.s32.totalorder %s20, 3
      %p219 = scmp.ne.s32.totalorder %s214, %s216
      %p220 = scmp.eq.s32.totalorder %s20, 0
      %p221 = por %p219, %p220
      %p222 = scmp.ne.s32.totalorder %s214, %s216
      %p223 = scmp.eq.s32.totalorder %s25, 3
      %p224 = por %p222, %p223
      %p225 = scmp.ne.s32.totalorder %s216, %s217
      %p226 = scmp.eq.s32.totalorder %s25, 0
      %p227 = por %p225, %p226
      %p228 = scmp.ne.s32.totalorder %s216, %s217
      %p229 = scmp.eq.s32.totalorder %s26, 3
      %p230 = por %p228, %p229
      %p232 = scmp.ne.s32.totalorder %s217, %s231
      %p233 = scmp.eq.s32.totalorder %s26, 0
      %p234 = por %p232, %p233
      %s236 = sadd.s32 %s235, 1
      %p239 = scmp.eq.s32.totalorder %s20, 3
      %p240 = scmp.ne.s32.totalorder %s235, %s237
      %p241 = scmp.eq.s32.totalorder %s20, 0
      %p242 = por %p240, %p241
      %p243 = scmp.ne.s32.totalorder %s235, %s237
      %p244 = scmp.eq.s32.totalorder %s25, 3
      %p245 = por %p243, %p244
      %p246 = scmp.ne.s32.totalorder %s237, %s238
      %p247 = scmp.eq.s32.totalorder %s25, 0
      %p248 = por %p246, %p247
      %p249 = scmp.ne.s32.totalorder %s237, %s238
      %p250 = scmp.eq.s32.totalorder %s26, 3
      %p251 = por %p249, %p250
      %p253 = scmp.ne.s32.totalorder %s238, %s252
      %p254 = scmp.eq.s32.totalorder %s26, 0
      %p255 = por %p253, %p254
      %p256 = scmp.eq.s32.totalorder %s27, 3
      %s257 = scalar_select %p256, %s28, 0
      %p258 = scmp.eq.s32.totalorder %s39, 3
      %s259 = scalar_select %p258, %s35, 0
      %s260 = ssub.s32 %s257, %s259
      %p261 = scmp.eq.s32.totalorder %s260, 0
      %s263 = sadd.s32 %s262, 1
      %s264 = scalar_select %p261, %s262, %s263
      %p267 = pneg %p261
      %p268 = scmp.eq.s32.totalorder %s20, 3
      %p269 = por %p267, %p268
      %p270 = scmp.ne.s32.totalorder %s262, %s265
      %p271 = scmp.eq.s32.totalorder %s20, 0
      %p272 = por %p270, %p271
      %p273 = scmp.ne.s32.totalorder %s262, %s265
      %p274 = scmp.eq.s32.totalorder %s25, 3
      %p275 = por %p273, %p274
      %p276 = scmp.ne.s32.totalorder %s265, %s266
      %p277 = scmp.eq.s32.totalorder %s25, 0
      %p278 = por %p276, %p277
      %p279 = scmp.ne.s32.totalorder %s265, %s266
      %p280 = scmp.eq.s32.totalorder %s26, 3
      %p281 = por %p279, %p280
      %p283 = scmp.ne.s32.totalorder %s266, %s282
      %p284 = scmp.eq.s32.totalorder %s26, 0
      %p285 = por %p283, %p284
      %p286 = scmp.le.s32.totalorder 1, %s20
      %p287 = scmp.lt.s32.totalorder %s20, 5
      %p288 = pnand %p286, %p287
      %p289 = pneg %p288
      // Predicated region
      $region9: #{mpnn_forward.1} parent=5 // pred_check
        _
      $region10: #{mpnn_forward.1} parent=5 // pred_check_branch
        %291 = sbr.rel (%p288) target = $region12
      $region11: #{mpnn_forward.1} parent=5 // pred_region
        %s292 = ssub.s32 %s20, 1
        // Predicated region
        $region13: #{mpnn_forward.1} parent=11 // pred_check
          %p293 = pneg %p83
        $region14: #{mpnn_forward.1} parent=11 // pred_check_branch
          %295 = sbr.rel (%p293) target = $region16
        $region15: #{mpnn_forward.1} parent=11 // pred_region
          _
        $region16: #{mpnn_forward.1} parent=11 // pred_fallthru
          _
        // Predicated region
        $region17: #{mpnn_forward.1} parent=11 // pred_check
          %p296 = pneg %p104
        $region18: #{mpnn_forward.1} parent=11 // pred_check_branch
          %298 = sbr.rel (%p296) target = $region20
        $region19: #{mpnn_forward.1} parent=11 // pred_region
          _
        $region20: #{mpnn_forward.1} parent=11 // pred_fallthru
          _
        // Predicated region
        $region21: #{mpnn_forward.1} parent=11 // pred_check
          %p299 = pneg %p227
        $region22: #{mpnn_forward.1} parent=11 // pred_check_branch
          %301 = sbr.rel (%p299) target = $region24
        $region23: #{mpnn_forward.1} parent=11 // pred_region
          %s303 = ssub.s32 2048, 2048
          %304 = vsyncadd [#allocation7], %s303
          %s305 = sshll.u32 [#allocation8], 4
          %s306 = int_to_ptr.vmem [resolvable:$true] %s305
          %311 = dma.hbm_to_vmem [thread:$0]  %s6, 2048, %s306, [#allocation7], 64, 64, 4
        $region24: #{mpnn_forward.1} parent=11 // pred_fallthru
          _
        // Predicated region
        $region25: #{mpnn_forward.1} parent=11 // pred_check
          %p312 = pneg %p248
        $region26: #{mpnn_forward.1} parent=11 // pred_check_branch
          %314 = sbr.rel (%p312) target = $region28
        $region27: #{mpnn_forward.1} parent=11 // pred_region
          _
        $region28: #{mpnn_forward.1} parent=11 // pred_fallthru
          _
      $region12: #{mpnn_forward.1} parent=5 // pred_fallthru
        _
      %p315 = scmp.lt.s32.totalorder %s20, 4
      // Predicated region
      $region29: #{mpnn_forward.1} parent=5 // pred_check
        %p316 = pneg %p315
      $region30: #{mpnn_forward.1} parent=5 // pred_check_branch
        %318 = sbr.rel (%p316) target = $region32
      $region31: #{mpnn_forward.1} parent=5 // pred_region
        // Predicated region
        $region33: #{mpnn_forward.1} parent=31 // pred_check
          %p319 = pneg %p56
        $region34: #{mpnn_forward.1} parent=31 // pred_check_branch
          %321 = sbr.rel (%p319) target = $region36
        $region35: #{mpnn_forward.1} parent=31 // pred_region
          %p322 = scmp.eq.s32.totalorder %s27, 0
          %s323 = scalar_select %p322, %s28, 0
          %s324 = smul.u32 16, %s323
          %p325 = scmp.lt.s32.totalorder %s324, 15
          %s326 = scalar_select %p325, %s324, 15
          %s327 = smul.addr %s326, 4
          %s328 = scalar_lea.vmem %s0, %s327
          %p329 = scmp.eq.s32.totalorder %s27, 0
          %s330 = scalar_select %p329, %s28, 0
          %s331 = smul.u32 16, %s330
        $region36: #{mpnn_forward.1} parent=31 // pred_fallthru
          _
        // Predicated region
        $region37: #{mpnn_forward.1} parent=31 // pred_check
          %p332 = pneg %p128
        $region38: #{mpnn_forward.1} parent=31 // pred_check_branch
          %334 = sbr.rel (%p332) target = $region40
        $region39: #{mpnn_forward.1} parent=31 // pred_region
          %s335 = sand.u32 %s118, 1
          %s336 = scalar_lea.sflag [#allocation5], %s335
          %s337 = sand.u32 %s118, 1
          %s338 = smul.addr %s337, 64
          %s339 = scalar_lea.vmem [#allocation4], %s338
          %p340 = scmp.eq.s32.totalorder %s27, 0
          %s341 = scalar_select %p340, 0, %s28
          %s342 = smul.u32 16, %s341
          %s344 = ssub.s32 1024, 1024
          %345 = vsyncadd %s336, %s344
          %s346 = smul.addr %s342, 64
          %s347 = scalar_lea.hbm %s3, %s346
          %s348 = sshll.u32 %s339, 4
          %s349 = int_to_ptr.vmem [resolvable:$true] %s348
          %354 = dma.hbm_to_vmem [thread:$0]  %s347, 1024, %s349, %s336, 64, 64, 4
        $region40: #{mpnn_forward.1} parent=31 // pred_fallthru
          _
        // Predicated region
        $region41: #{mpnn_forward.1} parent=31 // pred_check
          %p355 = pneg %p164
        $region42: #{mpnn_forward.1} parent=31 // pred_check_branch
          %357 = sbr.rel (%p355) target = $region44
        $region43: #{mpnn_forward.1} parent=31 // pred_region
          %s358 = sand.u32 %s20, 1
          %s359 = scalar_lea.sflag [#allocation7], %s358
          %s360 = sand.u32 %s154, 1
          %s361 = smul.addr %s360, 128
          %s362 = scalar_lea.vmem [#allocation6], %s361
          %s363 = ssub.s32 %s27, 1
          %p364 = scmp.gt.s32.totalorder %s363, 0
          %s365 = scalar_select %p364, %s363, 0
          %p366 = scmp.lt.s32.totalorder %s365, 1
          %s367 = scalar_select %p366, %s365, 1
          %s369 = ssub.s32 2048, 2048
          %370 = vsyncadd %s359, %s369
          %s371 = smul.addr %s367, 32
          %s372 = smul.addr %s371, 64
          %s373 = scalar_lea.hbm %s4, %s372
          %s374 = sshll.u32 %s362, 4
          %s375 = int_to_ptr.vmem [resolvable:$true] %s374
          %380 = dma.hbm_to_vmem [thread:$0]  %s373, 2048, %s375, %s359, 64, 64, 4
        $region44: #{mpnn_forward.1} parent=31 // pred_fallthru
          _
        // Predicated region
        $region45: #{mpnn_forward.1} parent=31 // pred_check
          %p381 = pneg %p200
        $region46: #{mpnn_forward.1} parent=31 // pred_check_branch
          %383 = sbr.rel (%p381) target = $region48
        $region47: #{mpnn_forward.1} parent=31 // pred_region
          %s384 = ssub.s32 %s27, 1
          %p385 = scmp.gt.s32.totalorder %s384, 0
          %s386 = scalar_select %p385, %s384, 0
          %p387 = scmp.lt.s32.totalorder %s386, 1
          %s388 = scalar_select %p387, %s386, 1
          %p389 = scmp.lt.s32.totalorder %s388, 1
          %s390 = scalar_select %p389, %s388, 1
          %s391 = scalar_lea.vmem %s5, %s390
          %s392 = ssub.s32 %s27, 1
          %p393 = scmp.gt.s32.totalorder %s392, 0
          %s394 = scalar_select %p393, %s392, 0
          %p395 = scmp.lt.s32.totalorder %s394, 1
          %s396 = scalar_select %p395, %s394, 1
        $region48: #{mpnn_forward.1} parent=31 // pred_fallthru
          _
      $region32: #{mpnn_forward.1} parent=5 // pred_fallthru
        _
      %p397 = scmp.le.s32.totalorder 1, %s20
      %p398 = scmp.lt.s32.totalorder %s20, 5
      %p399 = pnand %p397, %p398
      %p400 = pneg %p399
      // Predicated region
      $region49: #{mpnn_forward.1} parent=5 // pred_check
        _
      $region50: #{mpnn_forward.1} parent=5 // pred_check_branch
        %402 = sbr.rel (%p399) target = $region52
      $region51: #{mpnn_forward.1} parent=5 // pred_region
        %s403 = ssub.s32 %s20, 1
        %s404 = sand.u32 %s121, 1
        %s405 = scalar_lea.sflag [#allocation5], %s404
        %s406 = sand.u32 %s121, 1
        %s407 = smul.addr %s406, 64
        %s408 = scalar_lea.vmem [#allocation4], %s407
        // Predicated region
        $region53: #{mpnn_forward.1} parent=51 // pred_check
          %p409 = pneg %p134
        $region54: #{mpnn_forward.1} parent=51 // pred_check_branch
          %411 = sbr.rel (%p409) target = $region56
        $region55: #{mpnn_forward.1} parent=51 // pred_region
          %412 = dma.done %s405, 1024
        $region56: #{mpnn_forward.1} parent=51 // pred_fallthru
          _
        %s413 = sand.u32 %s25, 1
        %s414 = scalar_lea.sflag [#allocation7], %s413
        %s415 = sand.u32 %s157, 1
        %s416 = smul.addr %s415, 128
        %s417 = scalar_lea.vmem [#allocation6], %s416
        // Predicated region
        $region57: #{mpnn_forward.1} parent=51 // pred_check
          %p418 = pneg %p170
        $region58: #{mpnn_forward.1} parent=51 // pred_check_branch
          %420 = sbr.rel (%p418) target = $region60
        $region59: #{mpnn_forward.1} parent=51 // pred_region
          %421 = dma.done %s414, 2048
        $region60: #{mpnn_forward.1} parent=51 // pred_fallthru
          _
        // Predicated region
        $region61: #{mpnn_forward.1} parent=51 // pred_check
          %p422 = pneg %p227
        $region62: #{mpnn_forward.1} parent=51 // pred_check_branch
          %424 = sbr.rel (%p422) target = $region64
        $region63: #{mpnn_forward.1} parent=51 // pred_region
          %425 = dma.done [#allocation7], 2048
        $region64: #{mpnn_forward.1} parent=51 // pred_fallthru
          _
        %p426 = scmp.eq.s32.totalorder %s29, 0
        %s427 = scalar_select %p426, %s30, 0
        %s428 = smul.u32 16, %s427
        %p429 = scmp.lt.s32.totalorder %s428, 15
        %s430 = scalar_select %p429, %s428, 15
        %s431 = smul.addr %s430, 4
        %s432 = scalar_lea.vmem %s0, %s431
        %p433 = pneg %p62
        %p434 = pneg %p59
        %p435 = pneg %p83
        %p436 = pneg %p80
        %p437 = pneg %p104
        %p438 = pneg %p101
        %s439 = sand.u32 %s121, 1
        %s440 = scalar_lea.sflag [#allocation5], %s439
        %s441 = sand.u32 %s121, 1
        %s442 = smul.addr %s441, 64
        %s443 = scalar_lea.vmem [#allocation4], %s442
        %p444 = pneg %p134
        %p445 = pneg %p131
        %s446 = sand.u32 %s25, 1
        %s447 = scalar_lea.sflag [#allocation7], %s446
        %s448 = sand.u32 %s157, 1
        %s449 = smul.addr %s448, 128
        %s450 = scalar_lea.vmem [#allocation6], %s449
        %p451 = pneg %p170
        %p452 = pneg %p167
        %s453 = ssub.s32 %s29, 1
        %p454 = scmp.gt.s32.totalorder %s453, 0
        %s455 = scalar_select %p454, %s453, 0
        %p456 = scmp.lt.s32.totalorder %s455, 1
        %s457 = scalar_select %p456, %s455, 1
        %p458 = scmp.lt.s32.totalorder %s457, 1
        %s459 = scalar_select %p458, %s457, 1
        %s460 = scalar_lea.vmem %s5, %s459
        %p461 = pneg %p206
        %p462 = pneg %p203
        %p463 = pneg %p227
        %p464 = pneg %p224
        %p465 = pneg %p248
        %p466 = pneg %p245
        %p467 = pneg %p278
        %p468 = pneg %p275
        %p469 = scmp.eq.s32.totalorder %s29, 3
        %s470 = scalar_select %p469, %s30, 0
        %s471 = smul.u32 16, %s470
        %p472 = scmp.lt.s32.totalorder %s471, 15
        %s473 = scalar_select %p472, %s471, 15
        %s474 = smul.addr %s473, 4
        %s475 = scalar_lea.vmem %s8, %s474
        %p476 = scmp.eq.s32.totalorder %s29, 0
        %s477 = scalar_select %p476, %s30, 0
        %s478 = smul.u32 16, %s477
        %p479 = scmp.lt.s32.totalorder %s478, 15
        %s480 = scalar_select %p479, %s478, 15
        %s481 = smul.addr %s480, 4
        %s482 = scalar_lea.vmem %s0, %s481
        %p483 = scmp.eq.s32.totalorder %s29, 0
        %s484 = scalar_select %p483, %s30, 0
        %s485 = smul.u32 16, %s484
        %p486 = scmp.eq.s32.totalorder %s29, 0
        %s487 = scalar_select %p486, 0, %s30
        %s488 = smul.u32 16, %s487
        %s489 = ssub.s32 %s29, 1
        %p490 = scmp.gt.s32.totalorder %s489, 0
        %s491 = scalar_select %p490, %s489, 0
        %p492 = scmp.lt.s32.totalorder %s491, 1
        %s493 = scalar_select %p492, %s491, 1
        %s494 = ssub.s32 %s29, 1
        %p495 = scmp.gt.s32.totalorder %s494, 0
        %s496 = scalar_select %p495, %s494, 0
        %p497 = scmp.lt.s32.totalorder %s496, 1
        %s498 = scalar_select %p497, %s496, 1
        %p499 = scmp.lt.s32.totalorder %s498, 1
        %s500 = scalar_select %p499, %s498, 1
        %s501 = scalar_lea.vmem %s5, %s500
        %s502 = ssub.s32 %s29, 1
        %p503 = scmp.gt.s32.totalorder %s502, 0
        %s504 = scalar_select %p503, %s502, 0
        %p505 = scmp.lt.s32.totalorder %s504, 1
        %s506 = scalar_select %p505, %s504, 1
        %p507 = scmp.eq.s32.totalorder %s29, 3
        %s508 = scalar_select %p507, %s30, 0
        %s509 = smul.u32 16, %s508
        %p510 = scmp.lt.s32.totalorder %s509, 15
        %s511 = scalar_select %p510, %s509, 15
        %s512 = smul.addr %s511, 4
        %s513 = scalar_lea.vmem %s8, %s512
        %p514 = scmp.eq.s32.totalorder %s29, 3
        %s515 = scalar_select %p514, %s30, 0
        %s516 = smul.u32 16, %s515
        %s518 = smul.u32 %s30, 128
        %p519 = scmp.eq.s32.totalorder %s29, 0
        // Predicated region
        $region65: #{mpnn_forward.1} parent=51 // pred_check
          %p520 = pneg %p519
        $region66: #{mpnn_forward.1} parent=51 // pred_check_branch
          %522 = sbr.rel (%p520) target = $region68
        $region67: #{mpnn_forward.1} parent=51 // pred_region
          %v523 = vld [vmem:[%s482] sm:$0xf]
          %v524 = vld [vmem:[%s482 + $0x4] sm:$0xf]
          %v525 = vld [vmem:[%s482 + $0x8] sm:$0xf]
          %v526 = vld [vmem:[%s482 + $0xc] sm:$0xf]
          %v527 = vld [vmem:[%s482 + $0x10] sm:$0xf]
          %v528 = vld [vmem:[%s482 + $0x14] sm:$0xf]
          %v529 = vld [vmem:[%s482 + $0x18] sm:$0xf]
          %v530 = vld [vmem:[%s482 + $0x1c] sm:$0xf]
          %v531 = vld [vmem:[%s482 + $0x20] sm:$0xf]
          %v532 = vld [vmem:[%s482 + $0x24] sm:$0xf]
          %v533 = vld [vmem:[%s482 + $0x28] sm:$0xf]
          %v534 = vld [vmem:[%s482 + $0x2c] sm:$0xf]
          %v535 = vld [vmem:[%s482 + $0x30] sm:$0xf]
          %v536 = vld [vmem:[%s482 + $0x34] sm:$0xf]
          %v537 = vld [vmem:[%s482 + $0x38] sm:$0xf]
          %v538 = vld [vmem:[%s482 + $0x3c] sm:$0xf]
          %v539 = vld [vmem:[%s1] sm:$0xf]
          %v540 = vld [vmem:[%s1 + $0x4] sm:$0xf]
          %v541 = vld [vmem:[%s1 + $0x8] sm:$0xf]
          %v542 = vld [vmem:[%s1 + $0xc] sm:$0xf]
          %v543 = vld [vmem:[%s1 + $0x10] sm:$0xf]
          %v544 = vld [vmem:[%s1 + $0x14] sm:$0xf]
          %v545 = vld [vmem:[%s1 + $0x18] sm:$0xf]
          %v546 = vld [vmem:[%s1 + $0x1c] sm:$0xf]
          %v547 = vld [vmem:[%s1 + $0x20] sm:$0xf]
          %v548 = vld [vmem:[%s1 + $0x24] sm:$0xf]
          %v549 = vld [vmem:[%s1 + $0x28] sm:$0xf]
          %v550 = vld [vmem:[%s1 + $0x2c] sm:$0xf]
          %v551 = vld [vmem:[%s1 + $0x30] sm:$0xf]
          %v552 = vld [vmem:[%s1 + $0x34] sm:$0xf]
          %v553 = vld [vmem:[%s1 + $0x38] sm:$0xf]
          %v554 = vld [vmem:[%s1 + $0x3c] sm:$0xf]
          %v555 = vld [vmem:[%s2] sm:$0x1]
          %v557 = vlaneseq
          %v558 = vshrl.u32 %v557, 7
          %v559 = vsub.s32 0, %v558
          %v560 = vrot.slane %v555, %v559
          %v578 = vunpack.c.l.b16 %v523
          %v579 = vunpack.c.l.b16 %v524
          %v580 = vunpack.c.l.b16 %v525
          %v581 = vunpack.c.l.b16 %v526
          %v582 = vunpack.c.l.b16 %v527
          %v583 = vunpack.c.l.b16 %v528
          %v584 = vunpack.c.l.b16 %v529
          %v585 = vunpack.c.l.b16 %v530
          %v586 = vunpack.c.l.b16 %v531
          %v587 = vunpack.c.l.b16 %v532
          %v588 = vunpack.c.l.b16 %v533
          %v589 = vunpack.c.l.b16 %v534
          %v590 = vunpack.c.l.b16 %v535
          %v591 = vunpack.c.l.b16 %v536
          %v592 = vunpack.c.l.b16 %v537
          %v593 = vunpack.c.l.b16 %v538
          %v594 = vpack.c.b16 %v579, %v578
          %v595 = vpack.c.b16 %v581, %v580
          %v596 = vpack.c.b16 %v583, %v582
          %v597 = vpack.c.b16 %v585, %v584
          %v598 = vpack.c.b16 %v587, %v586
          %v599 = vpack.c.b16 %v589, %v588
          %v600 = vpack.c.b16 %v591, %v590
          %v601 = vpack.c.b16 %v593, %v592
          %v626 = vunpack.c.l.b16 %v539
          %v627 = vunpack.c.l.b16 %v540
          %v628 = vunpack.c.l.b16 %v541
          %v629 = vunpack.c.l.b16 %v542
          %v630 = vunpack.c.l.b16 %v543
          %v631 = vunpack.c.l.b16 %v544
          %v632 = vunpack.c.l.b16 %v545
          %v633 = vunpack.c.l.b16 %v546
          %v634 = vunpack.c.l.b16 %v547
          %v635 = vunpack.c.l.b16 %v548
          %v636 = vunpack.c.l.b16 %v549
          %v637 = vunpack.c.l.b16 %v550
          %v638 = vunpack.c.l.b16 %v551
          %v639 = vunpack.c.l.b16 %v552
          %v640 = vunpack.c.l.b16 %v553
          %v641 = vunpack.c.l.b16 %v554
          %v642 = vpack.c.b16 %v627, %v626
          %v643 = vpack.c.b16 %v629, %v628
          %v644 = vpack.c.b16 %v631, %v630
          %v645 = vpack.c.b16 %v633, %v632
          %v646 = vpack.c.b16 %v635, %v634
          %v647 = vpack.c.b16 %v637, %v636
          %v648 = vpack.c.b16 %v639, %v638
          %v649 = vpack.c.b16 %v641, %v640
          %658 = vmatprep.subr.bf16.mxu0 0
          %659 = vmatpush1.bf16.msra.mxu0 %v649
          %660 = vmatprep.subr.bf16.mxu0 0
          %661 = vmatpush1.bf16.msra.mxu0 %v648
          %662 = vmatprep.subr.bf16.mxu0 0
          %663 = vmatpush1.bf16.msra.mxu0 %v647
          %664 = vmatprep.subr.bf16.mxu0 0
          %665 = vmatpush1.bf16.msra.mxu0 %v646
          %666 = vmatprep.subr.bf16.mxu0 0
          %667 = vmatpush1.bf16.msra.mxu0 %v645
          %668 = vmatprep.subr.bf16.mxu0 0
          %669 = vmatpush1.bf16.msra.mxu0 %v644
          %670 = vmatprep.subr.bf16.mxu0 0
          %671 = vmatpush1.bf16.msra.mxu0 %v643
          %672 = vmatprep.subr.bf16.mxu0 0
          %673 = vmatpush1.bf16.msra.mxu0 %v642
          %674 = vmatprep.subr.bf16.mxu0 0
          %675 = vmatpush2.bf16.msra.mxu0 0
          %676 = vmatprep.subr.bf16.mxu0 0
          %677 = vmatpush2.bf16.msra.mxu0 0
          %678 = vmatprep.subr.bf16.mxu0 0
          %679 = vmatpush2.bf16.msra.mxu0 0
          %680 = vmatprep.subr.bf16.mxu0 0
          %681 = vmatpush2.bf16.msra.mxu0 0
          %682 = vmatprep.subr.bf16.mxu0 0
          %683 = vmatpush2.bf16.msra.mxu0 0
          %684 = vmatprep.subr.bf16.mxu0 0
          %685 = vmatpush2.bf16.msra.mxu0 0
          %686 = vmatprep.subr.bf16.mxu0 0
          %687 = vmatpush2.bf16.msra.mxu0 0
          %688 = vmatprep.subr.bf16.mxu0 0
          %689 = vmatpush2.bf16.msra.mxu0 0
          %690 = vmatprep.mubr.bf16.mxu0 0
          %691 = vmatmul.mubr.bf16.gmra.mxu0 %v594
          %v692 = vpop.f32.mrf.mxu0
          %v693 = vadd.f32 %v560, %v692
          %v694 = vpop.f32.mrf.mxu0
          %v695 = vpop.f32.mrf.mxu0
          %v696 = vadd.f32 %v560, %v695
          %v697 = vpop.f32.mrf.mxu0
          %698 = vmatprep.mubr.bf16.mxu0 0
          %699 = vmatmul.mubr.bf16.gmra.mxu0 %v595
          %v700 = vpop.f32.mrf.mxu0
          %v701 = vadd.f32 %v560, %v700
          %v702 = vpop.f32.mrf.mxu0
          %v703 = vpop.f32.mrf.mxu0
          %v704 = vadd.f32 %v560, %v703
          %v705 = vpop.f32.mrf.mxu0
          %706 = vmatprep.mubr.bf16.mxu0 0
          %707 = vmatmul.mubr.bf16.gmra.mxu0 %v596
          %v708 = vpop.f32.mrf.mxu0
          %v709 = vadd.f32 %v560, %v708
          %v710 = vpop.f32.mrf.mxu0
          %v711 = vpop.f32.mrf.mxu0
          %v712 = vadd.f32 %v560, %v711
          %v713 = vpop.f32.mrf.mxu0
          %714 = vmatprep.mubr.bf16.mxu0 0
          %715 = vmatmul.mubr.bf16.gmra.mxu0 %v597
          %v716 = vpop.f32.mrf.mxu0
          %v717 = vadd.f32 %v560, %v716
          %v718 = vpop.f32.mrf.mxu0
          %v719 = vpop.f32.mrf.mxu0
          %v720 = vadd.f32 %v560, %v719
          %v721 = vpop.f32.mrf.mxu0
          %722 = vmatprep.mubr.bf16.mxu0 0
          %723 = vmatmul.mubr.bf16.gmra.mxu0 %v598
          %v724 = vpop.f32.mrf.mxu0
          %v725 = vadd.f32 %v560, %v724
          %v726 = vpop.f32.mrf.mxu0
          %v727 = vpop.f32.mrf.mxu0
          %v728 = vadd.f32 %v560, %v727
          %v729 = vpop.f32.mrf.mxu0
          %730 = vmatprep.mubr.bf16.mxu0 0
          %731 = vmatmul.mubr.bf16.gmra.mxu0 %v599
          %v732 = vpop.f32.mrf.mxu0
          %v733 = vadd.f32 %v560, %v732
          %v734 = vpop.f32.mrf.mxu0
          %v735 = vpop.f32.mrf.mxu0
          %v736 = vadd.f32 %v560, %v735
          %v737 = vpop.f32.mrf.mxu0
          %738 = vmatprep.mubr.bf16.mxu0 0
          %739 = vmatmul.mubr.bf16.gmra.mxu0 %v600
          %v740 = vpop.f32.mrf.mxu0
          %v741 = vadd.f32 %v560, %v740
          %v742 = vpop.f32.mrf.mxu0
          %v743 = vpop.f32.mrf.mxu0
          %v744 = vadd.f32 %v560, %v743
          %v745 = vpop.f32.mrf.mxu0
          %746 = vmatprep.mubr.bf16.mxu0 0
          %747 = vmatmul.mubr.bf16.gmra.mxu0 %v601
          %v748 = vpop.f32.mrf.mxu0
          %v749 = vadd.f32 %v560, %v748
          %v750 = vpop.f32.mrf.mxu0
          %v751 = vpop.f32.mrf.mxu0
          %v752 = vadd.f32 %v560, %v751
          %v753 = vpop.f32.mrf.mxu0
          %754 = vdwg.mxu0
          %v755 = vmax.f32 %v693, 0.0
          %v756 = vmax.f32 %v696, 0.0
          %v757 = vmax.f32 %v701, 0.0
          %v758 = vmax.f32 %v704, 0.0
          %v759 = vmax.f32 %v709, 0.0
          %v760 = vmax.f32 %v712, 0.0
          %v761 = vmax.f32 %v717, 0.0
          %v762 = vmax.f32 %v720, 0.0
          %v763 = vmax.f32 %v725, 0.0
          %v764 = vmax.f32 %v728, 0.0
          %v765 = vmax.f32 %v733, 0.0
          %v766 = vmax.f32 %v736, 0.0
          %v767 = vmax.f32 %v741, 0.0
          %v768 = vmax.f32 %v744, 0.0
          %v769 = vmax.f32 %v749, 0.0
          %v770 = vmax.f32 %v752, 0.0
          %v771 = vpack.c.bf16 %v756, %v755
          %v772 = vpack.c.bf16 %v758, %v757
          %v773 = vpack.c.bf16 %v760, %v759
          %v774 = vpack.c.bf16 %v762, %v761
          %v775 = vpack.c.bf16 %v764, %v763
          %v776 = vpack.c.bf16 %v766, %v765
          %v777 = vpack.c.bf16 %v768, %v767
          %v778 = vpack.c.bf16 %v770, %v769
          %v787 = vunpack.c.l.b16 %v771
          %v788 = vunpack.c.h.b16 %v771
          %v789 = vunpack.c.l.b16 %v772
          %v790 = vunpack.c.h.b16 %v772
          %v791 = vunpack.c.l.b16 %v773
          %v792 = vunpack.c.h.b16 %v773
          %v793 = vunpack.c.l.b16 %v774
          %v794 = vunpack.c.h.b16 %v774
          %v795 = vunpack.c.l.b16 %v775
          %v796 = vunpack.c.h.b16 %v775
          %v797 = vunpack.c.l.b16 %v776
          %v798 = vunpack.c.h.b16 %v776
          %v799 = vunpack.c.l.b16 %v777
          %v800 = vunpack.c.h.b16 %v777
          %v801 = vunpack.c.l.b16 %v778
          %v802 = vunpack.c.h.b16 %v778
          %v803 = vpack.c.b16 %v787, %v787
          %v804 = vpack.c.b16 %v788, %v788
          %v805 = vpack.c.b16 %v789, %v789
          %v806 = vpack.c.b16 %v790, %v790
          %v807 = vpack.c.b16 %v791, %v791
          %v808 = vpack.c.b16 %v792, %v792
          %v809 = vpack.c.b16 %v793, %v793
          %v810 = vpack.c.b16 %v794, %v794
          %v811 = vpack.c.b16 %v795, %v795
          %v812 = vpack.c.b16 %v796, %v796
          %v813 = vpack.c.b16 %v797, %v797
          %v814 = vpack.c.b16 %v798, %v798
          %v815 = vpack.c.b16 %v799, %v799
          %v816 = vpack.c.b16 %v800, %v800
          %v817 = vpack.c.b16 %v801, %v801
          %v818 = vpack.c.b16 %v802, %v802
          %s835 = sshra.s32 %s518, 3
          %s836 = sand.u32 %s518, 7
          %s837 = smul.addr %s835, 4
          %s838 = scalar_lea.vmem [#allocation2], %s837
          %839 = vst [vmem:[%s838] sm:$0xf] %v803
          %840 = vst [vmem:[%s838 + $0x4] sm:$0xf] %v804
          %841 = vst [vmem:[%s838 + $0x8] sm:$0xf] %v805
          %842 = vst [vmem:[%s838 + $0xc] sm:$0xf] %v806
          %843 = vst [vmem:[%s838 + $0x10] sm:$0xf] %v807
          %844 = vst [vmem:[%s838 + $0x14] sm:$0xf] %v808
          %845 = vst [vmem:[%s838 + $0x18] sm:$0xf] %v809
          %846 = vst [vmem:[%s838 + $0x1c] sm:$0xf] %v810
          %847 = vst [vmem:[%s838 + $0x20] sm:$0xf] %v811
          %848 = vst [vmem:[%s838 + $0x24] sm:$0xf] %v812
          %849 = vst [vmem:[%s838 + $0x28] sm:$0xf] %v813
          %850 = vst [vmem:[%s838 + $0x2c] sm:$0xf] %v814
          %851 = vst [vmem:[%s838 + $0x30] sm:$0xf] %v815
          %852 = vst [vmem:[%s838 + $0x34] sm:$0xf] %v816
          %853 = vst [vmem:[%s838 + $0x38] sm:$0xf] %v817
          %854 = vst [vmem:[%s838 + $0x3c] sm:$0xf] %v818
        $region68: #{mpnn_forward.1} parent=51 // pred_fallthru
          _
        %p855 = scmp.gt.s32.totalorder %s29, 0
        %p856 = scmp.lt.s32.totalorder %s29, 0
        %s857 = ssub.s32 0, %s29
        %s858 = scalar_select %p856, %s857, %s29
        %s859 = sand.u32 %s858, 1
        %s860 = ssub.s32 0, %s859
        %s861 = scalar_select %p856, %s860, %s859
        %p862 = scmp.ne.s32.totalorder %s861, 0
        %p863 = scmp.lt.s32.totalorder %s861, 0
        %p864 = pnand %p863, %p862
        %p865 = pneg %p864
        %s866 = sadd.s32 %s861, 2
        %s867 = scalar_select %p865, %s866, %s861
        %p868 = scmp.eq.s32.totalorder %s867, 1
        %p869 = pnand %p855, %p868
        %p870 = pneg %p869
        // Predicated region
        $region69: #{mpnn_forward.1} parent=51 // pred_check
          _
        $region70: #{mpnn_forward.1} parent=51 // pred_check_branch
          %872 = sbr.rel (%p869) target = $region72
        $region71: #{mpnn_forward.1} parent=51 // pred_region
          %v873 = vld [vmem:[#allocation2] sm:$0xf]
          %v874 = vld [vmem:[#allocation2 + $0x4] sm:$0xf]
          %v875 = vld [vmem:[#allocation2 + $0x8] sm:$0xf]
          %v876 = vld [vmem:[#allocation2 + $0xc] sm:$0xf]
          %v877 = vld [vmem:[#allocation2 + $0x10] sm:$0xf]
          %v878 = vld [vmem:[#allocation2 + $0x14] sm:$0xf]
          %v879 = vld [vmem:[#allocation2 + $0x18] sm:$0xf]
          %v880 = vld [vmem:[#allocation2 + $0x1c] sm:$0xf]
          %v881 = vld [vmem:[#allocation2 + $0x20] sm:$0xf]
          %v882 = vld [vmem:[#allocation2 + $0x24] sm:$0xf]
          %v883 = vld [vmem:[#allocation2 + $0x28] sm:$0xf]
          %v884 = vld [vmem:[#allocation2 + $0x2c] sm:$0xf]
          %v885 = vld [vmem:[#allocation2 + $0x30] sm:$0xf]
          %v886 = vld [vmem:[#allocation2 + $0x34] sm:$0xf]
          %v887 = vld [vmem:[#allocation2 + $0x38] sm:$0xf]
          %v888 = vld [vmem:[#allocation2 + $0x3c] sm:$0xf]
          %s889 = sshra.s32 %s518, 3
          %s890 = sand.u32 %s518, 7
          %s891 = smul.addr %s889, 4
          %s892 = scalar_lea.vmem [#allocation2], %s891
          %v893 = vld [vmem:[%s892] sm:$0xf]
          %v894 = vld [vmem:[%s892 + $0x4] sm:$0xf]
          %v895 = vld [vmem:[%s892 + $0x8] sm:$0xf]
          %v896 = vld [vmem:[%s892 + $0xc] sm:$0xf]
          %v897 = vld [vmem:[%s892 + $0x10] sm:$0xf]
          %v898 = vld [vmem:[%s892 + $0x14] sm:$0xf]
          %v899 = vld [vmem:[%s892 + $0x18] sm:$0xf]
          %v900 = vld [vmem:[%s892 + $0x1c] sm:$0xf]
          %v901 = vld [vmem:[%s892 + $0x20] sm:$0xf]
          %v902 = vld [vmem:[%s892 + $0x24] sm:$0xf]
          %v903 = vld [vmem:[%s892 + $0x28] sm:$0xf]
          %v904 = vld [vmem:[%s892 + $0x2c] sm:$0xf]
          %v905 = vld [vmem:[%s892 + $0x30] sm:$0xf]
          %v906 = vld [vmem:[%s892 + $0x34] sm:$0xf]
          %v907 = vld [vmem:[%s892 + $0x38] sm:$0xf]
          %v908 = vld [vmem:[%s892 + $0x3c] sm:$0xf]
          %v909 = vld [vmem:[%s408] sm:$0xf]
          %v910 = vld [vmem:[%s408 + $0x4] sm:$0xf]
          %v911 = vld [vmem:[%s408 + $0x8] sm:$0xf]
          %v912 = vld [vmem:[%s408 + $0xc] sm:$0xf]
          %v913 = vld [vmem:[%s408 + $0x10] sm:$0xf]
          %v914 = vld [vmem:[%s408 + $0x14] sm:$0xf]
          %v915 = vld [vmem:[%s408 + $0x18] sm:$0xf]
          %v916 = vld [vmem:[%s408 + $0x1c] sm:$0xf]
          %v917 = vld [vmem:[%s408 + $0x20] sm:$0xf]
          %v918 = vld [vmem:[%s408 + $0x24] sm:$0xf]
          %v919 = vld [vmem:[%s408 + $0x28] sm:$0xf]
          %v920 = vld [vmem:[%s408 + $0x2c] sm:$0xf]
          %v921 = vld [vmem:[%s408 + $0x30] sm:$0xf]
          %v922 = vld [vmem:[%s408 + $0x34] sm:$0xf]
          %v923 = vld [vmem:[%s408 + $0x38] sm:$0xf]
          %v924 = vld [vmem:[%s408 + $0x3c] sm:$0xf]
          %v941 = vunpack.c.l.b16 %v909
          %v942 = vunpack.c.l.b16 %v910
          %v943 = vunpack.c.l.b16 %v911
          %v944 = vunpack.c.l.b16 %v912
          %v945 = vunpack.c.l.b16 %v913
          %v946 = vunpack.c.l.b16 %v914
          %v947 = vunpack.c.l.b16 %v915
          %v948 = vunpack.c.l.b16 %v916
          %v949 = vunpack.c.l.b16 %v917
          %v950 = vunpack.c.l.b16 %v918
          %v951 = vunpack.c.l.b16 %v919
          %v952 = vunpack.c.l.b16 %v920
          %v953 = vunpack.c.l.b16 %v921
          %v954 = vunpack.c.l.b16 %v922
          %v955 = vunpack.c.l.b16 %v923
          %v956 = vunpack.c.l.b16 %v924
          %v957 = vpack.c.b16 %v942, %v941
          %v958 = vpack.c.b16 %v944, %v943
          %v959 = vpack.c.b16 %v946, %v945
          %v960 = vpack.c.b16 %v948, %v947
          %v961 = vpack.c.b16 %v950, %v949
          %v962 = vpack.c.b16 %v952, %v951
          %v963 = vpack.c.b16 %v954, %v953
          %v964 = vpack.c.b16 %v956, %v955
          %v989 = vunpack.c.l.b16 %v873
          %v990 = vunpack.c.l.b16 %v874
          %v991 = vunpack.c.l.b16 %v875
          %v992 = vunpack.c.l.b16 %v876
          %v993 = vunpack.c.l.b16 %v877
          %v994 = vunpack.c.l.b16 %v878
          %v995 = vunpack.c.l.b16 %v879
          %v996 = vunpack.c.l.b16 %v880
          %v997 = vunpack.c.l.b16 %v881
          %v998 = vunpack.c.l.b16 %v882
          %v999 = vunpack.c.l.b16 %v883
          %v1000 = vunpack.c.l.b16 %v884
          %v1001 = vunpack.c.l.b16 %v885
          %v1002 = vunpack.c.l.b16 %v886
          %v1003 = vunpack.c.l.b16 %v887
          %v1004 = vunpack.c.l.b16 %v888
          %v1005 = vpack.c.b16 %v990, %v989
          %v1006 = vpack.c.b16 %v992, %v991
          %v1007 = vpack.c.b16 %v994, %v993
          %v1008 = vpack.c.b16 %v996, %v995
          %v1009 = vpack.c.b16 %v998, %v997
          %v1010 = vpack.c.b16 %v1000, %v999
          %v1011 = vpack.c.b16 %v1002, %v1001
          %v1012 = vpack.c.b16 %v1004, %v1003
          %1021 = vmatprep.subr.bf16.mxu0 0
          %1022 = vmatpush1.bf16.msra.mxu0 %v1012
          %1023 = vmatprep.subr.bf16.mxu0 0
          %1024 = vmatpush1.bf16.msra.mxu0 %v1011
          %1025 = vmatprep.subr.bf16.mxu0 0
          %1026 = vmatpush1.bf16.msra.mxu0 %v1010
          %1027 = vmatprep.subr.bf16.mxu0 0
          %1028 = vmatpush1.bf16.msra.mxu0 %v1009
          %1029 = vmatprep.subr.bf16.mxu0 0
          %1030 = vmatpush1.bf16.msra.mxu0 %v1008
          %1031 = vmatprep.subr.bf16.mxu0 0
          %1032 = vmatpush1.bf16.msra.mxu0 %v1007
          %1033 = vmatprep.subr.bf16.mxu0 0
          %1034 = vmatpush1.bf16.msra.mxu0 %v1006
          %1035 = vmatprep.subr.bf16.mxu0 0
          %1036 = vmatpush1.bf16.msra.mxu0 %v1005
          %1037 = vmatprep.subr.bf16.mxu0 0
          %1038 = vmatpush2.bf16.msra.mxu0 0
          %1039 = vmatprep.subr.bf16.mxu0 0
          %1040 = vmatpush2.bf16.msra.mxu0 0
          %1041 = vmatprep.subr.bf16.mxu0 0
          %1042 = vmatpush2.bf16.msra.mxu0 0
          %1043 = vmatprep.subr.bf16.mxu0 0
          %1044 = vmatpush2.bf16.msra.mxu0 0
          %1045 = vmatprep.subr.bf16.mxu0 0
          %1046 = vmatpush2.bf16.msra.mxu0 0
          %1047 = vmatprep.subr.bf16.mxu0 0
          %1048 = vmatpush2.bf16.msra.mxu0 0
          %1049 = vmatprep.subr.bf16.mxu0 0
          %1050 = vmatpush2.bf16.msra.mxu0 0
          %1051 = vmatprep.subr.bf16.mxu0 0
          %1052 = vmatpush2.bf16.msra.mxu0 0
          %1053 = vmatprep.mubr.bf16.mxu0 0
          %1054 = vmatmul.mubr.bf16.gmra.mxu0 %v957
          %v1055 = vpop.f32.mrf.mxu0
          %v1056 = vadd.f32 0.0, %v1055
          %v1057 = vpop.f32.mrf.mxu0
          %v1058 = vpop.f32.mrf.mxu0
          %v1059 = vadd.f32 0.0, %v1058
          %v1060 = vpop.f32.mrf.mxu0
          %1061 = vmatprep.mubr.bf16.mxu0 0
          %1062 = vmatmul.mubr.bf16.gmra.mxu0 %v958
          %v1063 = vpop.f32.mrf.mxu0
          %v1064 = vadd.f32 0.0, %v1063
          %v1065 = vpop.f32.mrf.mxu0
          %v1066 = vpop.f32.mrf.mxu0
          %v1067 = vadd.f32 0.0, %v1066
          %v1068 = vpop.f32.mrf.mxu0
          %1069 = vmatprep.mubr.bf16.mxu0 0
          %1070 = vmatmul.mubr.bf16.gmra.mxu0 %v959
          %v1071 = vpop.f32.mrf.mxu0
          %v1072 = vadd.f32 0.0, %v1071
          %v1073 = vpop.f32.mrf.mxu0
          %v1074 = vpop.f32.mrf.mxu0
          %v1075 = vadd.f32 0.0, %v1074
          %v1076 = vpop.f32.mrf.mxu0
          %1077 = vmatprep.mubr.bf16.mxu0 0
          %1078 = vmatmul.mubr.bf16.gmra.mxu0 %v960
          %v1079 = vpop.f32.mrf.mxu0
          %v1080 = vadd.f32 0.0, %v1079
          %v1081 = vpop.f32.mrf.mxu0
          %v1082 = vpop.f32.mrf.mxu0
          %v1083 = vadd.f32 0.0, %v1082
          %v1084 = vpop.f32.mrf.mxu0
          %1085 = vmatprep.mubr.bf16.mxu0 0
          %1086 = vmatmul.mubr.bf16.gmra.mxu0 %v961
          %v1087 = vpop.f32.mrf.mxu0
          %v1088 = vadd.f32 0.0, %v1087
          %v1089 = vpop.f32.mrf.mxu0
          %v1090 = vpop.f32.mrf.mxu0
          %v1091 = vadd.f32 0.0, %v1090
          %v1092 = vpop.f32.mrf.mxu0
          %1093 = vmatprep.mubr.bf16.mxu0 0
          %1094 = vmatmul.mubr.bf16.gmra.mxu0 %v962
          %v1095 = vpop.f32.mrf.mxu0
          %v1096 = vadd.f32 0.0, %v1095
          %v1097 = vpop.f32.mrf.mxu0
          %v1098 = vpop.f32.mrf.mxu0
          %v1099 = vadd.f32 0.0, %v1098
          %v1100 = vpop.f32.mrf.mxu0
          %1101 = vmatprep.mubr.bf16.mxu0 0
          %1102 = vmatmul.mubr.bf16.gmra.mxu0 %v963
          %v1103 = vpop.f32.mrf.mxu0
          %v1104 = vadd.f32 0.0, %v1103
          %v1105 = vpop.f32.mrf.mxu0
          %v1106 = vpop.f32.mrf.mxu0
          %v1107 = vadd.f32 0.0, %v1106
          %v1108 = vpop.f32.mrf.mxu0
          %1109 = vmatprep.mubr.bf16.mxu0 0
          %1110 = vmatmul.mubr.bf16.gmra.mxu0 %v964
          %v1111 = vpop.f32.mrf.mxu0
          %v1112 = vadd.f32 0.0, %v1111
          %v1113 = vpop.f32.mrf.mxu0
          %v1114 = vpop.f32.mrf.mxu0
          %v1115 = vadd.f32 0.0, %v1114
          %v1116 = vpop.f32.mrf.mxu0
          %1117 = vdwg.mxu0
          %1118 = vst [vmem:[#allocation3] sm:$0xf] %v893
          %1119 = vst [vmem:[#allocation3 + $0x8] sm:$0xf] %v894
          %1120 = vst [vmem:[#allocation3 + $0x10] sm:$0xf] %v895
          %1121 = vst [vmem:[#allocation3 + $0x18] sm:$0xf] %v896
          %1122 = vst [vmem:[#allocation3 + $0x20] sm:$0xf] %v897
          %1123 = vst [vmem:[#allocation3 + $0x28] sm:$0xf] %v898
          %1124 = vst [vmem:[#allocation3 + $0x30] sm:$0xf] %v899
          %1125 = vst [vmem:[#allocation3 + $0x38] sm:$0xf] %v900
          %1126 = vst [vmem:[#allocation3 + $0x40] sm:$0xf] %v901
          %1127 = vst [vmem:[#allocation3 + $0x48] sm:$0xf] %v902
          %1128 = vst [vmem:[#allocation3 + $0x50] sm:$0xf] %v903
          %1129 = vst [vmem:[#allocation3 + $0x58] sm:$0xf] %v904
          %1130 = vst [vmem:[#allocation3 + $0x60] sm:$0xf] %v905
          %1131 = vst [vmem:[#allocation3 + $0x68] sm:$0xf] %v906
          %1132 = vst [vmem:[#allocation3 + $0x70] sm:$0xf] %v907
          %1133 = vst [vmem:[#allocation3 + $0x78] sm:$0xf] %v908
          %v1134 = vpack.c.bf16 %v1059, %v1056
          %v1135 = vpack.c.bf16 %v1067, %v1064
          %v1136 = vpack.c.bf16 %v1075, %v1072
          %v1137 = vpack.c.bf16 %v1083, %v1080
          %v1138 = vpack.c.bf16 %v1091, %v1088
          %v1139 = vpack.c.bf16 %v1099, %v1096
          %v1140 = vpack.c.bf16 %v1107, %v1104
          %v1141 = vpack.c.bf16 %v1115, %v1112
          %v1150 = vunpack.c.l.b16 %v1134
          %v1151 = vunpack.c.h.b16 %v1134
          %v1152 = vunpack.c.l.b16 %v1135
          %v1153 = vunpack.c.h.b16 %v1135
          %v1154 = vunpack.c.l.b16 %v1136
          %v1155 = vunpack.c.h.b16 %v1136
          %v1156 = vunpack.c.l.b16 %v1137
          %v1157 = vunpack.c.h.b16 %v1137
          %v1158 = vunpack.c.l.b16 %v1138
          %v1159 = vunpack.c.h.b16 %v1138
          %v1160 = vunpack.c.l.b16 %v1139
          %v1161 = vunpack.c.h.b16 %v1139
          %v1162 = vunpack.c.l.b16 %v1140
          %v1163 = vunpack.c.h.b16 %v1140
          %v1164 = vunpack.c.l.b16 %v1141
          %v1165 = vunpack.c.h.b16 %v1141
          %v1166 = vpack.c.b16 %v1150, %v1150
          %v1167 = vpack.c.b16 %v1151, %v1151
          %v1168 = vpack.c.b16 %v1152, %v1152
          %v1169 = vpack.c.b16 %v1153, %v1153
          %v1170 = vpack.c.b16 %v1154, %v1154
          %v1171 = vpack.c.b16 %v1155, %v1155
          %v1172 = vpack.c.b16 %v1156, %v1156
          %v1173 = vpack.c.b16 %v1157, %v1157
          %v1174 = vpack.c.b16 %v1158, %v1158
          %v1175 = vpack.c.b16 %v1159, %v1159
          %v1176 = vpack.c.b16 %v1160, %v1160
          %v1177 = vpack.c.b16 %v1161, %v1161
          %v1178 = vpack.c.b16 %v1162, %v1162
          %v1179 = vpack.c.b16 %v1163, %v1163
          %v1180 = vpack.c.b16 %v1164, %v1164
          %v1181 = vpack.c.b16 %v1165, %v1165
          %1198 = vst [vmem:[#allocation3 + $0x4] sm:$0xf] %v1166
          %1199 = vst [vmem:[#allocation3 + $0xc] sm:$0xf] %v1167
          %1200 = vst [vmem:[#allocation3 + $0x14] sm:$0xf] %v1168
          %1201 = vst [vmem:[#allocation3 + $0x1c] sm:$0xf] %v1169
          %1202 = vst [vmem:[#allocation3 + $0x24] sm:$0xf] %v1170
          %1203 = vst [vmem:[#allocation3 + $0x2c] sm:$0xf] %v1171
          %1204 = vst [vmem:[#allocation3 + $0x34] sm:$0xf] %v1172
          %1205 = vst [vmem:[#allocation3 + $0x3c] sm:$0xf] %v1173
          %1206 = vst [vmem:[#allocation3 + $0x44] sm:$0xf] %v1174
          %1207 = vst [vmem:[#allocation3 + $0x4c] sm:$0xf] %v1175
          %1208 = vst [vmem:[#allocation3 + $0x54] sm:$0xf] %v1176
          %1209 = vst [vmem:[#allocation3 + $0x5c] sm:$0xf] %v1177
          %1210 = vst [vmem:[#allocation3 + $0x64] sm:$0xf] %v1178
          %1211 = vst [vmem:[#allocation3 + $0x6c] sm:$0xf] %v1179
          %1212 = vst [vmem:[#allocation3 + $0x74] sm:$0xf] %v1180
          %1213 = vst [vmem:[#allocation3 + $0x7c] sm:$0xf] %v1181
          %v1214 = vld [vmem:[#allocation3] sm:$0xff]
          %v1215 = vld [vmem:[#allocation3 + $0x8] sm:$0xff]
          %v1216 = vld [vmem:[#allocation3 + $0x10] sm:$0xff]
          %v1217 = vld [vmem:[#allocation3 + $0x18] sm:$0xff]
          %v1218 = vld [vmem:[#allocation3 + $0x20] sm:$0xff]
          %v1219 = vld [vmem:[#allocation3 + $0x28] sm:$0xff]
          %v1220 = vld [vmem:[#allocation3 + $0x30] sm:$0xff]
          %v1221 = vld [vmem:[#allocation3 + $0x38] sm:$0xff]
          %v1222 = vld [vmem:[#allocation3 + $0x40] sm:$0xff]
          %v1223 = vld [vmem:[#allocation3 + $0x48] sm:$0xff]
          %v1224 = vld [vmem:[#allocation3 + $0x50] sm:$0xff]
          %v1225 = vld [vmem:[#allocation3 + $0x58] sm:$0xff]
          %v1226 = vld [vmem:[#allocation3 + $0x60] sm:$0xff]
          %v1227 = vld [vmem:[#allocation3 + $0x68] sm:$0xff]
          %v1228 = vld [vmem:[#allocation3 + $0x70] sm:$0xff]
          %v1229 = vld [vmem:[#allocation3 + $0x78] sm:$0xff]
          %p1230 = scmp.lt.s32.totalorder %s29, 3
          // Predicated region
          $region73: #{mpnn_forward.1} parent=71 // pred_check
            %p1231 = pneg %p1230
          $region74: #{mpnn_forward.1} parent=71 // pred_check_branch
            %1233 = sbr.rel (%p1231) target = $region76
          $region75: #{mpnn_forward.1} parent=71 // pred_region
            %v1234 = vld [vmem:[%s417] sm:$0xf]
            %v1235 = vld [vmem:[%s417 + $0x4] sm:$0xf]
            %v1236 = vld [vmem:[%s417 + $0x8] sm:$0xf]
            %v1237 = vld [vmem:[%s417 + $0xc] sm:$0xf]
            %v1238 = vld [vmem:[%s417 + $0x10] sm:$0xf]
            %v1239 = vld [vmem:[%s417 + $0x14] sm:$0xf]
            %v1240 = vld [vmem:[%s417 + $0x18] sm:$0xf]
            %v1241 = vld [vmem:[%s417 + $0x1c] sm:$0xf]
            %v1242 = vld [vmem:[%s417 + $0x20] sm:$0xf]
            %v1243 = vld [vmem:[%s417 + $0x24] sm:$0xf]
            %v1244 = vld [vmem:[%s417 + $0x28] sm:$0xf]
            %v1245 = vld [vmem:[%s417 + $0x2c] sm:$0xf]
            %v1246 = vld [vmem:[%s417 + $0x30] sm:$0xf]
            %v1247 = vld [vmem:[%s417 + $0x34] sm:$0xf]
            %v1248 = vld [vmem:[%s417 + $0x38] sm:$0xf]
            %v1249 = vld [vmem:[%s417 + $0x3c] sm:$0xf]
            %v1250 = vld [vmem:[%s417 + $0x40] sm:$0xf]
            %v1251 = vld [vmem:[%s417 + $0x44] sm:$0xf]
            %v1252 = vld [vmem:[%s417 + $0x48] sm:$0xf]
            %v1253 = vld [vmem:[%s417 + $0x4c] sm:$0xf]
            %v1254 = vld [vmem:[%s417 + $0x50] sm:$0xf]
            %v1255 = vld [vmem:[%s417 + $0x54] sm:$0xf]
            %v1256 = vld [vmem:[%s417 + $0x58] sm:$0xf]
            %v1257 = vld [vmem:[%s417 + $0x5c] sm:$0xf]
            %v1258 = vld [vmem:[%s417 + $0x60] sm:$0xf]
            %v1259 = vld [vmem:[%s417 + $0x64] sm:$0xf]
            %v1260 = vld [vmem:[%s417 + $0x68] sm:$0xf]
            %v1261 = vld [vmem:[%s417 + $0x6c] sm:$0xf]
            %v1262 = vld [vmem:[%s417 + $0x70] sm:$0xf]
            %v1263 = vld [vmem:[%s417 + $0x74] sm:$0xf]
            %v1264 = vld [vmem:[%s417 + $0x78] sm:$0xf]
            %v1265 = vld [vmem:[%s417 + $0x7c] sm:$0xf]
            %v1266 = vld [vmem:[%s501] sm:$0x1]
            %v1268 = vlaneseq
            %v1269 = vshrl.u32 %v1268, 7
            %v1270 = vsub.s32 0, %v1269
            %v1271 = vrot.slane %v1266, %v1270
            %v1289 = vunpack.c.l.b16 %v1214
            %v1290 = vunpack.c.h.b16 %v1214
            %v1291 = vunpack.c.l.b16 %v1215
            %v1292 = vunpack.c.h.b16 %v1215
            %v1293 = vunpack.c.l.b16 %v1216
            %v1294 = vunpack.c.h.b16 %v1216
            %v1295 = vunpack.c.l.b16 %v1217
            %v1296 = vunpack.c.h.b16 %v1217
            %v1297 = vunpack.c.l.b16 %v1218
            %v1298 = vunpack.c.h.b16 %v1218
            %v1299 = vunpack.c.l.b16 %v1219
            %v1300 = vunpack.c.h.b16 %v1219
            %v1301 = vunpack.c.l.b16 %v1220
            %v1302 = vunpack.c.h.b16 %v1220
            %v1303 = vunpack.c.l.b16 %v1221
            %v1304 = vunpack.c.h.b16 %v1221
            %v1305 = vunpack.c.l.b16 %v1222
            %v1306 = vunpack.c.h.b16 %v1222
            %v1307 = vunpack.c.l.b16 %v1223
            %v1308 = vunpack.c.h.b16 %v1223
            %v1309 = vunpack.c.l.b16 %v1224
            %v1310 = vunpack.c.h.b16 %v1224
            %v1311 = vunpack.c.l.b16 %v1225
            %v1312 = vunpack.c.h.b16 %v1225
            %v1313 = vunpack.c.l.b16 %v1226
            %v1314 = vunpack.c.h.b16 %v1226
            %v1315 = vunpack.c.l.b16 %v1227
            %v1316 = vunpack.c.h.b16 %v1227
            %v1317 = vunpack.c.l.b16 %v1228
            %v1318 = vunpack.c.h.b16 %v1228
            %v1319 = vunpack.c.l.b16 %v1229
            %v1320 = vunpack.c.h.b16 %v1229
            %v1321 = vpack.c.b16 %v1291, %v1289
            %v1322 = vpack.c.b16 %v1292, %v1290
            %v1323 = vpack.c.b16 %v1295, %v1293
            %v1324 = vpack.c.b16 %v1296, %v1294
            %v1325 = vpack.c.b16 %v1299, %v1297
            %v1326 = vpack.c.b16 %v1300, %v1298
            %v1327 = vpack.c.b16 %v1303, %v1301
            %v1328 = vpack.c.b16 %v1304, %v1302
            %v1329 = vpack.c.b16 %v1307, %v1305
            %v1330 = vpack.c.b16 %v1308, %v1306
            %v1331 = vpack.c.b16 %v1311, %v1309
            %v1332 = vpack.c.b16 %v1312, %v1310
            %v1333 = vpack.c.b16 %v1315, %v1313
            %v1334 = vpack.c.b16 %v1316, %v1314
            %v1335 = vpack.c.b16 %v1319, %v1317
            %v1336 = vpack.c.b16 %v1320, %v1318
            %v1385 = vunpack.c.l.b16 %v1234
            %v1386 = vunpack.c.l.b16 %v1235
            %v1387 = vunpack.c.l.b16 %v1236
            %v1388 = vunpack.c.l.b16 %v1237
            %v1389 = vunpack.c.l.b16 %v1238
            %v1390 = vunpack.c.l.b16 %v1239
            %v1391 = vunpack.c.l.b16 %v1240
            %v1392 = vunpack.c.l.b16 %v1241
            %v1393 = vunpack.c.l.b16 %v1242
            %v1394 = vunpack.c.l.b16 %v1243
            %v1395 = vunpack.c.l.b16 %v1244
            %v1396 = vunpack.c.l.b16 %v1245
            %v1397 = vunpack.c.l.b16 %v1246
            %v1398 = vunpack.c.l.b16 %v1247
            %v1399 = vunpack.c.l.b16 %v1248
            %v1400 = vunpack.c.l.b16 %v1249
            %v1401 = vunpack.c.l.b16 %v1250
            %v1402 = vunpack.c.l.b16 %v1251
            %v1403 = vunpack.c.l.b16 %v1252
            %v1404 = vunpack.c.l.b16 %v1253
            %v1405 = vunpack.c.l.b16 %v1254
            %v1406 = vunpack.c.l.b16 %v1255
            %v1407 = vunpack.c.l.b16 %v1256
            %v1408 = vunpack.c.l.b16 %v1257
            %v1409 = vunpack.c.l.b16 %v1258
            %v1410 = vunpack.c.l.b16 %v1259
            %v1411 = vunpack.c.l.b16 %v1260
            %v1412 = vunpack.c.l.b16 %v1261
            %v1413 = vunpack.c.l.b16 %v1262
            %v1414 = vunpack.c.l.b16 %v1263
            %v1415 = vunpack.c.l.b16 %v1264
            %v1416 = vunpack.c.l.b16 %v1265
            %v1417 = vpack.c.b16 %v1386, %v1385
            %v1418 = vpack.c.b16 %v1388, %v1387
            %v1419 = vpack.c.b16 %v1390, %v1389
            %v1420 = vpack.c.b16 %v1392, %v1391
            %v1421 = vpack.c.b16 %v1394, %v1393
            %v1422 = vpack.c.b16 %v1396, %v1395
            %v1423 = vpack.c.b16 %v1398, %v1397
            %v1424 = vpack.c.b16 %v1400, %v1399
            %v1425 = vpack.c.b16 %v1402, %v1401
            %v1426 = vpack.c.b16 %v1404, %v1403
            %v1427 = vpack.c.b16 %v1406, %v1405
            %v1428 = vpack.c.b16 %v1408, %v1407
            %v1429 = vpack.c.b16 %v1410, %v1409
            %v1430 = vpack.c.b16 %v1412, %v1411
            %v1431 = vpack.c.b16 %v1414, %v1413
            %v1432 = vpack.c.b16 %v1416, %v1415
            %1449 = vmatprep.subr.bf16.mxu0 0
            %1450 = vmatpush1.bf16.msra.mxu0 %v1424
            %1451 = vmatprep.subr.bf16.mxu0 0
            %1452 = vmatpush1.bf16.msra.mxu0 %v1423
            %1453 = vmatprep.subr.bf16.mxu0 0
            %1454 = vmatpush1.bf16.msra.mxu0 %v1422
            %1455 = vmatprep.subr.bf16.mxu0 0
            %1456 = vmatpush1.bf16.msra.mxu0 %v1421
            %1457 = vmatprep.subr.bf16.mxu0 0
            %1458 = vmatpush1.bf16.msra.mxu0 %v1420
            %1459 = vmatprep.subr.bf16.mxu0 0
            %1460 = vmatpush1.bf16.msra.mxu0 %v1419
            %1461 = vmatprep.subr.bf16.mxu0 0
            %1462 = vmatpush1.bf16.msra.mxu0 %v1418
            %1463 = vmatprep.subr.bf16.mxu0 0
            %1464 = vmatpush1.bf16.msra.mxu0 %v1417
            %1465 = vmatprep.subr.bf16.mxu0 0
            %1466 = vmatpush2.bf16.msra.mxu0 %v1432
            %1467 = vmatprep.subr.bf16.mxu0 0
            %1468 = vmatpush2.bf16.msra.mxu0 %v1431
            %1469 = vmatprep.subr.bf16.mxu0 0
            %1470 = vmatpush2.bf16.msra.mxu0 %v1430
            %1471 = vmatprep.subr.bf16.mxu0 0
            %1472 = vmatpush2.bf16.msra.mxu0 %v1429
            %1473 = vmatprep.subr.bf16.mxu0 0
            %1474 = vmatpush2.bf16.msra.mxu0 %v1428
            %1475 = vmatprep.subr.bf16.mxu0 0
            %1476 = vmatpush2.bf16.msra.mxu0 %v1427
            %1477 = vmatprep.subr.bf16.mxu0 0
            %1478 = vmatpush2.bf16.msra.mxu0 %v1426
            %1479 = vmatprep.subr.bf16.mxu0 0
            %1480 = vmatpush2.bf16.msra.mxu0 %v1425
            %1481 = vmatprep.mubr.bf16.mxu0 %v1322
            %1482 = vmatmul.mubr.bf16.gmra.mxu0 %v1321
            %v1483 = vpop.f32.mrf.mxu0
            %v1484 = vadd.f32 %v1271, %v1483
            %v1485 = vpop.f32.mrf.mxu0
            %v1486 = vpop.f32.mrf.mxu0
            %v1487 = vadd.f32 %v1271, %v1486
            %v1488 = vpop.f32.mrf.mxu0
            %1489 = vmatprep.mubr.bf16.mxu0 %v1324
            %1490 = vmatmul.mubr.bf16.gmra.mxu0 %v1323
            %v1491 = vpop.f32.mrf.mxu0
            %v1492 = vadd.f32 %v1271, %v1491
            %v1493 = vpop.f32.mrf.mxu0
            %v1494 = vpop.f32.mrf.mxu0
            %v1495 = vadd.f32 %v1271, %v1494
            %v1496 = vpop.f32.mrf.mxu0
            %1497 = vmatprep.mubr.bf16.mxu0 %v1326
            %1498 = vmatmul.mubr.bf16.gmra.mxu0 %v1325
            %v1499 = vpop.f32.mrf.mxu0
            %v1500 = vadd.f32 %v1271, %v1499
            %v1501 = vpop.f32.mrf.mxu0
            %v1502 = vpop.f32.mrf.mxu0
            %v1503 = vadd.f32 %v1271, %v1502
            %v1504 = vpop.f32.mrf.mxu0
            %1505 = vmatprep.mubr.bf16.mxu0 %v1328
            %1506 = vmatmul.mubr.bf16.gmra.mxu0 %v1327
            %v1507 = vpop.f32.mrf.mxu0
            %v1508 = vadd.f32 %v1271, %v1507
            %v1509 = vpop.f32.mrf.mxu0
            %v1510 = vpop.f32.mrf.mxu0
            %v1511 = vadd.f32 %v1271, %v1510
            %v1512 = vpop.f32.mrf.mxu0
            %1513 = vmatprep.mubr.bf16.mxu0 %v1330
            %1514 = vmatmul.mubr.bf16.gmra.mxu0 %v1329
            %v1515 = vpop.f32.mrf.mxu0
            %v1516 = vadd.f32 %v1271, %v1515
            %v1517 = vpop.f32.mrf.mxu0
            %v1518 = vpop.f32.mrf.mxu0
            %v1519 = vadd.f32 %v1271, %v1518
            %v1520 = vpop.f32.mrf.mxu0
            %1521 = vmatprep.mubr.bf16.mxu0 %v1332
            %1522 = vmatmul.mubr.bf16.gmra.mxu0 %v1331
            %v1523 = vpop.f32.mrf.mxu0
            %v1524 = vadd.f32 %v1271, %v1523
            %v1525 = vpop.f32.mrf.mxu0
            %v1526 = vpop.f32.mrf.mxu0
            %v1527 = vadd.f32 %v1271, %v1526
            %v1528 = vpop.f32.mrf.mxu0
            %1529 = vmatprep.mubr.bf16.mxu0 %v1334
            %1530 = vmatmul.mubr.bf16.gmra.mxu0 %v1333
            %v1531 = vpop.f32.mrf.mxu0
            %v1532 = vadd.f32 %v1271, %v1531
            %v1533 = vpop.f32.mrf.mxu0
            %v1534 = vpop.f32.mrf.mxu0
            %v1535 = vadd.f32 %v1271, %v1534
            %v1536 = vpop.f32.mrf.mxu0
            %1537 = vmatprep.mubr.bf16.mxu0 %v1336
            %1538 = vmatmul.mubr.bf16.gmra.mxu0 %v1335
            %v1539 = vpop.f32.mrf.mxu0
            %v1540 = vadd.f32 %v1271, %v1539
            %v1541 = vpop.f32.mrf.mxu0
            %v1542 = vpop.f32.mrf.mxu0
            %v1543 = vadd.f32 %v1271, %v1542
            %v1544 = vpop.f32.mrf.mxu0
            %1545 = vdwg.mxu0
            %v1546 = vmax.f32 %v1484, 0.0
            %v1547 = vmax.f32 %v1487, 0.0
            %v1548 = vmax.f32 %v1492, 0.0
            %v1549 = vmax.f32 %v1495, 0.0
            %v1550 = vmax.f32 %v1500, 0.0
            %v1551 = vmax.f32 %v1503, 0.0
            %v1552 = vmax.f32 %v1508, 0.0
            %v1553 = vmax.f32 %v1511, 0.0
            %v1554 = vmax.f32 %v1516, 0.0
            %v1555 = vmax.f32 %v1519, 0.0
            %v1556 = vmax.f32 %v1524, 0.0
            %v1557 = vmax.f32 %v1527, 0.0
            %v1558 = vmax.f32 %v1532, 0.0
            %v1559 = vmax.f32 %v1535, 0.0
            %v1560 = vmax.f32 %v1540, 0.0
            %v1561 = vmax.f32 %v1543, 0.0
            %v1562 = vpack.c.bf16 %v1547, %v1546
            %v1563 = vpack.c.bf16 %v1549, %v1548
            %v1564 = vpack.c.bf16 %v1551, %v1550
            %v1565 = vpack.c.bf16 %v1553, %v1552
            %v1566 = vpack.c.bf16 %v1555, %v1554
            %v1567 = vpack.c.bf16 %v1557, %v1556
            %v1568 = vpack.c.bf16 %v1559, %v1558
            %v1569 = vpack.c.bf16 %v1561, %v1560
            %v1578 = vunpack.c.l.b16 %v1562
            %v1579 = vunpack.c.h.b16 %v1562
            %v1580 = vunpack.c.l.b16 %v1563
            %v1581 = vunpack.c.h.b16 %v1563
            %v1582 = vunpack.c.l.b16 %v1564
            %v1583 = vunpack.c.h.b16 %v1564
            %v1584 = vunpack.c.l.b16 %v1565
            %v1585 = vunpack.c.h.b16 %v1565
            %v1586 = vunpack.c.l.b16 %v1566
            %v1587 = vunpack.c.h.b16 %v1566
            %v1588 = vunpack.c.l.b16 %v1567
            %v1589 = vunpack.c.h.b16 %v1567
            %v1590 = vunpack.c.l.b16 %v1568
            %v1591 = vunpack.c.h.b16 %v1568
            %v1592 = vunpack.c.l.b16 %v1569
            %v1593 = vunpack.c.h.b16 %v1569
            %v1594 = vpack.c.b16 %v1578, %v1578
            %v1595 = vpack.c.b16 %v1579, %v1579
            %v1596 = vpack.c.b16 %v1580, %v1580
            %v1597 = vpack.c.b16 %v1581, %v1581
            %v1598 = vpack.c.b16 %v1582, %v1582
            %v1599 = vpack.c.b16 %v1583, %v1583
            %v1600 = vpack.c.b16 %v1584, %v1584
            %v1601 = vpack.c.b16 %v1585, %v1585
            %v1602 = vpack.c.b16 %v1586, %v1586
            %v1603 = vpack.c.b16 %v1587, %v1587
            %v1604 = vpack.c.b16 %v1588, %v1588
            %v1605 = vpack.c.b16 %v1589, %v1589
            %v1606 = vpack.c.b16 %v1590, %v1590
            %v1607 = vpack.c.b16 %v1591, %v1591
            %v1608 = vpack.c.b16 %v1592, %v1592
            %v1609 = vpack.c.b16 %v1593, %v1593
            %s1626 = sadd.s32 %s889, 16
            %s1627 = smul.addr %s1626, 4
            %s1628 = scalar_lea.vmem [#allocation2], %s1627
            %1629 = vst [vmem:[%s1628] sm:$0xf] %v1594
            %1630 = vst [vmem:[%s1628 + $0x4] sm:$0xf] %v1595
            %1631 = vst [vmem:[%s1628 + $0x8] sm:$0xf] %v1596
            %1632 = vst [vmem:[%s1628 + $0xc] sm:$0xf] %v1597
            %1633 = vst [vmem:[%s1628 + $0x10] sm:$0xf] %v1598
            %1634 = vst [vmem:[%s1628 + $0x14] sm:$0xf] %v1599
            %1635 = vst [vmem:[%s1628 + $0x18] sm:$0xf] %v1600
            %1636 = vst [vmem:[%s1628 + $0x1c] sm:$0xf] %v1601
            %1637 = vst [vmem:[%s1628 + $0x20] sm:$0xf] %v1602
            %1638 = vst [vmem:[%s1628 + $0x24] sm:$0xf] %v1603
            %1639 = vst [vmem:[%s1628 + $0x28] sm:$0xf] %v1604
            %1640 = vst [vmem:[%s1628 + $0x2c] sm:$0xf] %v1605
            %1641 = vst [vmem:[%s1628 + $0x30] sm:$0xf] %v1606
            %1642 = vst [vmem:[%s1628 + $0x34] sm:$0xf] %v1607
            %1643 = vst [vmem:[%s1628 + $0x38] sm:$0xf] %v1608
            %1644 = vst [vmem:[%s1628 + $0x3c] sm:$0xf] %v1609
          $region76: #{mpnn_forward.1} parent=71 // pred_fallthru
            _
          %p1645 = scmp.eq.s32.totalorder %s29, 3
          // Predicated region
          $region77: #{mpnn_forward.1} parent=71 // pred_check
            %p1646 = pneg %p1645
          $region78: #{mpnn_forward.1} parent=71 // pred_check_branch
            %1648 = sbr.rel (%p1646) target = $region80
          $region79: #{mpnn_forward.1} parent=71 // pred_region
            %v1649 = vld [vmem:[#allocation8] sm:$0xf]
            %v1650 = vld [vmem:[#allocation8 + $0x4] sm:$0xf]
            %v1651 = vld [vmem:[#allocation8 + $0x8] sm:$0xf]
            %v1652 = vld [vmem:[#allocation8 + $0xc] sm:$0xf]
            %v1653 = vld [vmem:[#allocation8 + $0x10] sm:$0xf]
            %v1654 = vld [vmem:[#allocation8 + $0x14] sm:$0xf]
            %v1655 = vld [vmem:[#allocation8 + $0x18] sm:$0xf]
            %v1656 = vld [vmem:[#allocation8 + $0x1c] sm:$0xf]
            %v1657 = vld [vmem:[#allocation8 + $0x20] sm:$0xf]
            %v1658 = vld [vmem:[#allocation8 + $0x24] sm:$0xf]
            %v1659 = vld [vmem:[#allocation8 + $0x28] sm:$0xf]
            %v1660 = vld [vmem:[#allocation8 + $0x2c] sm:$0xf]
            %v1661 = vld [vmem:[#allocation8 + $0x30] sm:$0xf]
            %v1662 = vld [vmem:[#allocation8 + $0x34] sm:$0xf]
            %v1663 = vld [vmem:[#allocation8 + $0x38] sm:$0xf]
            %v1664 = vld [vmem:[#allocation8 + $0x3c] sm:$0xf]
            %v1665 = vld [vmem:[#allocation8 + $0x40] sm:$0xf]
            %v1666 = vld [vmem:[#allocation8 + $0x44] sm:$0xf]
            %v1667 = vld [vmem:[#allocation8 + $0x48] sm:$0xf]
            %v1668 = vld [vmem:[#allocation8 + $0x4c] sm:$0xf]
            %v1669 = vld [vmem:[#allocation8 + $0x50] sm:$0xf]
            %v1670 = vld [vmem:[#allocation8 + $0x54] sm:$0xf]
            %v1671 = vld [vmem:[#allocation8 + $0x58] sm:$0xf]
            %v1672 = vld [vmem:[#allocation8 + $0x5c] sm:$0xf]
            %v1673 = vld [vmem:[#allocation8 + $0x60] sm:$0xf]
            %v1674 = vld [vmem:[#allocation8 + $0x64] sm:$0xf]
            %v1675 = vld [vmem:[#allocation8 + $0x68] sm:$0xf]
            %v1676 = vld [vmem:[#allocation8 + $0x6c] sm:$0xf]
            %v1677 = vld [vmem:[#allocation8 + $0x70] sm:$0xf]
            %v1678 = vld [vmem:[#allocation8 + $0x74] sm:$0xf]
            %v1679 = vld [vmem:[#allocation8 + $0x78] sm:$0xf]
            %v1680 = vld [vmem:[#allocation8 + $0x7c] sm:$0xf]
            %v1681 = vld [vmem:[%s7] sm:$0x1]
            %v1683 = vlaneseq
            %v1684 = vshrl.u32 %v1683, 7
            %v1685 = vsub.s32 0, %v1684
            %v1686 = vrot.slane %v1681, %v1685
            %v1704 = vunpack.c.l.b16 %v1214
            %v1705 = vunpack.c.h.b16 %v1214
            %v1706 = vunpack.c.l.b16 %v1215
            %v1707 = vunpack.c.h.b16 %v1215
            %v1708 = vunpack.c.l.b16 %v1216
            %v1709 = vunpack.c.h.b16 %v1216
            %v1710 = vunpack.c.l.b16 %v1217
            %v1711 = vunpack.c.h.b16 %v1217
            %v1712 = vunpack.c.l.b16 %v1218
            %v1713 = vunpack.c.h.b16 %v1218
            %v1714 = vunpack.c.l.b16 %v1219
            %v1715 = vunpack.c.h.b16 %v1219
            %v1716 = vunpack.c.l.b16 %v1220
            %v1717 = vunpack.c.h.b16 %v1220
            %v1718 = vunpack.c.l.b16 %v1221
            %v1719 = vunpack.c.h.b16 %v1221
            %v1720 = vunpack.c.l.b16 %v1222
            %v1721 = vunpack.c.h.b16 %v1222
            %v1722 = vunpack.c.l.b16 %v1223
            %v1723 = vunpack.c.h.b16 %v1223
            %v1724 = vunpack.c.l.b16 %v1224
            %v1725 = vunpack.c.h.b16 %v1224
            %v1726 = vunpack.c.l.b16 %v1225
            %v1727 = vunpack.c.h.b16 %v1225
            %v1728 = vunpack.c.l.b16 %v1226
            %v1729 = vunpack.c.h.b16 %v1226
            %v1730 = vunpack.c.l.b16 %v1227
            %v1731 = vunpack.c.h.b16 %v1227
            %v1732 = vunpack.c.l.b16 %v1228
            %v1733 = vunpack.c.h.b16 %v1228
            %v1734 = vunpack.c.l.b16 %v1229
            %v1735 = vunpack.c.h.b16 %v1229
            %v1736 = vpack.c.b16 %v1706, %v1704
            %v1737 = vpack.c.b16 %v1707, %v1705
            %v1738 = vpack.c.b16 %v1710, %v1708
            %v1739 = vpack.c.b16 %v1711, %v1709
            %v1740 = vpack.c.b16 %v1714, %v1712
            %v1741 = vpack.c.b16 %v1715, %v1713
            %v1742 = vpack.c.b16 %v1718, %v1716
            %v1743 = vpack.c.b16 %v1719, %v1717
            %v1744 = vpack.c.b16 %v1722, %v1720
            %v1745 = vpack.c.b16 %v1723, %v1721
            %v1746 = vpack.c.b16 %v1726, %v1724
            %v1747 = vpack.c.b16 %v1727, %v1725
            %v1748 = vpack.c.b16 %v1730, %v1728
            %v1749 = vpack.c.b16 %v1731, %v1729
            %v1750 = vpack.c.b16 %v1734, %v1732
            %v1751 = vpack.c.b16 %v1735, %v1733
            %v1800 = vunpack.c.l.b16 %v1649
            %v1801 = vunpack.c.l.b16 %v1650
            %v1802 = vunpack.c.l.b16 %v1651
            %v1803 = vunpack.c.l.b16 %v1652
            %v1804 = vunpack.c.l.b16 %v1653
            %v1805 = vunpack.c.l.b16 %v1654
            %v1806 = vunpack.c.l.b16 %v1655
            %v1807 = vunpack.c.l.b16 %v1656
            %v1808 = vunpack.c.l.b16 %v1657
            %v1809 = vunpack.c.l.b16 %v1658
            %v1810 = vunpack.c.l.b16 %v1659
            %v1811 = vunpack.c.l.b16 %v1660
            %v1812 = vunpack.c.l.b16 %v1661
            %v1813 = vunpack.c.l.b16 %v1662
            %v1814 = vunpack.c.l.b16 %v1663
            %v1815 = vunpack.c.l.b16 %v1664
            %v1816 = vunpack.c.l.b16 %v1665
            %v1817 = vunpack.c.l.b16 %v1666
            %v1818 = vunpack.c.l.b16 %v1667
            %v1819 = vunpack.c.l.b16 %v1668
            %v1820 = vunpack.c.l.b16 %v1669
            %v1821 = vunpack.c.l.b16 %v1670
            %v1822 = vunpack.c.l.b16 %v1671
            %v1823 = vunpack.c.l.b16 %v1672
            %v1824 = vunpack.c.l.b16 %v1673
            %v1825 = vunpack.c.l.b16 %v1674
            %v1826 = vunpack.c.l.b16 %v1675
            %v1827 = vunpack.c.l.b16 %v1676
            %v1828 = vunpack.c.l.b16 %v1677
            %v1829 = vunpack.c.l.b16 %v1678
            %v1830 = vunpack.c.l.b16 %v1679
            %v1831 = vunpack.c.l.b16 %v1680
            %v1832 = vpack.c.b16 %v1801, %v1800
            %v1833 = vpack.c.b16 %v1803, %v1802
            %v1834 = vpack.c.b16 %v1805, %v1804
            %v1835 = vpack.c.b16 %v1807, %v1806
            %v1836 = vpack.c.b16 %v1809, %v1808
            %v1837 = vpack.c.b16 %v1811, %v1810
            %v1838 = vpack.c.b16 %v1813, %v1812
            %v1839 = vpack.c.b16 %v1815, %v1814
            %v1840 = vpack.c.b16 %v1817, %v1816
            %v1841 = vpack.c.b16 %v1819, %v1818
            %v1842 = vpack.c.b16 %v1821, %v1820
            %v1843 = vpack.c.b16 %v1823, %v1822
            %v1844 = vpack.c.b16 %v1825, %v1824
            %v1845 = vpack.c.b16 %v1827, %v1826
            %v1846 = vpack.c.b16 %v1829, %v1828
            %v1847 = vpack.c.b16 %v1831, %v1830
            %1864 = vmatprep.subr.bf16.mxu0 0
            %1865 = vmatpush1.bf16.msra.mxu0 %v1839
            %1866 = vmatprep.subr.bf16.mxu0 0
            %1867 = vmatpush1.bf16.msra.mxu0 %v1838
            %1868 = vmatprep.subr.bf16.mxu0 0
            %1869 = vmatpush1.bf16.msra.mxu0 %v1837
            %1870 = vmatprep.subr.bf16.mxu0 0
            %1871 = vmatpush1.bf16.msra.mxu0 %v1836
            %1872 = vmatprep.subr.bf16.mxu0 0
            %1873 = vmatpush1.bf16.msra.mxu0 %v1835
            %1874 = vmatprep.subr.bf16.mxu0 0
            %1875 = vmatpush1.bf16.msra.mxu0 %v1834
            %1876 = vmatprep.subr.bf16.mxu0 0
            %1877 = vmatpush1.bf16.msra.mxu0 %v1833
            %1878 = vmatprep.subr.bf16.mxu0 0
            %1879 = vmatpush1.bf16.msra.mxu0 %v1832
            %1880 = vmatprep.subr.bf16.mxu0 0
            %1881 = vmatpush2.bf16.msra.mxu0 %v1847
            %1882 = vmatprep.subr.bf16.mxu0 0
            %1883 = vmatpush2.bf16.msra.mxu0 %v1846
            %1884 = vmatprep.subr.bf16.mxu0 0
            %1885 = vmatpush2.bf16.msra.mxu0 %v1845
            %1886 = vmatprep.subr.bf16.mxu0 0
            %1887 = vmatpush2.bf16.msra.mxu0 %v1844
            %1888 = vmatprep.subr.bf16.mxu0 0
            %1889 = vmatpush2.bf16.msra.mxu0 %v1843
            %1890 = vmatprep.subr.bf16.mxu0 0
            %1891 = vmatpush2.bf16.msra.mxu0 %v1842
            %1892 = vmatprep.subr.bf16.mxu0 0
            %1893 = vmatpush2.bf16.msra.mxu0 %v1841
            %1894 = vmatprep.subr.bf16.mxu0 0
            %1895 = vmatpush2.bf16.msra.mxu0 %v1840
            %1896 = vmatprep.mubr.bf16.mxu0 %v1737
            %1897 = vmatmul.mubr.bf16.gmra.mxu0 %v1736
            %v1898 = vpop.f32.mrf.mxu0
            %v1899 = vadd.f32 %v1686, %v1898
            %v1900 = vpop.f32.mrf.mxu0
            %v1901 = vpop.f32.mrf.mxu0
            %v1902 = vadd.f32 %v1686, %v1901
            %v1903 = vpop.f32.mrf.mxu0
            %1904 = vmatprep.mubr.bf16.mxu0 %v1739
            %1905 = vmatmul.mubr.bf16.gmra.mxu0 %v1738
            %v1906 = vpop.f32.mrf.mxu0
            %v1907 = vadd.f32 %v1686, %v1906
            %v1908 = vpop.f32.mrf.mxu0
            %v1909 = vpop.f32.mrf.mxu0
            %v1910 = vadd.f32 %v1686, %v1909
            %v1911 = vpop.f32.mrf.mxu0
            %1912 = vmatprep.mubr.bf16.mxu0 %v1741
            %1913 = vmatmul.mubr.bf16.gmra.mxu0 %v1740
            %v1914 = vpop.f32.mrf.mxu0
            %v1915 = vadd.f32 %v1686, %v1914
            %v1916 = vpop.f32.mrf.mxu0
            %v1917 = vpop.f32.mrf.mxu0
            %v1918 = vadd.f32 %v1686, %v1917
            %v1919 = vpop.f32.mrf.mxu0
            %1920 = vmatprep.mubr.bf16.mxu0 %v1743
            %1921 = vmatmul.mubr.bf16.gmra.mxu0 %v1742
            %v1922 = vpop.f32.mrf.mxu0
            %v1923 = vadd.f32 %v1686, %v1922
            %v1924 = vpop.f32.mrf.mxu0
            %v1925 = vpop.f32.mrf.mxu0
            %v1926 = vadd.f32 %v1686, %v1925
            %v1927 = vpop.f32.mrf.mxu0
            %1928 = vmatprep.mubr.bf16.mxu0 %v1745
            %1929 = vmatmul.mubr.bf16.gmra.mxu0 %v1744
            %v1930 = vpop.f32.mrf.mxu0
            %v1931 = vadd.f32 %v1686, %v1930
            %v1932 = vpop.f32.mrf.mxu0
            %v1933 = vpop.f32.mrf.mxu0
            %v1934 = vadd.f32 %v1686, %v1933
            %v1935 = vpop.f32.mrf.mxu0
            %1936 = vmatprep.mubr.bf16.mxu0 %v1747
            %1937 = vmatmul.mubr.bf16.gmra.mxu0 %v1746
            %v1938 = vpop.f32.mrf.mxu0
            %v1939 = vadd.f32 %v1686, %v1938
            %v1940 = vpop.f32.mrf.mxu0
            %v1941 = vpop.f32.mrf.mxu0
            %v1942 = vadd.f32 %v1686, %v1941
            %v1943 = vpop.f32.mrf.mxu0
            %1944 = vmatprep.mubr.bf16.mxu0 %v1749
            %1945 = vmatmul.mubr.bf16.gmra.mxu0 %v1748
            %v1946 = vpop.f32.mrf.mxu0
            %v1947 = vadd.f32 %v1686, %v1946
            %v1948 = vpop.f32.mrf.mxu0
            %v1949 = vpop.f32.mrf.mxu0
            %v1950 = vadd.f32 %v1686, %v1949
            %v1951 = vpop.f32.mrf.mxu0
            %1952 = vmatprep.mubr.bf16.mxu0 %v1751
            %1953 = vmatmul.mubr.bf16.gmra.mxu0 %v1750
            %v1954 = vpop.f32.mrf.mxu0
            %v1955 = vadd.f32 %v1686, %v1954
            %v1956 = vpop.f32.mrf.mxu0
            %v1957 = vpop.f32.mrf.mxu0
            %v1958 = vadd.f32 %v1686, %v1957
            %v1959 = vpop.f32.mrf.mxu0
            %1960 = vdwg.mxu0
            %v1961 = vmax.f32 %v1899, 0.0
            %v1962 = vmax.f32 %v1902, 0.0
            %v1963 = vmax.f32 %v1907, 0.0
            %v1964 = vmax.f32 %v1910, 0.0
            %v1965 = vmax.f32 %v1915, 0.0
            %v1966 = vmax.f32 %v1918, 0.0
            %v1967 = vmax.f32 %v1923, 0.0
            %v1968 = vmax.f32 %v1926, 0.0
            %v1969 = vmax.f32 %v1931, 0.0
            %v1970 = vmax.f32 %v1934, 0.0
            %v1971 = vmax.f32 %v1939, 0.0
            %v1972 = vmax.f32 %v1942, 0.0
            %v1973 = vmax.f32 %v1947, 0.0
            %v1974 = vmax.f32 %v1950, 0.0
            %v1975 = vmax.f32 %v1955, 0.0
            %v1976 = vmax.f32 %v1958, 0.0
            %v1977 = vpack.c.bf16 %v1962, %v1961
            %v1978 = vpack.c.bf16 %v1964, %v1963
            %v1979 = vpack.c.bf16 %v1966, %v1965
            %v1980 = vpack.c.bf16 %v1968, %v1967
            %v1981 = vpack.c.bf16 %v1970, %v1969
            %v1982 = vpack.c.bf16 %v1972, %v1971
            %v1983 = vpack.c.bf16 %v1974, %v1973
            %v1984 = vpack.c.bf16 %v1976, %v1975
            %v1993 = vunpack.c.l.b16 %v1977
            %v1994 = vunpack.c.h.b16 %v1977
            %v1995 = vunpack.c.l.b16 %v1978
            %v1996 = vunpack.c.h.b16 %v1978
            %v1997 = vunpack.c.l.b16 %v1979
            %v1998 = vunpack.c.h.b16 %v1979
            %v1999 = vunpack.c.l.b16 %v1980
            %v2000 = vunpack.c.h.b16 %v1980
            %v2001 = vunpack.c.l.b16 %v1981
            %v2002 = vunpack.c.h.b16 %v1981
            %v2003 = vunpack.c.l.b16 %v1982
            %v2004 = vunpack.c.h.b16 %v1982
            %v2005 = vunpack.c.l.b16 %v1983
            %v2006 = vunpack.c.h.b16 %v1983
            %v2007 = vunpack.c.l.b16 %v1984
            %v2008 = vunpack.c.h.b16 %v1984
            %v2009 = vpack.c.b16 %v1993, %v1993
            %v2010 = vpack.c.b16 %v1994, %v1994
            %v2011 = vpack.c.b16 %v1995, %v1995
            %v2012 = vpack.c.b16 %v1996, %v1996
            %v2013 = vpack.c.b16 %v1997, %v1997
            %v2014 = vpack.c.b16 %v1998, %v1998
            %v2015 = vpack.c.b16 %v1999, %v1999
            %v2016 = vpack.c.b16 %v2000, %v2000
            %v2017 = vpack.c.b16 %v2001, %v2001
            %v2018 = vpack.c.b16 %v2002, %v2002
            %v2019 = vpack.c.b16 %v2003, %v2003
            %v2020 = vpack.c.b16 %v2004, %v2004
            %v2021 = vpack.c.b16 %v2005, %v2005
            %v2022 = vpack.c.b16 %v2006, %v2006
            %v2023 = vpack.c.b16 %v2007, %v2007
            %v2024 = vpack.c.b16 %v2008, %v2008
            %2041 = vst [vmem:[%s513] sm:$0xf] %v2009
            %2042 = vst [vmem:[%s513 + $0x4] sm:$0xf] %v2010
            %2043 = vst [vmem:[%s513 + $0x8] sm:$0xf] %v2011
            %2044 = vst [vmem:[%s513 + $0xc] sm:$0xf] %v2012
            %2045 = vst [vmem:[%s513 + $0x10] sm:$0xf] %v2013
            %2046 = vst [vmem:[%s513 + $0x14] sm:$0xf] %v2014
            %2047 = vst [vmem:[%s513 + $0x18] sm:$0xf] %v2015
            %2048 = vst [vmem:[%s513 + $0x1c] sm:$0xf] %v2016
            %2049 = vst [vmem:[%s513 + $0x20] sm:$0xf] %v2017
            %2050 = vst [vmem:[%s513 + $0x24] sm:$0xf] %v2018
            %2051 = vst [vmem:[%s513 + $0x28] sm:$0xf] %v2019
            %2052 = vst [vmem:[%s513 + $0x2c] sm:$0xf] %v2020
            %2053 = vst [vmem:[%s513 + $0x30] sm:$0xf] %v2021
            %2054 = vst [vmem:[%s513 + $0x34] sm:$0xf] %v2022
            %2055 = vst [vmem:[%s513 + $0x38] sm:$0xf] %v2023
            %2056 = vst [vmem:[%s513 + $0x3c] sm:$0xf] %v2024
          $region80: #{mpnn_forward.1} parent=71 // pred_fallthru
            _
        $region72: #{mpnn_forward.1} parent=51 // pred_fallthru
          _
        %p2057 = scmp.eq.s32.totalorder %s867, 0
        %p2058 = pnand %p855, %p2057
        %p2059 = pneg %p2058
        // Predicated region
        $region81: #{mpnn_forward.1} parent=51 // pred_check
          _
        $region82: #{mpnn_forward.1} parent=51 // pred_check_branch
          %2061 = sbr.rel (%p2058) target = $region84
        $region83: #{mpnn_forward.1} parent=51 // pred_region
          %s2062 = scalar_lea.vmem [#allocation2], 64
          %v2063 = vld [vmem:[%s2062] sm:$0xf]
          %v2064 = vld [vmem:[%s2062 + $0x4] sm:$0xf]
          %v2065 = vld [vmem:[%s2062 + $0x8] sm:$0xf]
          %v2066 = vld [vmem:[%s2062 + $0xc] sm:$0xf]
          %v2067 = vld [vmem:[%s2062 + $0x10] sm:$0xf]
          %v2068 = vld [vmem:[%s2062 + $0x14] sm:$0xf]
          %v2069 = vld [vmem:[%s2062 + $0x18] sm:$0xf]
          %v2070 = vld [vmem:[%s2062 + $0x1c] sm:$0xf]
          %v2071 = vld [vmem:[%s2062 + $0x20] sm:$0xf]
          %v2072 = vld [vmem:[%s2062 + $0x24] sm:$0xf]
          %v2073 = vld [vmem:[%s2062 + $0x28] sm:$0xf]
          %v2074 = vld [vmem:[%s2062 + $0x2c] sm:$0xf]
          %v2075 = vld [vmem:[%s2062 + $0x30] sm:$0xf]
          %v2076 = vld [vmem:[%s2062 + $0x34] sm:$0xf]
          %v2077 = vld [vmem:[%s2062 + $0x38] sm:$0xf]
          %v2078 = vld [vmem:[%s2062 + $0x3c] sm:$0xf]
          %s2079 = sshra.s32 %s518, 3
          %s2080 = sand.u32 %s518, 7
          %s2081 = sadd.s32 %s2079, 16
          %s2082 = smul.addr %s2081, 4
          %s2083 = scalar_lea.vmem [#allocation2], %s2082
          %v2084 = vld [vmem:[%s2083] sm:$0xf]
          %v2085 = vld [vmem:[%s2083 + $0x4] sm:$0xf]
          %v2086 = vld [vmem:[%s2083 + $0x8] sm:$0xf]
          %v2087 = vld [vmem:[%s2083 + $0xc] sm:$0xf]
          %v2088 = vld [vmem:[%s2083 + $0x10] sm:$0xf]
          %v2089 = vld [vmem:[%s2083 + $0x14] sm:$0xf]
          %v2090 = vld [vmem:[%s2083 + $0x18] sm:$0xf]
          %v2091 = vld [vmem:[%s2083 + $0x1c] sm:$0xf]
          %v2092 = vld [vmem:[%s2083 + $0x20] sm:$0xf]
          %v2093 = vld [vmem:[%s2083 + $0x24] sm:$0xf]
          %v2094 = vld [vmem:[%s2083 + $0x28] sm:$0xf]
          %v2095 = vld [vmem:[%s2083 + $0x2c] sm:$0xf]
          %v2096 = vld [vmem:[%s2083 + $0x30] sm:$0xf]
          %v2097 = vld [vmem:[%s2083 + $0x34] sm:$0xf]
          %v2098 = vld [vmem:[%s2083 + $0x38] sm:$0xf]
          %v2099 = vld [vmem:[%s2083 + $0x3c] sm:$0xf]
          %v2100 = vld [vmem:[%s408] sm:$0xf]
          %v2101 = vld [vmem:[%s408 + $0x4] sm:$0xf]
          %v2102 = vld [vmem:[%s408 + $0x8] sm:$0xf]
          %v2103 = vld [vmem:[%s408 + $0xc] sm:$0xf]
          %v2104 = vld [vmem:[%s408 + $0x10] sm:$0xf]
          %v2105 = vld [vmem:[%s408 + $0x14] sm:$0xf]
          %v2106 = vld [vmem:[%s408 + $0x18] sm:$0xf]
          %v2107 = vld [vmem:[%s408 + $0x1c] sm:$0xf]
          %v2108 = vld [vmem:[%s408 + $0x20] sm:$0xf]
          %v2109 = vld [vmem:[%s408 + $0x24] sm:$0xf]
          %v2110 = vld [vmem:[%s408 + $0x28] sm:$0xf]
          %v2111 = vld [vmem:[%s408 + $0x2c] sm:$0xf]
          %v2112 = vld [vmem:[%s408 + $0x30] sm:$0xf]
          %v2113 = vld [vmem:[%s408 + $0x34] sm:$0xf]
          %v2114 = vld [vmem:[%s408 + $0x38] sm:$0xf]
          %v2115 = vld [vmem:[%s408 + $0x3c] sm:$0xf]
          %v2132 = vunpack.c.l.b16 %v2100
          %v2133 = vunpack.c.l.b16 %v2101
          %v2134 = vunpack.c.l.b16 %v2102
          %v2135 = vunpack.c.l.b16 %v2103
          %v2136 = vunpack.c.l.b16 %v2104
          %v2137 = vunpack.c.l.b16 %v2105
          %v2138 = vunpack.c.l.b16 %v2106
          %v2139 = vunpack.c.l.b16 %v2107
          %v2140 = vunpack.c.l.b16 %v2108
          %v2141 = vunpack.c.l.b16 %v2109
          %v2142 = vunpack.c.l.b16 %v2110
          %v2143 = vunpack.c.l.b16 %v2111
          %v2144 = vunpack.c.l.b16 %v2112
          %v2145 = vunpack.c.l.b16 %v2113
          %v2146 = vunpack.c.l.b16 %v2114
          %v2147 = vunpack.c.l.b16 %v2115
          %v2148 = vpack.c.b16 %v2133, %v2132
          %v2149 = vpack.c.b16 %v2135, %v2134
          %v2150 = vpack.c.b16 %v2137, %v2136
          %v2151 = vpack.c.b16 %v2139, %v2138
          %v2152 = vpack.c.b16 %v2141, %v2140
          %v2153 = vpack.c.b16 %v2143, %v2142
          %v2154 = vpack.c.b16 %v2145, %v2144
          %v2155 = vpack.c.b16 %v2147, %v2146
          %v2180 = vunpack.c.l.b16 %v2063
          %v2181 = vunpack.c.l.b16 %v2064
          %v2182 = vunpack.c.l.b16 %v2065
          %v2183 = vunpack.c.l.b16 %v2066
          %v2184 = vunpack.c.l.b16 %v2067
          %v2185 = vunpack.c.l.b16 %v2068
          %v2186 = vunpack.c.l.b16 %v2069
          %v2187 = vunpack.c.l.b16 %v2070
          %v2188 = vunpack.c.l.b16 %v2071
          %v2189 = vunpack.c.l.b16 %v2072
          %v2190 = vunpack.c.l.b16 %v2073
          %v2191 = vunpack.c.l.b16 %v2074
          %v2192 = vunpack.c.l.b16 %v2075
          %v2193 = vunpack.c.l.b16 %v2076
          %v2194 = vunpack.c.l.b16 %v2077
          %v2195 = vunpack.c.l.b16 %v2078
          %v2196 = vpack.c.b16 %v2181, %v2180
          %v2197 = vpack.c.b16 %v2183, %v2182
          %v2198 = vpack.c.b16 %v2185, %v2184
          %v2199 = vpack.c.b16 %v2187, %v2186
          %v2200 = vpack.c.b16 %v2189, %v2188
          %v2201 = vpack.c.b16 %v2191, %v2190
          %v2202 = vpack.c.b16 %v2193, %v2192
          %v2203 = vpack.c.b16 %v2195, %v2194
          %2212 = vmatprep.subr.bf16.mxu0 0
          %2213 = vmatpush1.bf16.msra.mxu0 %v2203
          %2214 = vmatprep.subr.bf16.mxu0 0
          %2215 = vmatpush1.bf16.msra.mxu0 %v2202
          %2216 = vmatprep.subr.bf16.mxu0 0
          %2217 = vmatpush1.bf16.msra.mxu0 %v2201
          %2218 = vmatprep.subr.bf16.mxu0 0
          %2219 = vmatpush1.bf16.msra.mxu0 %v2200
          %2220 = vmatprep.subr.bf16.mxu0 0
          %2221 = vmatpush1.bf16.msra.mxu0 %v2199
          %2222 = vmatprep.subr.bf16.mxu0 0
          %2223 = vmatpush1.bf16.msra.mxu0 %v2198
          %2224 = vmatprep.subr.bf16.mxu0 0
          %2225 = vmatpush1.bf16.msra.mxu0 %v2197
          %2226 = vmatprep.subr.bf16.mxu0 0
          %2227 = vmatpush1.bf16.msra.mxu0 %v2196
          %2228 = vmatprep.subr.bf16.mxu0 0
          %2229 = vmatpush2.bf16.msra.mxu0 0
          %2230 = vmatprep.subr.bf16.mxu0 0
          %2231 = vmatpush2.bf16.msra.mxu0 0
          %2232 = vmatprep.subr.bf16.mxu0 0
          %2233 = vmatpush2.bf16.msra.mxu0 0
          %2234 = vmatprep.subr.bf16.mxu0 0
          %2235 = vmatpush2.bf16.msra.mxu0 0
          %2236 = vmatprep.subr.bf16.mxu0 0
          %2237 = vmatpush2.bf16.msra.mxu0 0
          %2238 = vmatprep.subr.bf16.mxu0 0
          %2239 = vmatpush2.bf16.msra.mxu0 0
          %2240 = vmatprep.subr.bf16.mxu0 0
          %2241 = vmatpush2.bf16.msra.mxu0 0
          %2242 = vmatprep.subr.bf16.mxu0 0
          %2243 = vmatpush2.bf16.msra.mxu0 0
          %2244 = vmatprep.mubr.bf16.mxu0 0
          %2245 = vmatmul.mubr.bf16.gmra.mxu0 %v2148
          %v2246 = vpop.f32.mrf.mxu0
          %v2247 = vadd.f32 0.0, %v2246
          %v2248 = vpop.f32.mrf.mxu0
          %v2249 = vpop.f32.mrf.mxu0
          %v2250 = vadd.f32 0.0, %v2249
          %v2251 = vpop.f32.mrf.mxu0
          %2252 = vmatprep.mubr.bf16.mxu0 0
          %2253 = vmatmul.mubr.bf16.gmra.mxu0 %v2149
          %v2254 = vpop.f32.mrf.mxu0
          %v2255 = vadd.f32 0.0, %v2254
          %v2256 = vpop.f32.mrf.mxu0
          %v2257 = vpop.f32.mrf.mxu0
          %v2258 = vadd.f32 0.0, %v2257
          %v2259 = vpop.f32.mrf.mxu0
          %2260 = vmatprep.mubr.bf16.mxu0 0
          %2261 = vmatmul.mubr.bf16.gmra.mxu0 %v2150
          %v2262 = vpop.f32.mrf.mxu0
          %v2263 = vadd.f32 0.0, %v2262
          %v2264 = vpop.f32.mrf.mxu0
          %v2265 = vpop.f32.mrf.mxu0
          %v2266 = vadd.f32 0.0, %v2265
          %v2267 = vpop.f32.mrf.mxu0
          %2268 = vmatprep.mubr.bf16.mxu0 0
          %2269 = vmatmul.mubr.bf16.gmra.mxu0 %v2151
          %v2270 = vpop.f32.mrf.mxu0
          %v2271 = vadd.f32 0.0, %v2270
          %v2272 = vpop.f32.mrf.mxu0
          %v2273 = vpop.f32.mrf.mxu0
          %v2274 = vadd.f32 0.0, %v2273
          %v2275 = vpop.f32.mrf.mxu0
          %2276 = vmatprep.mubr.bf16.mxu0 0
          %2277 = vmatmul.mubr.bf16.gmra.mxu0 %v2152
          %v2278 = vpop.f32.mrf.mxu0
          %v2279 = vadd.f32 0.0, %v2278
          %v2280 = vpop.f32.mrf.mxu0
          %v2281 = vpop.f32.mrf.mxu0
          %v2282 = vadd.f32 0.0, %v2281
          %v2283 = vpop.f32.mrf.mxu0
          %2284 = vmatprep.mubr.bf16.mxu0 0
          %2285 = vmatmul.mubr.bf16.gmra.mxu0 %v2153
          %v2286 = vpop.f32.mrf.mxu0
          %v2287 = vadd.f32 0.0, %v2286
          %v2288 = vpop.f32.mrf.mxu0
          %v2289 = vpop.f32.mrf.mxu0
          %v2290 = vadd.f32 0.0, %v2289
          %v2291 = vpop.f32.mrf.mxu0
          %2292 = vmatprep.mubr.bf16.mxu0 0
          %2293 = vmatmul.mubr.bf16.gmra.mxu0 %v2154
          %v2294 = vpop.f32.mrf.mxu0
          %v2295 = vadd.f32 0.0, %v2294
          %v2296 = vpop.f32.mrf.mxu0
          %v2297 = vpop.f32.mrf.mxu0
          %v2298 = vadd.f32 0.0, %v2297
          %v2299 = vpop.f32.mrf.mxu0
          %2300 = vmatprep.mubr.bf16.mxu0 0
          %2301 = vmatmul.mubr.bf16.gmra.mxu0 %v2155
          %v2302 = vpop.f32.mrf.mxu0
          %v2303 = vadd.f32 0.0, %v2302
          %v2304 = vpop.f32.mrf.mxu0
          %v2305 = vpop.f32.mrf.mxu0
          %v2306 = vadd.f32 0.0, %v2305
          %v2307 = vpop.f32.mrf.mxu0
          %2308 = vdwg.mxu0
          %2309 = vst [vmem:[#allocation3] sm:$0xf] %v2084
          %2310 = vst [vmem:[#allocation3 + $0x8] sm:$0xf] %v2085
          %2311 = vst [vmem:[#allocation3 + $0x10] sm:$0xf] %v2086
          %2312 = vst [vmem:[#allocation3 + $0x18] sm:$0xf] %v2087
          %2313 = vst [vmem:[#allocation3 + $0x20] sm:$0xf] %v2088
          %2314 = vst [vmem:[#allocation3 + $0x28] sm:$0xf] %v2089
          %2315 = vst [vmem:[#allocation3 + $0x30] sm:$0xf] %v2090
          %2316 = vst [vmem:[#allocation3 + $0x38] sm:$0xf] %v2091
          %2317 = vst [vmem:[#allocation3 + $0x40] sm:$0xf] %v2092
          %2318 = vst [vmem:[#allocation3 + $0x48] sm:$0xf] %v2093
          %2319 = vst [vmem:[#allocation3 + $0x50] sm:$0xf] %v2094
          %2320 = vst [vmem:[#allocation3 + $0x58] sm:$0xf] %v2095
          %2321 = vst [vmem:[#allocation3 + $0x60] sm:$0xf] %v2096
          %2322 = vst [vmem:[#allocation3 + $0x68] sm:$0xf] %v2097
          %2323 = vst [vmem:[#allocation3 + $0x70] sm:$0xf] %v2098
          %2324 = vst [vmem:[#allocation3 + $0x78] sm:$0xf] %v2099
          %v2325 = vpack.c.bf16 %v2250, %v2247
          %v2326 = vpack.c.bf16 %v2258, %v2255
          %v2327 = vpack.c.bf16 %v2266, %v2263
          %v2328 = vpack.c.bf16 %v2274, %v2271
          %v2329 = vpack.c.bf16 %v2282, %v2279
          %v2330 = vpack.c.bf16 %v2290, %v2287
          %v2331 = vpack.c.bf16 %v2298, %v2295
          %v2332 = vpack.c.bf16 %v2306, %v2303
          %v2341 = vunpack.c.l.b16 %v2325
          %v2342 = vunpack.c.h.b16 %v2325
          %v2343 = vunpack.c.l.b16 %v2326
          %v2344 = vunpack.c.h.b16 %v2326
          %v2345 = vunpack.c.l.b16 %v2327
          %v2346 = vunpack.c.h.b16 %v2327
          %v2347 = vunpack.c.l.b16 %v2328
          %v2348 = vunpack.c.h.b16 %v2328
          %v2349 = vunpack.c.l.b16 %v2329
          %v2350 = vunpack.c.h.b16 %v2329
          %v2351 = vunpack.c.l.b16 %v2330
          %v2352 = vunpack.c.h.b16 %v2330
          %v2353 = vunpack.c.l.b16 %v2331
          %v2354 = vunpack.c.h.b16 %v2331
          %v2355 = vunpack.c.l.b16 %v2332
          %v2356 = vunpack.c.h.b16 %v2332
          %v2357 = vpack.c.b16 %v2341, %v2341
          %v2358 = vpack.c.b16 %v2342, %v2342
          %v2359 = vpack.c.b16 %v2343, %v2343
          %v2360 = vpack.c.b16 %v2344, %v2344
          %v2361 = vpack.c.b16 %v2345, %v2345
          %v2362 = vpack.c.b16 %v2346, %v2346
          %v2363 = vpack.c.b16 %v2347, %v2347
          %v2364 = vpack.c.b16 %v2348, %v2348
          %v2365 = vpack.c.b16 %v2349, %v2349
          %v2366 = vpack.c.b16 %v2350, %v2350
          %v2367 = vpack.c.b16 %v2351, %v2351
          %v2368 = vpack.c.b16 %v2352, %v2352
          %v2369 = vpack.c.b16 %v2353, %v2353
          %v2370 = vpack.c.b16 %v2354, %v2354
          %v2371 = vpack.c.b16 %v2355, %v2355
          %v2372 = vpack.c.b16 %v2356, %v2356
          %2389 = vst [vmem:[#allocation3 + $0x4] sm:$0xf] %v2357
          %2390 = vst [vmem:[#allocation3 + $0xc] sm:$0xf] %v2358
          %2391 = vst [vmem:[#allocation3 + $0x14] sm:$0xf] %v2359
          %2392 = vst [vmem:[#allocation3 + $0x1c] sm:$0xf] %v2360
          %2393 = vst [vmem:[#allocation3 + $0x24] sm:$0xf] %v2361
          %2394 = vst [vmem:[#allocation3 + $0x2c] sm:$0xf] %v2362
          %2395 = vst [vmem:[#allocation3 + $0x34] sm:$0xf] %v2363
          %2396 = vst [vmem:[#allocation3 + $0x3c] sm:$0xf] %v2364
          %2397 = vst [vmem:[#allocation3 + $0x44] sm:$0xf] %v2365
          %2398 = vst [vmem:[#allocation3 + $0x4c] sm:$0xf] %v2366
          %2399 = vst [vmem:[#allocation3 + $0x54] sm:$0xf] %v2367
          %2400 = vst [vmem:[#allocation3 + $0x5c] sm:$0xf] %v2368
          %2401 = vst [vmem:[#allocation3 + $0x64] sm:$0xf] %v2369
          %2402 = vst [vmem:[#allocation3 + $0x6c] sm:$0xf] %v2370
          %2403 = vst [vmem:[#allocation3 + $0x74] sm:$0xf] %v2371
          %2404 = vst [vmem:[#allocation3 + $0x7c] sm:$0xf] %v2372
          %v2405 = vld [vmem:[#allocation3] sm:$0xff]
          %v2406 = vld [vmem:[#allocation3 + $0x8] sm:$0xff]
          %v2407 = vld [vmem:[#allocation3 + $0x10] sm:$0xff]
          %v2408 = vld [vmem:[#allocation3 + $0x18] sm:$0xff]
          %v2409 = vld [vmem:[#allocation3 + $0x20] sm:$0xff]
          %v2410 = vld [vmem:[#allocation3 + $0x28] sm:$0xff]
          %v2411 = vld [vmem:[#allocation3 + $0x30] sm:$0xff]
          %v2412 = vld [vmem:[#allocation3 + $0x38] sm:$0xff]
          %v2413 = vld [vmem:[#allocation3 + $0x40] sm:$0xff]
          %v2414 = vld [vmem:[#allocation3 + $0x48] sm:$0xff]
          %v2415 = vld [vmem:[#allocation3 + $0x50] sm:$0xff]
          %v2416 = vld [vmem:[#allocation3 + $0x58] sm:$0xff]
          %v2417 = vld [vmem:[#allocation3 + $0x60] sm:$0xff]
          %v2418 = vld [vmem:[#allocation3 + $0x68] sm:$0xff]
          %v2419 = vld [vmem:[#allocation3 + $0x70] sm:$0xff]
          %v2420 = vld [vmem:[#allocation3 + $0x78] sm:$0xff]
          %p2421 = scmp.lt.s32.totalorder %s29, 3
          // Predicated region
          $region85: #{mpnn_forward.1} parent=83 // pred_check
            %p2422 = pneg %p2421
          $region86: #{mpnn_forward.1} parent=83 // pred_check_branch
            %2424 = sbr.rel (%p2422) target = $region88
          $region87: #{mpnn_forward.1} parent=83 // pred_region
            %v2425 = vld [vmem:[%s417] sm:$0xf]
            %v2426 = vld [vmem:[%s417 + $0x4] sm:$0xf]
            %v2427 = vld [vmem:[%s417 + $0x8] sm:$0xf]
            %v2428 = vld [vmem:[%s417 + $0xc] sm:$0xf]
            %v2429 = vld [vmem:[%s417 + $0x10] sm:$0xf]
            %v2430 = vld [vmem:[%s417 + $0x14] sm:$0xf]
            %v2431 = vld [vmem:[%s417 + $0x18] sm:$0xf]
            %v2432 = vld [vmem:[%s417 + $0x1c] sm:$0xf]
            %v2433 = vld [vmem:[%s417 + $0x20] sm:$0xf]
            %v2434 = vld [vmem:[%s417 + $0x24] sm:$0xf]
            %v2435 = vld [vmem:[%s417 + $0x28] sm:$0xf]
            %v2436 = vld [vmem:[%s417 + $0x2c] sm:$0xf]
            %v2437 = vld [vmem:[%s417 + $0x30] sm:$0xf]
            %v2438 = vld [vmem:[%s417 + $0x34] sm:$0xf]
            %v2439 = vld [vmem:[%s417 + $0x38] sm:$0xf]
            %v2440 = vld [vmem:[%s417 + $0x3c] sm:$0xf]
            %v2441 = vld [vmem:[%s417 + $0x40] sm:$0xf]
            %v2442 = vld [vmem:[%s417 + $0x44] sm:$0xf]
            %v2443 = vld [vmem:[%s417 + $0x48] sm:$0xf]
            %v2444 = vld [vmem:[%s417 + $0x4c] sm:$0xf]
            %v2445 = vld [vmem:[%s417 + $0x50] sm:$0xf]
            %v2446 = vld [vmem:[%s417 + $0x54] sm:$0xf]
            %v2447 = vld [vmem:[%s417 + $0x58] sm:$0xf]
            %v2448 = vld [vmem:[%s417 + $0x5c] sm:$0xf]
            %v2449 = vld [vmem:[%s417 + $0x60] sm:$0xf]
            %v2450 = vld [vmem:[%s417 + $0x64] sm:$0xf]
            %v2451 = vld [vmem:[%s417 + $0x68] sm:$0xf]
            %v2452 = vld [vmem:[%s417 + $0x6c] sm:$0xf]
            %v2453 = vld [vmem:[%s417 + $0x70] sm:$0xf]
            %v2454 = vld [vmem:[%s417 + $0x74] sm:$0xf]
            %v2455 = vld [vmem:[%s417 + $0x78] sm:$0xf]
            %v2456 = vld [vmem:[%s417 + $0x7c] sm:$0xf]
            %v2457 = vld [vmem:[%s501] sm:$0x1]
            %v2459 = vlaneseq
            %v2460 = vshrl.u32 %v2459, 7
            %v2461 = vsub.s32 0, %v2460
            %v2462 = vrot.slane %v2457, %v2461
            %v2480 = vunpack.c.l.b16 %v2405
            %v2481 = vunpack.c.h.b16 %v2405
            %v2482 = vunpack.c.l.b16 %v2406
            %v2483 = vunpack.c.h.b16 %v2406
            %v2484 = vunpack.c.l.b16 %v2407
            %v2485 = vunpack.c.h.b16 %v2407
            %v2486 = vunpack.c.l.b16 %v2408
            %v2487 = vunpack.c.h.b16 %v2408
            %v2488 = vunpack.c.l.b16 %v2409
            %v2489 = vunpack.c.h.b16 %v2409
            %v2490 = vunpack.c.l.b16 %v2410
            %v2491 = vunpack.c.h.b16 %v2410
            %v2492 = vunpack.c.l.b16 %v2411
            %v2493 = vunpack.c.h.b16 %v2411
            %v2494 = vunpack.c.l.b16 %v2412
            %v2495 = vunpack.c.h.b16 %v2412
            %v2496 = vunpack.c.l.b16 %v2413
            %v2497 = vunpack.c.h.b16 %v2413
            %v2498 = vunpack.c.l.b16 %v2414
            %v2499 = vunpack.c.h.b16 %v2414
            %v2500 = vunpack.c.l.b16 %v2415
            %v2501 = vunpack.c.h.b16 %v2415
            %v2502 = vunpack.c.l.b16 %v2416
            %v2503 = vunpack.c.h.b16 %v2416
            %v2504 = vunpack.c.l.b16 %v2417
            %v2505 = vunpack.c.h.b16 %v2417
            %v2506 = vunpack.c.l.b16 %v2418
            %v2507 = vunpack.c.h.b16 %v2418
            %v2508 = vunpack.c.l.b16 %v2419
            %v2509 = vunpack.c.h.b16 %v2419
            %v2510 = vunpack.c.l.b16 %v2420
            %v2511 = vunpack.c.h.b16 %v2420
            %v2512 = vpack.c.b16 %v2482, %v2480
            %v2513 = vpack.c.b16 %v2483, %v2481
            %v2514 = vpack.c.b16 %v2486, %v2484
            %v2515 = vpack.c.b16 %v2487, %v2485
            %v2516 = vpack.c.b16 %v2490, %v2488
            %v2517 = vpack.c.b16 %v2491, %v2489
            %v2518 = vpack.c.b16 %v2494, %v2492
            %v2519 = vpack.c.b16 %v2495, %v2493
            %v2520 = vpack.c.b16 %v2498, %v2496
            %v2521 = vpack.c.b16 %v2499, %v2497
            %v2522 = vpack.c.b16 %v2502, %v2500
            %v2523 = vpack.c.b16 %v2503, %v2501
            %v2524 = vpack.c.b16 %v2506, %v2504
            %v2525 = vpack.c.b16 %v2507, %v2505
            %v2526 = vpack.c.b16 %v2510, %v2508
            %v2527 = vpack.c.b16 %v2511, %v2509
            %v2576 = vunpack.c.l.b16 %v2425
            %v2577 = vunpack.c.l.b16 %v2426
            %v2578 = vunpack.c.l.b16 %v2427
            %v2579 = vunpack.c.l.b16 %v2428
            %v2580 = vunpack.c.l.b16 %v2429
            %v2581 = vunpack.c.l.b16 %v2430
            %v2582 = vunpack.c.l.b16 %v2431
            %v2583 = vunpack.c.l.b16 %v2432
            %v2584 = vunpack.c.l.b16 %v2433
            %v2585 = vunpack.c.l.b16 %v2434
            %v2586 = vunpack.c.l.b16 %v2435
            %v2587 = vunpack.c.l.b16 %v2436
            %v2588 = vunpack.c.l.b16 %v2437
            %v2589 = vunpack.c.l.b16 %v2438
            %v2590 = vunpack.c.l.b16 %v2439
            %v2591 = vunpack.c.l.b16 %v2440
            %v2592 = vunpack.c.l.b16 %v2441
            %v2593 = vunpack.c.l.b16 %v2442
            %v2594 = vunpack.c.l.b16 %v2443
            %v2595 = vunpack.c.l.b16 %v2444
            %v2596 = vunpack.c.l.b16 %v2445
            %v2597 = vunpack.c.l.b16 %v2446
            %v2598 = vunpack.c.l.b16 %v2447
            %v2599 = vunpack.c.l.b16 %v2448
            %v2600 = vunpack.c.l.b16 %v2449
            %v2601 = vunpack.c.l.b16 %v2450
            %v2602 = vunpack.c.l.b16 %v2451
            %v2603 = vunpack.c.l.b16 %v2452
            %v2604 = vunpack.c.l.b16 %v2453
            %v2605 = vunpack.c.l.b16 %v2454
            %v2606 = vunpack.c.l.b16 %v2455
            %v2607 = vunpack.c.l.b16 %v2456
            %v2608 = vpack.c.b16 %v2577, %v2576
            %v2609 = vpack.c.b16 %v2579, %v2578
            %v2610 = vpack.c.b16 %v2581, %v2580
            %v2611 = vpack.c.b16 %v2583, %v2582
            %v2612 = vpack.c.b16 %v2585, %v2584
            %v2613 = vpack.c.b16 %v2587, %v2586
            %v2614 = vpack.c.b16 %v2589, %v2588
            %v2615 = vpack.c.b16 %v2591, %v2590
            %v2616 = vpack.c.b16 %v2593, %v2592
            %v2617 = vpack.c.b16 %v2595, %v2594
            %v2618 = vpack.c.b16 %v2597, %v2596
            %v2619 = vpack.c.b16 %v2599, %v2598
            %v2620 = vpack.c.b16 %v2601, %v2600
            %v2621 = vpack.c.b16 %v2603, %v2602
            %v2622 = vpack.c.b16 %v2605, %v2604
            %v2623 = vpack.c.b16 %v2607, %v2606
            %2640 = vmatprep.subr.bf16.mxu0 0
            %2641 = vmatpush1.bf16.msra.mxu0 %v2615
            %2642 = vmatprep.subr.bf16.mxu0 0
            %2643 = vmatpush1.bf16.msra.mxu0 %v2614
            %2644 = vmatprep.subr.bf16.mxu0 0
            %2645 = vmatpush1.bf16.msra.mxu0 %v2613
            %2646 = vmatprep.subr.bf16.mxu0 0
            %2647 = vmatpush1.bf16.msra.mxu0 %v2612
            %2648 = vmatprep.subr.bf16.mxu0 0
            %2649 = vmatpush1.bf16.msra.mxu0 %v2611
            %2650 = vmatprep.subr.bf16.mxu0 0
            %2651 = vmatpush1.bf16.msra.mxu0 %v2610
            %2652 = vmatprep.subr.bf16.mxu0 0
            %2653 = vmatpush1.bf16.msra.mxu0 %v2609
            %2654 = vmatprep.subr.bf16.mxu0 0
            %2655 = vmatpush1.bf16.msra.mxu0 %v2608
            %2656 = vmatprep.subr.bf16.mxu0 0
            %2657 = vmatpush2.bf16.msra.mxu0 %v2623
            %2658 = vmatprep.subr.bf16.mxu0 0
            %2659 = vmatpush2.bf16.msra.mxu0 %v2622
            %2660 = vmatprep.subr.bf16.mxu0 0
            %2661 = vmatpush2.bf16.msra.mxu0 %v2621
            %2662 = vmatprep.subr.bf16.mxu0 0
            %2663 = vmatpush2.bf16.msra.mxu0 %v2620
            %2664 = vmatprep.subr.bf16.mxu0 0
            %2665 = vmatpush2.bf16.msra.mxu0 %v2619
            %2666 = vmatprep.subr.bf16.mxu0 0
            %2667 = vmatpush2.bf16.msra.mxu0 %v2618
            %2668 = vmatprep.subr.bf16.mxu0 0
            %2669 = vmatpush2.bf16.msra.mxu0 %v2617
            %2670 = vmatprep.subr.bf16.mxu0 0
            %2671 = vmatpush2.bf16.msra.mxu0 %v2616
            %2672 = vmatprep.mubr.bf16.mxu0 %v2513
            %2673 = vmatmul.mubr.bf16.gmra.mxu0 %v2512
            %v2674 = vpop.f32.mrf.mxu0
            %v2675 = vadd.f32 %v2462, %v2674
            %v2676 = vpop.f32.mrf.mxu0
            %v2677 = vpop.f32.mrf.mxu0
            %v2678 = vadd.f32 %v2462, %v2677
            %v2679 = vpop.f32.mrf.mxu0
            %2680 = vmatprep.mubr.bf16.mxu0 %v2515
            %2681 = vmatmul.mubr.bf16.gmra.mxu0 %v2514
            %v2682 = vpop.f32.mrf.mxu0
            %v2683 = vadd.f32 %v2462, %v2682
            %v2684 = vpop.f32.mrf.mxu0
            %v2685 = vpop.f32.mrf.mxu0
            %v2686 = vadd.f32 %v2462, %v2685
            %v2687 = vpop.f32.mrf.mxu0
            %2688 = vmatprep.mubr.bf16.mxu0 %v2517
            %2689 = vmatmul.mubr.bf16.gmra.mxu0 %v2516
            %v2690 = vpop.f32.mrf.mxu0
            %v2691 = vadd.f32 %v2462, %v2690
            %v2692 = vpop.f32.mrf.mxu0
            %v2693 = vpop.f32.mrf.mxu0
            %v2694 = vadd.f32 %v2462, %v2693
            %v2695 = vpop.f32.mrf.mxu0
            %2696 = vmatprep.mubr.bf16.mxu0 %v2519
            %2697 = vmatmul.mubr.bf16.gmra.mxu0 %v2518
            %v2698 = vpop.f32.mrf.mxu0
            %v2699 = vadd.f32 %v2462, %v2698
            %v2700 = vpop.f32.mrf.mxu0
            %v2701 = vpop.f32.mrf.mxu0
            %v2702 = vadd.f32 %v2462, %v2701
            %v2703 = vpop.f32.mrf.mxu0
            %2704 = vmatprep.mubr.bf16.mxu0 %v2521
            %2705 = vmatmul.mubr.bf16.gmra.mxu0 %v2520
            %v2706 = vpop.f32.mrf.mxu0
            %v2707 = vadd.f32 %v2462, %v2706
            %v2708 = vpop.f32.mrf.mxu0
            %v2709 = vpop.f32.mrf.mxu0
            %v2710 = vadd.f32 %v2462, %v2709
            %v2711 = vpop.f32.mrf.mxu0
            %2712 = vmatprep.mubr.bf16.mxu0 %v2523
            %2713 = vmatmul.mubr.bf16.gmra.mxu0 %v2522
            %v2714 = vpop.f32.mrf.mxu0
            %v2715 = vadd.f32 %v2462, %v2714
            %v2716 = vpop.f32.mrf.mxu0
            %v2717 = vpop.f32.mrf.mxu0
            %v2718 = vadd.f32 %v2462, %v2717
            %v2719 = vpop.f32.mrf.mxu0
            %2720 = vmatprep.mubr.bf16.mxu0 %v2525
            %2721 = vmatmul.mubr.bf16.gmra.mxu0 %v2524
            %v2722 = vpop.f32.mrf.mxu0
            %v2723 = vadd.f32 %v2462, %v2722
            %v2724 = vpop.f32.mrf.mxu0
            %v2725 = vpop.f32.mrf.mxu0
            %v2726 = vadd.f32 %v2462, %v2725
            %v2727 = vpop.f32.mrf.mxu0
            %2728 = vmatprep.mubr.bf16.mxu0 %v2527
            %2729 = vmatmul.mubr.bf16.gmra.mxu0 %v2526
            %v2730 = vpop.f32.mrf.mxu0
            %v2731 = vadd.f32 %v2462, %v2730
            %v2732 = vpop.f32.mrf.mxu0
            %v2733 = vpop.f32.mrf.mxu0
            %v2734 = vadd.f32 %v2462, %v2733
            %v2735 = vpop.f32.mrf.mxu0
            %2736 = vdwg.mxu0
            %v2737 = vmax.f32 %v2675, 0.0
            %v2738 = vmax.f32 %v2678, 0.0
            %v2739 = vmax.f32 %v2683, 0.0
            %v2740 = vmax.f32 %v2686, 0.0
            %v2741 = vmax.f32 %v2691, 0.0
            %v2742 = vmax.f32 %v2694, 0.0
            %v2743 = vmax.f32 %v2699, 0.0
            %v2744 = vmax.f32 %v2702, 0.0
            %v2745 = vmax.f32 %v2707, 0.0
            %v2746 = vmax.f32 %v2710, 0.0
            %v2747 = vmax.f32 %v2715, 0.0
            %v2748 = vmax.f32 %v2718, 0.0
            %v2749 = vmax.f32 %v2723, 0.0
            %v2750 = vmax.f32 %v2726, 0.0
            %v2751 = vmax.f32 %v2731, 0.0
            %v2752 = vmax.f32 %v2734, 0.0
            %v2753 = vpack.c.bf16 %v2738, %v2737
            %v2754 = vpack.c.bf16 %v2740, %v2739
            %v2755 = vpack.c.bf16 %v2742, %v2741
            %v2756 = vpack.c.bf16 %v2744, %v2743
            %v2757 = vpack.c.bf16 %v2746, %v2745
            %v2758 = vpack.c.bf16 %v2748, %v2747
            %v2759 = vpack.c.bf16 %v2750, %v2749
            %v2760 = vpack.c.bf16 %v2752, %v2751
            %v2769 = vunpack.c.l.b16 %v2753
            %v2770 = vunpack.c.h.b16 %v2753
            %v2771 = vunpack.c.l.b16 %v2754
            %v2772 = vunpack.c.h.b16 %v2754
            %v2773 = vunpack.c.l.b16 %v2755
            %v2774 = vunpack.c.h.b16 %v2755
            %v2775 = vunpack.c.l.b16 %v2756
            %v2776 = vunpack.c.h.b16 %v2756
            %v2777 = vunpack.c.l.b16 %v2757
            %v2778 = vunpack.c.h.b16 %v2757
            %v2779 = vunpack.c.l.b16 %v2758
            %v2780 = vunpack.c.h.b16 %v2758
            %v2781 = vunpack.c.l.b16 %v2759
            %v2782 = vunpack.c.h.b16 %v2759
            %v2783 = vunpack.c.l.b16 %v2760
            %v2784 = vunpack.c.h.b16 %v2760
            %v2785 = vpack.c.b16 %v2769, %v2769
            %v2786 = vpack.c.b16 %v2770, %v2770
            %v2787 = vpack.c.b16 %v2771, %v2771
            %v2788 = vpack.c.b16 %v2772, %v2772
            %v2789 = vpack.c.b16 %v2773, %v2773
            %v2790 = vpack.c.b16 %v2774, %v2774
            %v2791 = vpack.c.b16 %v2775, %v2775
            %v2792 = vpack.c.b16 %v2776, %v2776
            %v2793 = vpack.c.b16 %v2777, %v2777
            %v2794 = vpack.c.b16 %v2778, %v2778
            %v2795 = vpack.c.b16 %v2779, %v2779
            %v2796 = vpack.c.b16 %v2780, %v2780
            %v2797 = vpack.c.b16 %v2781, %v2781
            %v2798 = vpack.c.b16 %v2782, %v2782
            %v2799 = vpack.c.b16 %v2783, %v2783
            %v2800 = vpack.c.b16 %v2784, %v2784
            %s2817 = smul.addr %s2079, 4
            %s2818 = scalar_lea.vmem [#allocation2], %s2817
            %2819 = vst [vmem:[%s2818] sm:$0xf] %v2785
            %2820 = vst [vmem:[%s2818 + $0x4] sm:$0xf] %v2786
            %2821 = vst [vmem:[%s2818 + $0x8] sm:$0xf] %v2787
            %2822 = vst [vmem:[%s2818 + $0xc] sm:$0xf] %v2788
            %2823 = vst [vmem:[%s2818 + $0x10] sm:$0xf] %v2789
            %2824 = vst [vmem:[%s2818 + $0x14] sm:$0xf] %v2790
            %2825 = vst [vmem:[%s2818 + $0x18] sm:$0xf] %v2791
            %2826 = vst [vmem:[%s2818 + $0x1c] sm:$0xf] %v2792
            %2827 = vst [vmem:[%s2818 + $0x20] sm:$0xf] %v2793
            %2828 = vst [vmem:[%s2818 + $0x24] sm:$0xf] %v2794
            %2829 = vst [vmem:[%s2818 + $0x28] sm:$0xf] %v2795
            %2830 = vst [vmem:[%s2818 + $0x2c] sm:$0xf] %v2796
            %2831 = vst [vmem:[%s2818 + $0x30] sm:$0xf] %v2797
            %2832 = vst [vmem:[%s2818 + $0x34] sm:$0xf] %v2798
            %2833 = vst [vmem:[%s2818 + $0x38] sm:$0xf] %v2799
            %2834 = vst [vmem:[%s2818 + $0x3c] sm:$0xf] %v2800
          $region88: #{mpnn_forward.1} parent=83 // pred_fallthru
            _
          %p2835 = scmp.eq.s32.totalorder %s29, 3
          // Predicated region
          $region89: #{mpnn_forward.1} parent=83 // pred_check
            %p2836 = pneg %p2835
          $region90: #{mpnn_forward.1} parent=83 // pred_check_branch
            %2838 = sbr.rel (%p2836) target = $region92
          $region91: #{mpnn_forward.1} parent=83 // pred_region
            %v2839 = vld [vmem:[#allocation8] sm:$0xf]
            %v2840 = vld [vmem:[#allocation8 + $0x4] sm:$0xf]
            %v2841 = vld [vmem:[#allocation8 + $0x8] sm:$0xf]
            %v2842 = vld [vmem:[#allocation8 + $0xc] sm:$0xf]
            %v2843 = vld [vmem:[#allocation8 + $0x10] sm:$0xf]
            %v2844 = vld [vmem:[#allocation8 + $0x14] sm:$0xf]
            %v2845 = vld [vmem:[#allocation8 + $0x18] sm:$0xf]
            %v2846 = vld [vmem:[#allocation8 + $0x1c] sm:$0xf]
            %v2847 = vld [vmem:[#allocation8 + $0x20] sm:$0xf]
            %v2848 = vld [vmem:[#allocation8 + $0x24] sm:$0xf]
            %v2849 = vld [vmem:[#allocation8 + $0x28] sm:$0xf]
            %v2850 = vld [vmem:[#allocation8 + $0x2c] sm:$0xf]
            %v2851 = vld [vmem:[#allocation8 + $0x30] sm:$0xf]
            %v2852 = vld [vmem:[#allocation8 + $0x34] sm:$0xf]
            %v2853 = vld [vmem:[#allocation8 + $0x38] sm:$0xf]
            %v2854 = vld [vmem:[#allocation8 + $0x3c] sm:$0xf]
            %v2855 = vld [vmem:[#allocation8 + $0x40] sm:$0xf]
            %v2856 = vld [vmem:[#allocation8 + $0x44] sm:$0xf]
            %v2857 = vld [vmem:[#allocation8 + $0x48] sm:$0xf]
            %v2858 = vld [vmem:[#allocation8 + $0x4c] sm:$0xf]
            %v2859 = vld [vmem:[#allocation8 + $0x50] sm:$0xf]
            %v2860 = vld [vmem:[#allocation8 + $0x54] sm:$0xf]
            %v2861 = vld [vmem:[#allocation8 + $0x58] sm:$0xf]
            %v2862 = vld [vmem:[#allocation8 + $0x5c] sm:$0xf]
            %v2863 = vld [vmem:[#allocation8 + $0x60] sm:$0xf]
            %v2864 = vld [vmem:[#allocation8 + $0x64] sm:$0xf]
            %v2865 = vld [vmem:[#allocation8 + $0x68] sm:$0xf]
            %v2866 = vld [vmem:[#allocation8 + $0x6c] sm:$0xf]
            %v2867 = vld [vmem:[#allocation8 + $0x70] sm:$0xf]
            %v2868 = vld [vmem:[#allocation8 + $0x74] sm:$0xf]
            %v2869 = vld [vmem:[#allocation8 + $0x78] sm:$0xf]
            %v2870 = vld [vmem:[#allocation8 + $0x7c] sm:$0xf]
            %v2871 = vld [vmem:[%s7] sm:$0x1]
            %v2873 = vlaneseq
            %v2874 = vshrl.u32 %v2873, 7
            %v2875 = vsub.s32 0, %v2874
            %v2876 = vrot.slane %v2871, %v2875
            %v2894 = vunpack.c.l.b16 %v2405
            %v2895 = vunpack.c.h.b16 %v2405
            %v2896 = vunpack.c.l.b16 %v2406
            %v2897 = vunpack.c.h.b16 %v2406
            %v2898 = vunpack.c.l.b16 %v2407
            %v2899 = vunpack.c.h.b16 %v2407
            %v2900 = vunpack.c.l.b16 %v2408
            %v2901 = vunpack.c.h.b16 %v2408
            %v2902 = vunpack.c.l.b16 %v2409
            %v2903 = vunpack.c.h.b16 %v2409
            %v2904 = vunpack.c.l.b16 %v2410
            %v2905 = vunpack.c.h.b16 %v2410
            %v2906 = vunpack.c.l.b16 %v2411
            %v2907 = vunpack.c.h.b16 %v2411
            %v2908 = vunpack.c.l.b16 %v2412
            %v2909 = vunpack.c.h.b16 %v2412
            %v2910 = vunpack.c.l.b16 %v2413
            %v2911 = vunpack.c.h.b16 %v2413
            %v2912 = vunpack.c.l.b16 %v2414
            %v2913 = vunpack.c.h.b16 %v2414
            %v2914 = vunpack.c.l.b16 %v2415
            %v2915 = vunpack.c.h.b16 %v2415
            %v2916 = vunpack.c.l.b16 %v2416
            %v2917 = vunpack.c.h.b16 %v2416
            %v2918 = vunpack.c.l.b16 %v2417
            %v2919 = vunpack.c.h.b16 %v2417
            %v2920 = vunpack.c.l.b16 %v2418
            %v2921 = vunpack.c.h.b16 %v2418
            %v2922 = vunpack.c.l.b16 %v2419
            %v2923 = vunpack.c.h.b16 %v2419
            %v2924 = vunpack.c.l.b16 %v2420
            %v2925 = vunpack.c.h.b16 %v2420
            %v2926 = vpack.c.b16 %v2896, %v2894
            %v2927 = vpack.c.b16 %v2897, %v2895
            %v2928 = vpack.c.b16 %v2900, %v2898
            %v2929 = vpack.c.b16 %v2901, %v2899
            %v2930 = vpack.c.b16 %v2904, %v2902
            %v2931 = vpack.c.b16 %v2905, %v2903
            %v2932 = vpack.c.b16 %v2908, %v2906
            %v2933 = vpack.c.b16 %v2909, %v2907
            %v2934 = vpack.c.b16 %v2912, %v2910
            %v2935 = vpack.c.b16 %v2913, %v2911
            %v2936 = vpack.c.b16 %v2916, %v2914
            %v2937 = vpack.c.b16 %v2917, %v2915
            %v2938 = vpack.c.b16 %v2920, %v2918
            %v2939 = vpack.c.b16 %v2921, %v2919
            %v2940 = vpack.c.b16 %v2924, %v2922
            %v2941 = vpack.c.b16 %v2925, %v2923
            %v2990 = vunpack.c.l.b16 %v2839
            %v2991 = vunpack.c.l.b16 %v2840
            %v2992 = vunpack.c.l.b16 %v2841
            %v2993 = vunpack.c.l.b16 %v2842
            %v2994 = vunpack.c.l.b16 %v2843
            %v2995 = vunpack.c.l.b16 %v2844
            %v2996 = vunpack.c.l.b16 %v2845
            %v2997 = vunpack.c.l.b16 %v2846
            %v2998 = vunpack.c.l.b16 %v2847
            %v2999 = vunpack.c.l.b16 %v2848
            %v3000 = vunpack.c.l.b16 %v2849
            %v3001 = vunpack.c.l.b16 %v2850
            %v3002 = vunpack.c.l.b16 %v2851
            %v3003 = vunpack.c.l.b16 %v2852
            %v3004 = vunpack.c.l.b16 %v2853
            %v3005 = vunpack.c.l.b16 %v2854
            %v3006 = vunpack.c.l.b16 %v2855
            %v3007 = vunpack.c.l.b16 %v2856
            %v3008 = vunpack.c.l.b16 %v2857
            %v3009 = vunpack.c.l.b16 %v2858
            %v3010 = vunpack.c.l.b16 %v2859
            %v3011 = vunpack.c.l.b16 %v2860
            %v3012 = vunpack.c.l.b16 %v2861
            %v3013 = vunpack.c.l.b16 %v2862
            %v3014 = vunpack.c.l.b16 %v2863
            %v3015 = vunpack.c.l.b16 %v2864
            %v3016 = vunpack.c.l.b16 %v2865
            %v3017 = vunpack.c.l.b16 %v2866
            %v3018 = vunpack.c.l.b16 %v2867
            %v3019 = vunpack.c.l.b16 %v2868
            %v3020 = vunpack.c.l.b16 %v2869
            %v3021 = vunpack.c.l.b16 %v2870
            %v3022 = vpack.c.b16 %v2991, %v2990
            %v3023 = vpack.c.b16 %v2993, %v2992
            %v3024 = vpack.c.b16 %v2995, %v2994
            %v3025 = vpack.c.b16 %v2997, %v2996
            %v3026 = vpack.c.b16 %v2999, %v2998
            %v3027 = vpack.c.b16 %v3001, %v3000
            %v3028 = vpack.c.b16 %v3003, %v3002
            %v3029 = vpack.c.b16 %v3005, %v3004
            %v3030 = vpack.c.b16 %v3007, %v3006
            %v3031 = vpack.c.b16 %v3009, %v3008
            %v3032 = vpack.c.b16 %v3011, %v3010
            %v3033 = vpack.c.b16 %v3013, %v3012
            %v3034 = vpack.c.b16 %v3015, %v3014
            %v3035 = vpack.c.b16 %v3017, %v3016
            %v3036 = vpack.c.b16 %v3019, %v3018
            %v3037 = vpack.c.b16 %v3021, %v3020
            %3054 = vmatprep.subr.bf16.mxu0 0
            %3055 = vmatpush1.bf16.msra.mxu0 %v3029
            %3056 = vmatprep.subr.bf16.mxu0 0
            %3057 = vmatpush1.bf16.msra.mxu0 %v3028
            %3058 = vmatprep.subr.bf16.mxu0 0
            %3059 = vmatpush1.bf16.msra.mxu0 %v3027
            %3060 = vmatprep.subr.bf16.mxu0 0
            %3061 = vmatpush1.bf16.msra.mxu0 %v3026
            %3062 = vmatprep.subr.bf16.mxu0 0
            %3063 = vmatpush1.bf16.msra.mxu0 %v3025
            %3064 = vmatprep.subr.bf16.mxu0 0
            %3065 = vmatpush1.bf16.msra.mxu0 %v3024
            %3066 = vmatprep.subr.bf16.mxu0 0
            %3067 = vmatpush1.bf16.msra.mxu0 %v3023
            %3068 = vmatprep.subr.bf16.mxu0 0
            %3069 = vmatpush1.bf16.msra.mxu0 %v3022
            %3070 = vmatprep.subr.bf16.mxu0 0
            %3071 = vmatpush2.bf16.msra.mxu0 %v3037
            %3072 = vmatprep.subr.bf16.mxu0 0
            %3073 = vmatpush2.bf16.msra.mxu0 %v3036
            %3074 = vmatprep.subr.bf16.mxu0 0
            %3075 = vmatpush2.bf16.msra.mxu0 %v3035
            %3076 = vmatprep.subr.bf16.mxu0 0
            %3077 = vmatpush2.bf16.msra.mxu0 %v3034
            %3078 = vmatprep.subr.bf16.mxu0 0
            %3079 = vmatpush2.bf16.msra.mxu0 %v3033
            %3080 = vmatprep.subr.bf16.mxu0 0
            %3081 = vmatpush2.bf16.msra.mxu0 %v3032
            %3082 = vmatprep.subr.bf16.mxu0 0
            %3083 = vmatpush2.bf16.msra.mxu0 %v3031
            %3084 = vmatprep.subr.bf16.mxu0 0
            %3085 = vmatpush2.bf16.msra.mxu0 %v3030
            %3086 = vmatprep.mubr.bf16.mxu0 %v2927
            %3087 = vmatmul.mubr.bf16.gmra.mxu0 %v2926
            %v3088 = vpop.f32.mrf.mxu0
            %v3089 = vadd.f32 %v2876, %v3088
            %v3090 = vpop.f32.mrf.mxu0
            %v3091 = vpop.f32.mrf.mxu0
            %v3092 = vadd.f32 %v2876, %v3091
            %v3093 = vpop.f32.mrf.mxu0
            %3094 = vmatprep.mubr.bf16.mxu0 %v2929
            %3095 = vmatmul.mubr.bf16.gmra.mxu0 %v2928
            %v3096 = vpop.f32.mrf.mxu0
            %v3097 = vadd.f32 %v2876, %v3096
            %v3098 = vpop.f32.mrf.mxu0
            %v3099 = vpop.f32.mrf.mxu0
            %v3100 = vadd.f32 %v2876, %v3099
            %v3101 = vpop.f32.mrf.mxu0
            %3102 = vmatprep.mubr.bf16.mxu0 %v2931
            %3103 = vmatmul.mubr.bf16.gmra.mxu0 %v2930
            %v3104 = vpop.f32.mrf.mxu0
            %v3105 = vadd.f32 %v2876, %v3104
            %v3106 = vpop.f32.mrf.mxu0
            %v3107 = vpop.f32.mrf.mxu0
            %v3108 = vadd.f32 %v2876, %v3107
            %v3109 = vpop.f32.mrf.mxu0
            %3110 = vmatprep.mubr.bf16.mxu0 %v2933
            %3111 = vmatmul.mubr.bf16.gmra.mxu0 %v2932
            %v3112 = vpop.f32.mrf.mxu0
            %v3113 = vadd.f32 %v2876, %v3112
            %v3114 = vpop.f32.mrf.mxu0
            %v3115 = vpop.f32.mrf.mxu0
            %v3116 = vadd.f32 %v2876, %v3115
            %v3117 = vpop.f32.mrf.mxu0
            %3118 = vmatprep.mubr.bf16.mxu0 %v2935
            %3119 = vmatmul.mubr.bf16.gmra.mxu0 %v2934
            %v3120 = vpop.f32.mrf.mxu0
            %v3121 = vadd.f32 %v2876, %v3120
            %v3122 = vpop.f32.mrf.mxu0
            %v3123 = vpop.f32.mrf.mxu0
            %v3124 = vadd.f32 %v2876, %v3123
            %v3125 = vpop.f32.mrf.mxu0
            %3126 = vmatprep.mubr.bf16.mxu0 %v2937
            %3127 = vmatmul.mubr.bf16.gmra.mxu0 %v2936
            %v3128 = vpop.f32.mrf.mxu0
            %v3129 = vadd.f32 %v2876, %v3128
            %v3130 = vpop.f32.mrf.mxu0
            %v3131 = vpop.f32.mrf.mxu0
            %v3132 = vadd.f32 %v2876, %v3131
            %v3133 = vpop.f32.mrf.mxu0
            %3134 = vmatprep.mubr.bf16.mxu0 %v2939
            %3135 = vmatmul.mubr.bf16.gmra.mxu0 %v2938
            %v3136 = vpop.f32.mrf.mxu0
            %v3137 = vadd.f32 %v2876, %v3136
            %v3138 = vpop.f32.mrf.mxu0
            %v3139 = vpop.f32.mrf.mxu0
            %v3140 = vadd.f32 %v2876, %v3139
            %v3141 = vpop.f32.mrf.mxu0
            %3142 = vmatprep.mubr.bf16.mxu0 %v2941
            %3143 = vmatmul.mubr.bf16.gmra.mxu0 %v2940
            %v3144 = vpop.f32.mrf.mxu0
            %v3145 = vadd.f32 %v2876, %v3144
            %v3146 = vpop.f32.mrf.mxu0
            %v3147 = vpop.f32.mrf.mxu0
            %v3148 = vadd.f32 %v2876, %v3147
            %v3149 = vpop.f32.mrf.mxu0
            %3150 = vdwg.mxu0
            %v3151 = vmax.f32 %v3089, 0.0
            %v3152 = vmax.f32 %v3092, 0.0
            %v3153 = vmax.f32 %v3097, 0.0
            %v3154 = vmax.f32 %v3100, 0.0
            %v3155 = vmax.f32 %v3105, 0.0
            %v3156 = vmax.f32 %v3108, 0.0
            %v3157 = vmax.f32 %v3113, 0.0
            %v3158 = vmax.f32 %v3116, 0.0
            %v3159 = vmax.f32 %v3121, 0.0
            %v3160 = vmax.f32 %v3124, 0.0
            %v3161 = vmax.f32 %v3129, 0.0
            %v3162 = vmax.f32 %v3132, 0.0
            %v3163 = vmax.f32 %v3137, 0.0
            %v3164 = vmax.f32 %v3140, 0.0
            %v3165 = vmax.f32 %v3145, 0.0
            %v3166 = vmax.f32 %v3148, 0.0
            %v3167 = vpack.c.bf16 %v3152, %v3151
            %v3168 = vpack.c.bf16 %v3154, %v3153
            %v3169 = vpack.c.bf16 %v3156, %v3155
            %v3170 = vpack.c.bf16 %v3158, %v3157
            %v3171 = vpack.c.bf16 %v3160, %v3159
            %v3172 = vpack.c.bf16 %v3162, %v3161
            %v3173 = vpack.c.bf16 %v3164, %v3163
            %v3174 = vpack.c.bf16 %v3166, %v3165
            %v3183 = vunpack.c.l.b16 %v3167
            %v3184 = vunpack.c.h.b16 %v3167
            %v3185 = vunpack.c.l.b16 %v3168
            %v3186 = vunpack.c.h.b16 %v3168
            %v3187 = vunpack.c.l.b16 %v3169
            %v3188 = vunpack.c.h.b16 %v3169
            %v3189 = vunpack.c.l.b16 %v3170
            %v3190 = vunpack.c.h.b16 %v3170
            %v3191 = vunpack.c.l.b16 %v3171
            %v3192 = vunpack.c.h.b16 %v3171
            %v3193 = vunpack.c.l.b16 %v3172
            %v3194 = vunpack.c.h.b16 %v3172
            %v3195 = vunpack.c.l.b16 %v3173
            %v3196 = vunpack.c.h.b16 %v3173
            %v3197 = vunpack.c.l.b16 %v3174
            %v3198 = vunpack.c.h.b16 %v3174
            %v3199 = vpack.c.b16 %v3183, %v3183
            %v3200 = vpack.c.b16 %v3184, %v3184
            %v3201 = vpack.c.b16 %v3185, %v3185
            %v3202 = vpack.c.b16 %v3186, %v3186
            %v3203 = vpack.c.b16 %v3187, %v3187
            %v3204 = vpack.c.b16 %v3188, %v3188
            %v3205 = vpack.c.b16 %v3189, %v3189
            %v3206 = vpack.c.b16 %v3190, %v3190
            %v3207 = vpack.c.b16 %v3191, %v3191
            %v3208 = vpack.c.b16 %v3192, %v3192
            %v3209 = vpack.c.b16 %v3193, %v3193
            %v3210 = vpack.c.b16 %v3194, %v3194
            %v3211 = vpack.c.b16 %v3195, %v3195
            %v3212 = vpack.c.b16 %v3196, %v3196
            %v3213 = vpack.c.b16 %v3197, %v3197
            %v3214 = vpack.c.b16 %v3198, %v3198
            %3231 = vst [vmem:[%s513] sm:$0xf] %v3199
            %3232 = vst [vmem:[%s513 + $0x4] sm:$0xf] %v3200
            %3233 = vst [vmem:[%s513 + $0x8] sm:$0xf] %v3201
            %3234 = vst [vmem:[%s513 + $0xc] sm:$0xf] %v3202
            %3235 = vst [vmem:[%s513 + $0x10] sm:$0xf] %v3203
            %3236 = vst [vmem:[%s513 + $0x14] sm:$0xf] %v3204
            %3237 = vst [vmem:[%s513 + $0x18] sm:$0xf] %v3205
            %3238 = vst [vmem:[%s513 + $0x1c] sm:$0xf] %v3206
            %3239 = vst [vmem:[%s513 + $0x20] sm:$0xf] %v3207
            %3240 = vst [vmem:[%s513 + $0x24] sm:$0xf] %v3208
            %3241 = vst [vmem:[%s513 + $0x28] sm:$0xf] %v3209
            %3242 = vst [vmem:[%s513 + $0x2c] sm:$0xf] %v3210
            %3243 = vst [vmem:[%s513 + $0x30] sm:$0xf] %v3211
            %3244 = vst [vmem:[%s513 + $0x34] sm:$0xf] %v3212
            %3245 = vst [vmem:[%s513 + $0x38] sm:$0xf] %v3213
            %3246 = vst [vmem:[%s513 + $0x3c] sm:$0xf] %v3214
          $region92: #{mpnn_forward.1} parent=83 // pred_fallthru
            _
        $region84: #{mpnn_forward.1} parent=51 // pred_fallthru
          _
        %p3247 = scmp.eq.s32.totalorder %s29, 3
        %s3248 = scalar_select %p3247, %s30, 0
        %s3249 = smul.u32 16, %s3248
        %p3250 = scmp.lt.s32.totalorder %s3249, 15
        %s3251 = scalar_select %p3250, %s3249, 15
        %s3252 = smul.addr %s3251, 4
        %s3253 = scalar_lea.vmem %s8, %s3252
        // Predicated region
        $region93: #{mpnn_forward.1} parent=51 // pred_check
          %p3254 = pneg %p275
        $region94: #{mpnn_forward.1} parent=51 // pred_check_branch
          %3256 = sbr.rel (%p3254) target = $region96
        $region95: #{mpnn_forward.1} parent=51 // pred_region
          %p3257 = scmp.eq.s32.totalorder %s29, 3
          %s3258 = scalar_select %p3257, %s30, 0
          %s3259 = smul.u32 16, %s3258
        $region96: #{mpnn_forward.1} parent=51 // pred_fallthru
          _
      $region52: #{mpnn_forward.1} parent=5 // pred_fallthru
        _
      %p3260 = scmp.le.s32.totalorder 2, %s20
      // Predicated region
      $region97: #{mpnn_forward.1} parent=5 // pred_check
        %p3261 = pneg %p3260
      $region98: #{mpnn_forward.1} parent=5 // pred_check_branch
        %3263 = sbr.rel (%p3261) target = $region100
      $region99: #{mpnn_forward.1} parent=5 // pred_region
        %s3264 = ssub.s32 %s20, 2
        // Predicated region
        $region101: #{mpnn_forward.1} parent=99 // pred_check
          %p3265 = pneg %p281
        $region102: #{mpnn_forward.1} parent=99 // pred_check_branch
          %3267 = sbr.rel (%p3265) target = $region104
        $region103: #{mpnn_forward.1} parent=99 // pred_region
          %p3268 = scmp.eq.s32.totalorder %s31, 3
          %s3269 = scalar_select %p3268, %s32, 0
          %s3270 = smul.u32 16, %s3269
          %p3271 = scmp.lt.s32.totalorder %s3270, 15
          %s3272 = scalar_select %p3271, %s3270, 15
          %s3273 = smul.addr %s3272, 4
          %s3274 = scalar_lea.vmem %s8, %s3273
        $region104: #{mpnn_forward.1} parent=99 // pred_fallthru
          _
      $region100: #{mpnn_forward.1} parent=5 // pred_fallthru
        _
    $region6: #{mpnn_forward.1} parent=1 // loop_footer
      %s24 = sadd.s32 1, %s20
    $region7: #{mpnn_forward.1} parent=1 // loop_footer_branch
      %19 = sbr.rel target = $region3
    $region8: #{mpnn_forward.1} parent=1 // loop_exit
      _
    %3275 = vsyncpa [#allocation5], 1
    %s3276 = scalar_lea.sflag [#allocation5], 1
    %3277 = vsyncpa %s3276, 1
    %3278 = vsyncpa [#allocation7], 1
    %s3279 = scalar_lea.sflag [#allocation7], 1
    %3280 = vsyncpa %s3279, 1

</llo_original>
